<compile_context>
chip_gen: v6e
topology: v6e:2x2x1
jax: 0.10.0
libtpu: 0.0.40
codegen_flags: <defaults>
</compile_context>

<pallas_src>
import jax
import jax.numpy as jnp
from jax.experimental import pallas as pl
from jax.experimental.pallas import tpu as pltpu

LANE = 128
COMPUTE_DTYPE = jnp.bfloat16


def _round_up(x, m):
    return ((x + m - 1) // m) * m


def _conv_dims(h, w):
    """Spatial sizes after conv1(8/4), conv2(4/2), conv3(3/1), VALID padding."""
    h1, w1 = (h - 8) // 4 + 1, (w - 8) // 4 + 1
    h2, w2 = (h1 - 4) // 2 + 1, (w1 - 4) // 2 + 1
    h3, w3 = (h2 - 3) // 1 + 1, (w2 - 3) // 1 + 1
    return (h1, w1), (h2, w2), (h3, w3)


# ---------------------------------------------------------------------------
# Fused Pallas kernel (one image per grid step)
# ---------------------------------------------------------------------------

def _make_fused_kernel(P1, S, h3, w3):
    """P1 = h1p*w1p (phase-image pixels), S = w1p (row pitch), (h3,w3) conv3 out."""
    f32, bf16 = jnp.float32, jnp.bfloat16

    def kernel(p1_ref, w1_ref, b1_ref, w2_ref, b2_ref, w3_ref, b3_ref,
               wf1_ref, bf1_ref, wf2_ref, bf2_ref, o_ref, a1_ref, a2_ref):
        # Zero the scratch so the padded tail rows read by shifted taps are 0.
        # (Those rows only feed output positions that are never consumed.)
        a1_ref[...] = jnp.zeros_like(a1_ref)
        a2_ref[...] = jnp.zeros_like(a2_ref)

        # ---- conv1 (8x8 / stride 4) + ReLU: 4 phase GEMMs -------------------
        # Phase q = (y1%2)*2 + (x1%2) output image (h1/2, w1/2, 32) is written
        # into lane slice [q*32, (q+1)*32) of a1 (row pitch S = w1/2).
        b1 = b1_ref[...]
        for q in range(4):
            z = jnp.dot(p1_ref[0, q], w1_ref[...], preferred_element_type=f32)
            a1_ref[:P1, q * 32:(q + 1) * 32] = jnp.maximum(z + b1, 0.0)

        # ---- conv2 (4x4 / stride 2) + ReLU: 4 shifted GEMM taps, K = 128 ----
        acc = jnp.zeros((P1, 64), f32)
        for by in range(2):
            for bx in range(2):
                off = by * S + bx
                lhs = a1_ref[off:off + P1, :].astype(bf16)        # (P1, 128)
                acc = acc + jnp.dot(lhs, w2_ref[by * 2 + bx],
                                    preferred_element_type=f32)
        a2_ref[:P1, :] = jnp.maximum(acc + b2_ref[...], 0.0)

        # ---- conv3 (3x3 / stride 1) + ReLU: 9 shifted GEMM taps -------------
        acc = jnp.zeros((P1, 64), f32)
        for ky in range(3):
            for kx in range(3):
                off = ky * S + kx
                lhs = a2_ref[off:off + P1, :].astype(bf16)        # (P1, 64)
                acc = acc + jnp.dot(lhs, w3_ref[ky * 3 + kx],
                                    preferred_element_type=f32)
        a3 = jnp.maximum(acc + b3_ref[...], 0.0)                  # (P1, 64) f32

        # ---- fc1 + ReLU + fc2: hidden vector never leaves vregs -------------
        # fc1 weights are stored per valid conv3 position (flatten permutation
        # folded in), so the "flatten" is a static row gather of a3.
        h = bf1_ref[...]                                          # (1, 512) f32
        for y in range(h3):
            for x in range(w3):
                p = y * S + x                                     # valid position
                h = h + jnp.dot(a3[p:p + 1, :].astype(bf16),
                                wf1_ref[y * w3 + x],
                                preferred_element_type=f32)
        h = jnp.maximum(h, 0.0).astype(bf16)                      # (1, 512)
        q_vals = jnp.dot(h, wf2_ref[...], preferred_element_type=f32) + bf2_ref[...]
        o_ref[0] = q_vals.astype(o_ref.dtype)                     # lane-dense (1,128)

    return kernel


# ---------------------------------------------------------------------------
# XLA glue: conv1 im2col patches in phase-major order (tiny input gather)
# ---------------------------------------------------------------------------

def _conv1_phase_patches(x, h1p, w1p):
    """NCHW f32 frame -> (N, 4, h1p*w1p, C*64) conv1 patches.

    phase = (y1%2)*2 + (x1%2); per-patch flatten order is (c, ky, kx), i.e.
    PyTorch Conv2d weight order."""
    n, c, _, _ = x.shape
    h1, w1 = 2 * h1p, 2 * w1p
    taps = []
    for ky in range(8):
        for kx in range(8):
            taps.append(x[:, :, ky:ky + 4 * h1:4, kx:kx + 4 * w1:4])  # (N,C,h1,w1)
    t = jnp.stack(taps, axis=2)                       # (N, C, 64, h1, w1)
    t = t.reshape(n, c, 64, h1p, 2, w1p, 2)
    t = jnp.transpose(t, (0, 4, 6, 3, 5, 1, 2))       # (N, py, px, h1p, w1p, C, 64)
    return t.reshape(n, 4, h1p * w1p, c * 64)


# ---------------------------------------------------------------------------
# Forward pass (mirrors VanillaDQN.forward)
# ---------------------------------------------------------------------------

def vanilla_dqn_forward(prep, x_nchw, n_actions):
    n, c, h, w = x_nchw.shape
    (h1, w1), _, (h3, w3) = _conv_dims(h, w)
    assert h1 % 2 == 0 and w1 % 2 == 0 and h3 >= 1 and w3 >= 1, (
        "fused kernel assumes conv1 output has even height/width")
    # TODO(synk): support odd conv1 output sizes (needs masked phase images).
    h1p, w1p = h1 // 2, w1 // 2
    S, P1 = w1p, h1p * w1p
    R1 = _round_up(P1 + S + 2, 8)        # conv2 taps read rows [0, P1 + S + 1]
    R2 = _round_up(P1 + 2 * S + 3, 8)    # conv3 taps read rows [0, P1 + 2S + 2]
    k1 = c * 64

    p1 = _conv1_phase_patches(x_nchw.astype(jnp.float32), h1p, w1p)
    p1 = p1.astype(COMPUTE_DTYPE)
    # TODO(synk): fold this small NCHW->phase-patch gather (and the f32->bf16
    # cast) into the kernel once in-kernel strided gathers are worth the lowering risk.

    def const_spec(a):
        nd = a.ndim
        return pl.BlockSpec(a.shape, lambda b: (0,) * nd)

    kernel = _make_fused_kernel(P1, S, h3, w3)
    out = pl.pallas_call(
        kernel,
        out_shape=jax.ShapeDtypeStruct((n, 1, LANE), jnp.float32),
        grid=(n,),
        in_specs=[
            pl.BlockSpec((1, 4, P1, k1), lambda b: (b, 0, 0, 0)),
            const_spec(prep["w1"]), const_spec(prep["b1"]),
            const_spec(prep["w2"]), const_spec(prep["b2"]),
            const_spec(prep["w3"]), const_spec(prep["b3"]),
            const_spec(prep["fc1_w"]), const_spec(prep["fc1_b"]),
            const_spec(prep["fc2_w"]), const_spec(prep["fc2_b"]),
        ],
        out_specs=pl.BlockSpec((1, 1, LANE), lambda b: (b, 0, 0)),
        scratch_shapes=[
            pltpu.VMEM((R1, 4 * 32), jnp.float32),   # conv1 out, 4 phases on lanes
            pltpu.VMEM((R2, 64), jnp.float32),       # conv2 out
        ],
        compiler_params=pltpu.CompilerParams(
            dimension_semantics=("parallel",)),
        # TODO(synk): single-buffer the constant weight blocks
        # (pipeline_mode=pl.Buffered(1)) and pack several images per grid step
        # for large-batch training workloads.
    )(p1, prep["w1"], prep["b1"], prep["w2"], prep["b2"],
      prep["w3"], prep["b3"], prep["fc1_w"], prep["fc1_b"],
      prep["fc2_w"], prep["fc2_b"])
    return out.reshape(n, LANE)[:, :n_actions]


# ---------------------------------------------------------------------------
# Parameters
# ---------------------------------------------------------------------------

def init_params(key, input_shape, n_actions):
    """Kaiming-normal (relu) weights, zero biases (as in the module).
    Conv weights in PyTorch OIHW layout; fc weights stored as (in, out)."""
    c_in, h, w = input_shape
    _, _, (h3, w3) = _conv_dims(h, w)
    conv_out = 64 * h3 * w3
    ks = jax.random.split(key, 5)

    def kaiming(k, shape, fan_in):
        return (2.0 / fan_in) ** 0.5 * jax.random.normal(k, shape, dtype=jnp.float32)

    return {
        "w1": kaiming(ks[0], (32, c_in, 8, 8), c_in * 64),
        "b1": jnp.zeros((32,), jnp.float32),
        "w2": kaiming(ks[1], (64, 32, 4, 4), 32 * 16),
        "b2": jnp.zeros((64,), jnp.float32),
        "w3": kaiming(ks[2], (64, 64, 3, 3), 64 * 9),
        "b3": jnp.zeros((64,), jnp.float32),
        "fc1_w": kaiming(ks[3], (conv_out, 512), conv_out),
        "fc1_b": jnp.zeros((512,), jnp.float32),
        "fc2_w": kaiming(ks[4], (512, n_actions), 512),
        "fc2_b": jnp.zeros((n_actions,), jnp.float32),
    }


def prepare_params(params, input_shape, compute_dtype=COMPUTE_DTYPE):
    """One-time layout + dtype prep for the fused kernel."""
    c_in, h, w = input_shape
    _, _, (h3, w3) = _conv_dims(h, w)
    n_actions = params["fc2_w"].shape[1]
    assert n_actions <= LANE

    # conv1: (32, cin, 8, 8) OIHW -> (cin*64, 32), rows in (c, ky, kx) order.
    w1 = params["w1"].reshape(32, c_in * 64).T

    # conv2: phase-concatenated taps: (by*2+bx, (py*2+px)*32 + cin, cout).
    w2 = params["w2"].reshape(64, 32, 2, 2, 2, 2)              # (o, c, by, py, bx, px)
    w2 = jnp.transpose(w2, (2, 4, 3, 5, 1, 0)).reshape(4, 4 * 32, 64)

    # conv3: taps (ky*3+kx, cin, cout).
    w3t = jnp.transpose(params["w3"], (2, 3, 1, 0)).reshape(9, 64, 64)

    # fc1: fold PyTorch's (c, y, x) flatten into per-position (64, 512) blocks.
    wf1 = params["fc1_w"].reshape(64, h3 * w3, 512).transpose(1, 0, 2)

    # fc2: lane-pad the n_actions columns to 128 for a lane-dense final store.
    wf2 = jnp.pad(params["fc2_w"], ((0, 0), (0, LANE - n_actions)))
    bf2 = jnp.pad(params["fc2_b"], (0, LANE - n_actions))

    f32 = jnp.float32
    return {
        "w1": w1.astype(compute_dtype),
        "b1": params["b1"].reshape(1, 32).astype(f32),
        "w2": w2.astype(compute_dtype),
        "b2": params["b2"].reshape(1, 64).astype(f32),
        "w3": w3t.astype(compute_dtype),
        "b3": params["b3"].reshape(1, 64).astype(f32),
        "fc1_w": wf1.astype(compute_dtype),
        "fc1_b": params["fc1_b"].reshape(1, 512).astype(f32),
        "fc2_w": wf2.astype(compute_dtype),
        "fc2_b": bf2.reshape(1, LANE).astype(f32),
    }


# ---------------------------------------------------------------------------
# Pure-JAX / XLA references
# ---------------------------------------------------------------------------

def reference_forward(params, x_nchw, compute_dtype=jnp.float32):
    """With compute_dtype=bfloat16 this quantizes GEMM operands at the same
    points as the Pallas path (f32 accumulation); with float32 it is the exact
    module semantics."""
    f32 = jnp.float32
    x = x_nchw.astype(f32)

    def conv(x, w, b, stride):
        y = jax.lax.conv_general_dilated(
            x.astype(compute_dtype), w.astype(compute_dtype),
            window_strides=(stride, stride), padding="VALID",
            dimension_numbers=("NCHW", "OIHW", "NCHW"),
            preferred_element_type=f32,
            precision=jax.lax.Precision.HIGHEST)
        return jax.nn.relu(y + b.reshape(1, -1, 1, 1))

    x = conv(x, params["w1"], params["b1"], 4)
    x = conv(x, params["w2"], params["b2"], 2)
    x = conv(x, params["w3"], params["b3"], 1)
    flat = x.reshape(x.shape[0], -1)
    h = jax.nn.relu(
        jnp.dot(flat.astype(compute_dtype), params["fc1_w"].astype(compute_dtype),
                preferred_element_type=f32,
                precision=jax.lax.Precision.HIGHEST) + params["fc1_b"])
    return (jnp.dot(h.astype(compute_dtype), params["fc2_w"].astype(compute_dtype),
                    preferred_element_type=f32,
                    precision=jax.lax.Precision.HIGHEST) + params["fc2_b"])


if __name__ == "__main__":
    # (C,H,W) = (4,52,52): conv tower 52 -> 12 -> 5 -> 3, conv_out = 576.
    input_shape = (4, 52, 52)
    n_actions = 6
    batch = 2

    key = jax.random.PRNGKey(0)
    pkey, bkey, xkey = jax.random.split(key, 3)
    params = init_params(pkey, input_shape, n_actions)
    # The module initializes biases to 0; use small non-zero biases here so the
    # test actually exercises the kernel's bias plumbing.
    bks = jax.random.split(bkey, 5)
    for i, name in enumerate(["b1", "b2", "b3", "fc1_b", "fc2_b"]):
        params[name] = 0.1 * jax.random.normal(bks[i], params[name].shape, jnp.float32)

    prep = prepare_params(params, input_shape)       # one-time layout / bf16 prep
    x = jax.random.normal(xkey, (batch,) + input_shape, dtype=jnp.float32)

    fwd = jax.jit(vanilla_dqn_forward, static_argnums=(2,))
    out = jax.block_until_ready(fwd(prep, x, n_actions))

    ref_bf16 = jax.block_until_ready(reference_forward(params, x, jnp.bfloat16))
    ref_f32 = jax.block_until_ready(reference_forward(params, x, jnp.float32))

    assert out.shape == (batch, n_actions), out.shape
    assert out.dtype == jnp.float32, out.dtype
    assert bool(jnp.all(jnp.isfinite(out)))
    # Tight check vs an XLA reference that quantizes operands to bf16 at the
    # same points (differences are only f32 accumulation order).
    assert jnp.allclose(out, ref_bf16, rtol=2e-2, atol=2e-2), (out, ref_bf16)
    # Loose check vs exact f32 module semantics (bounds the bf16 operand error).
    assert jnp.allclose(out, ref_f32, rtol=1e-1, atol=1e-1), (out, ref_f32)
    print("KERNEL_OK")
</pallas_src>

<mosaic_0001>
module attributes {stable_mosaic.version = 11 : i64} {
  func.func @kernel(%arg0: i32, %arg1: memref<1x4x36x256xbf16, #tpu.memory_space<vmem>>, %arg2: memref<256x32xbf16, #tpu.memory_space<vmem>>, %arg3: memref<1x32xf32, #tpu.memory_space<vmem>>, %arg4: memref<4x128x64xbf16, #tpu.memory_space<vmem>>, %arg5: memref<1x64xf32, #tpu.memory_space<vmem>>, %arg6: memref<9x64x64xbf16, #tpu.memory_space<vmem>>, %arg7: memref<1x64xf32, #tpu.memory_space<vmem>>, %arg8: memref<9x64x512xbf16, #tpu.memory_space<vmem>>, %arg9: memref<1x512xf32, #tpu.memory_space<vmem>>, %arg10: memref<512x128xbf16, #tpu.memory_space<vmem>>, %arg11: memref<1x128xf32, #tpu.memory_space<vmem>>, %arg12: memref<1x1x128xf32, #tpu.memory_space<vmem>>, %arg13: memref<48x128xf32, #tpu.memory_space<vmem>>, %arg14: memref<56x64xf32, #tpu.memory_space<vmem>>) attributes {dimension_semantics = [#tpu.dimension_semantics<parallel>], iteration_bounds = array<i64: 2>, scalar_prefetch = 0 : i64, scratch_operands = 2 : i64, tpu.core_type = #tpu.core_type<tc>, window_params = [{transform_indices = @transform_0, window_bounds = array<i64: 1, 4, 36, 256>}, {pipeline_mode = #tpu.pipeline_mode<synchronous>, transform_indices = @transform_1, window_bounds = array<i64: 256, 32>}, {pipeline_mode = #tpu.pipeline_mode<synchronous>, transform_indices = @transform_2, window_bounds = array<i64: 1, 32>}, {pipeline_mode = #tpu.pipeline_mode<synchronous>, transform_indices = @transform_3, window_bounds = array<i64: 4, 128, 64>}, {pipeline_mode = #tpu.pipeline_mode<synchronous>, transform_indices = @transform_4, window_bounds = array<i64: 1, 64>}, {pipeline_mode = #tpu.pipeline_mode<synchronous>, transform_indices = @transform_5, window_bounds = array<i64: 9, 64, 64>}, {pipeline_mode = #tpu.pipeline_mode<synchronous>, transform_indices = @transform_6, window_bounds = array<i64: 1, 64>}, {pipeline_mode = #tpu.pipeline_mode<synchronous>, transform_indices = @transform_7, window_bounds = array<i64: 9, 64, 512>}, {pipeline_mode = #tpu.pipeline_mode<synchronous>, transform_indices = @transform_8, window_bounds = array<i64: 1, 512>}, {pipeline_mode = #tpu.pipeline_mode<synchronous>, transform_indices = @transform_9, window_bounds = array<i64: 512, 128>}, {pipeline_mode = #tpu.pipeline_mode<synchronous>, transform_indices = @transform_10, window_bounds = array<i64: 1, 128>}, {transform_indices = @transform_11, window_bounds = array<i64: 1, 1, 128>}]} {
    %cst = arith.constant 0.000000e+00 : f32
    %0 = vector.broadcast %cst : f32 to vector<48x128xf32>
    %c0 = arith.constant 0 : index
    %c0_0 = arith.constant 0 : index
    %1 = vector.load %arg13[%c0, %c0_0] : memref<48x128xf32, #tpu.memory_space<vmem>>, vector<48x128xf32>
    tpu.vector_store %arg13[%c0, %c0_0], %0 {strides = array<i32>} : memref<48x128xf32, #tpu.memory_space<vmem>>, vector<48x128xf32>,
    %cst_1 = arith.constant 0.000000e+00 : f32
    %2 = vector.broadcast %cst_1 : f32 to vector<56x64xf32>
    %c0_2 = arith.constant 0 : index
    %c0_3 = arith.constant 0 : index
    %3 = vector.load %arg14[%c0_2, %c0_3] : memref<56x64xf32, #tpu.memory_space<vmem>>, vector<56x64xf32>
    tpu.vector_store %arg14[%c0_2, %c0_3], %2 {strides = array<i32>} : memref<56x64xf32, #tpu.memory_space<vmem>>, vector<56x64xf32>,
    %c0_4 = arith.constant 0 : index
    %c0_5 = arith.constant 0 : index
    %4 = vector.load %arg3[%c0_4, %c0_5] : memref<1x32xf32, #tpu.memory_space<vmem>>, vector<1x32xf32>
    %c0_6 = arith.constant 0 : index
    %c0_7 = arith.constant 0 : index
    %c0_8 = arith.constant 0 : index
    %c0_9 = arith.constant 0 : index
    %5 = vector.load %arg1[%c0_6, %c0_7, %c0_8, %c0_9] : memref<1x4x36x256xbf16, #tpu.memory_space<vmem>>, vector<1x1x36x256xbf16>
    %6 = vector.shape_cast %5 : vector<1x1x36x256xbf16> to vector<36x256xbf16>
    %c0_10 = arith.constant 0 : index
    %c0_11 = arith.constant 0 : index
    %7 = vector.load %arg2[%c0_10, %c0_11] : memref<256x32xbf16, #tpu.memory_space<vmem>>, vector<256x32xbf16>
    %cst_12 = arith.constant dense<0.000000e+00> : vector<36x32xf32>
    %8 = tpu.matmul %6, %7, %cst_12 {dimension_numbers = #tpu.dot_dimension_numbers<[1], [0], [0], [1], [0, 0, 1, 1], [], []>} : vector<36x256xbf16>, vector<256x32xbf16>, vector<36x32xf32> -> vector<36x32xf32>
    %9 = vector.broadcast %4 : vector<1x32xf32> to vector<36x32xf32>
    %10 = arith.addf %8, %9 : vector<36x32xf32>
    %cst_13 = arith.constant 0.000000e+00 : f32
    %11 = vector.broadcast %cst_13 : f32 to vector<36x32xf32>
    %12 = arith.maximumf %10, %11 : vector<36x32xf32>
    %c0_14 = arith.constant 0 : index
    %c0_15 = arith.constant 0 : index
    %13 = vector.load %arg13[%c0_14, %c0_15] : memref<48x128xf32, #tpu.memory_space<vmem>>, vector<36x32xf32>
    tpu.vector_store %arg13[%c0_14, %c0_15], %12 {strides = array<i32>} : memref<48x128xf32, #tpu.memory_space<vmem>>, vector<36x32xf32>,
    %c0_16 = arith.constant 0 : index
    %c1 = arith.constant 1 : index
    %c0_17 = arith.constant 0 : index
    %c0_18 = arith.constant 0 : index
    %14 = vector.load %arg1[%c0_16, %c1, %c0_17, %c0_18] : memref<1x4x36x256xbf16, #tpu.memory_space<vmem>>, vector<1x1x36x256xbf16>
    %15 = vector.shape_cast %14 : vector<1x1x36x256xbf16> to vector<36x256xbf16>
    %c0_19 = arith.constant 0 : index
    %c0_20 = arith.constant 0 : index
    %16 = vector.load %arg2[%c0_19, %c0_20] : memref<256x32xbf16, #tpu.memory_space<vmem>>, vector<256x32xbf16>
    %cst_21 = arith.constant dense<0.000000e+00> : vector<36x32xf32>
    %17 = tpu.matmul %15, %16, %cst_21 {dimension_numbers = #tpu.dot_dimension_numbers<[1], [0], [0], [1], [0, 0, 1, 1], [], []>} : vector<36x256xbf16>, vector<256x32xbf16>, vector<36x32xf32> -> vector<36x32xf32>
    %18 = vector.broadcast %4 : vector<1x32xf32> to vector<36x32xf32>
    %19 = arith.addf %17, %18 : vector<36x32xf32>
    %cst_22 = arith.constant 0.000000e+00 : f32
    %20 = vector.broadcast %cst_22 : f32 to vector<36x32xf32>
    %21 = arith.maximumf %19, %20 : vector<36x32xf32>
    %c0_23 = arith.constant 0 : index
    %c32 = arith.constant 32 : index
    %22 = vector.load %arg13[%c0_23, %c32] : memref<48x128xf32, #tpu.memory_space<vmem>>, vector<36x32xf32>
    tpu.vector_store %arg13[%c0_23, %c32], %21 {strides = array<i32>} : memref<48x128xf32, #tpu.memory_space<vmem>>, vector<36x32xf32>,
    %c0_24 = arith.constant 0 : index
    %c2 = arith.constant 2 : index
    %c0_25 = arith.constant 0 : index
    %c0_26 = arith.constant 0 : index
    %23 = vector.load %arg1[%c0_24, %c2, %c0_25, %c0_26] : memref<1x4x36x256xbf16, #tpu.memory_space<vmem>>, vector<1x1x36x256xbf16>
    %24 = vector.shape_cast %23 : vector<1x1x36x256xbf16> to vector<36x256xbf16>
    %c0_27 = arith.constant 0 : index
    %c0_28 = arith.constant 0 : index
    %25 = vector.load %arg2[%c0_27, %c0_28] : memref<256x32xbf16, #tpu.memory_space<vmem>>, vector<256x32xbf16>
    %cst_29 = arith.constant dense<0.000000e+00> : vector<36x32xf32>
    %26 = tpu.matmul %24, %25, %cst_29 {dimension_numbers = #tpu.dot_dimension_numbers<[1], [0], [0], [1], [0, 0, 1, 1], [], []>} : vector<36x256xbf16>, vector<256x32xbf16>, vector<36x32xf32> -> vector<36x32xf32>
    %27 = vector.broadcast %4 : vector<1x32xf32> to vector<36x32xf32>
    %28 = arith.addf %26, %27 : vector<36x32xf32>
    %cst_30 = arith.constant 0.000000e+00 : f32
    %29 = vector.broadcast %cst_30 : f32 to vector<36x32xf32>
    %30 = arith.maximumf %28, %29 : vector<36x32xf32>
    %c0_31 = arith.constant 0 : index
    %c64 = arith.constant 64 : index
    %31 = vector.load %arg13[%c0_31, %c64] : memref<48x128xf32, #tpu.memory_space<vmem>>, vector<36x32xf32>
    tpu.vector_store %arg13[%c0_31, %c64], %30 {strides = array<i32>} : memref<48x128xf32, #tpu.memory_space<vmem>>, vector<36x32xf32>,
    %c0_32 = arith.constant 0 : index
    %c3 = arith.constant 3 : index
    %c0_33 = arith.constant 0 : index
    %c0_34 = arith.constant 0 : index
    %32 = vector.load %arg1[%c0_32, %c3, %c0_33, %c0_34] : memref<1x4x36x256xbf16, #tpu.memory_space<vmem>>, vector<1x1x36x256xbf16>
    %33 = vector.shape_cast %32 : vector<1x1x36x256xbf16> to vector<36x256xbf16>
    %c0_35 = arith.constant 0 : index
    %c0_36 = arith.constant 0 : index
    %34 = vector.load %arg2[%c0_35, %c0_36] : memref<256x32xbf16, #tpu.memory_space<vmem>>, vector<256x32xbf16>
    %cst_37 = arith.constant dense<0.000000e+00> : vector<36x32xf32>
    %35 = tpu.matmul %33, %34, %cst_37 {dimension_numbers = #tpu.dot_dimension_numbers<[1], [0], [0], [1], [0, 0, 1, 1], [], []>} : vector<36x256xbf16>, vector<256x32xbf16>, vector<36x32xf32> -> vector<36x32xf32>
    %36 = vector.broadcast %4 : vector<1x32xf32> to vector<36x32xf32>
    %37 = arith.addf %35, %36 : vector<36x32xf32>
    %cst_38 = arith.constant 0.000000e+00 : f32
    %38 = vector.broadcast %cst_38 : f32 to vector<36x32xf32>
    %39 = arith.maximumf %37, %38 : vector<36x32xf32>
    %c0_39 = arith.constant 0 : index
    %c96 = arith.constant 96 : index
    %40 = vector.load %arg13[%c0_39, %c96] : memref<48x128xf32, #tpu.memory_space<vmem>>, vector<36x32xf32>
    tpu.vector_store %arg13[%c0_39, %c96], %39 {strides = array<i32>} : memref<48x128xf32, #tpu.memory_space<vmem>>, vector<36x32xf32>,
    %cst_40 = arith.constant 0.000000e+00 : f32
    %41 = vector.broadcast %cst_40 : f32 to vector<36x64xf32>
    %c0_41 = arith.constant 0 : index
    %c0_42 = arith.constant 0 : index
    %42 = vector.load %arg13[%c0_41, %c0_42] : memref<48x128xf32, #tpu.memory_space<vmem>>, vector<36x128xf32>
    %43 = arith.truncf %42 : vector<36x128xf32> to vector<36x128xbf16>
    %c0_43 = arith.constant 0 : index
    %c0_44 = arith.constant 0 : index
    %c0_45 = arith.constant 0 : index
    %44 = vector.load %arg4[%c0_43, %c0_44, %c0_45] : memref<4x128x64xbf16, #tpu.memory_space<vmem>>, vector<1x128x64xbf16>
    %45 = vector.shape_cast %44 : vector<1x128x64xbf16> to vector<128x64xbf16>
    %cst_46 = arith.constant dense<0.000000e+00> : vector<36x64xf32>
    %46 = tpu.matmul %43, %45, %cst_46 {dimension_numbers = #tpu.dot_dimension_numbers<[1], [0], [0], [1], [0, 0, 1, 1], [], []>} : vector<36x128xbf16>, vector<128x64xbf16>, vector<36x64xf32> -> vector<36x64xf32>
    %47 = arith.addf %41, %46 : vector<36x64xf32>
    %c1_47 = arith.constant 1 : index
    %c0_48 = arith.constant 0 : index
    %48 = vector.load %arg13[%c1_47, %c0_48] : memref<48x128xf32, #tpu.memory_space<vmem>>, vector<36x128xf32>
    %49 = arith.truncf %48 : vector<36x128xf32> to vector<36x128xbf16>
    %c1_49 = arith.constant 1 : index
    %c0_50 = arith.constant 0 : index
    %c0_51 = arith.constant 0 : index
    %50 = vector.load %arg4[%c1_49, %c0_50, %c0_51] : memref<4x128x64xbf16, #tpu.memory_space<vmem>>, vector<1x128x64xbf16>
    %51 = vector.shape_cast %50 : vector<1x128x64xbf16> to vector<128x64xbf16>
    %cst_52 = arith.constant dense<0.000000e+00> : vector<36x64xf32>
    %52 = tpu.matmul %49, %51, %cst_52 {dimension_numbers = #tpu.dot_dimension_numbers<[1], [0], [0], [1], [0, 0, 1, 1], [], []>} : vector<36x128xbf16>, vector<128x64xbf16>, vector<36x64xf32> -> vector<36x64xf32>
    %53 = arith.addf %47, %52 : vector<36x64xf32>
    %c6 = arith.constant 6 : index
    %c0_53 = arith.constant 0 : index
    %54 = vector.load %arg13[%c6, %c0_53] : memref<48x128xf32, #tpu.memory_space<vmem>>, vector<36x128xf32>
    %55 = arith.truncf %54 : vector<36x128xf32> to vector<36x128xbf16>
    %c2_54 = arith.constant 2 : index
    %c0_55 = arith.constant 0 : index
    %c0_56 = arith.constant 0 : index
    %56 = vector.load %arg4[%c2_54, %c0_55, %c0_56] : memref<4x128x64xbf16, #tpu.memory_space<vmem>>, vector<1x128x64xbf16>
    %57 = vector.shape_cast %56 : vector<1x128x64xbf16> to vector<128x64xbf16>
    %cst_57 = arith.constant dense<0.000000e+00> : vector<36x64xf32>
    %58 = tpu.matmul %55, %57, %cst_57 {dimension_numbers = #tpu.dot_dimension_numbers<[1], [0], [0], [1], [0, 0, 1, 1], [], []>} : vector<36x128xbf16>, vector<128x64xbf16>, vector<36x64xf32> -> vector<36x64xf32>
    %59 = arith.addf %53, %58 : vector<36x64xf32>
    %c7 = arith.constant 7 : index
    %c0_58 = arith.constant 0 : index
    %60 = vector.load %arg13[%c7, %c0_58] : memref<48x128xf32, #tpu.memory_space<vmem>>, vector<36x128xf32>
    %61 = arith.truncf %60 : vector<36x128xf32> to vector<36x128xbf16>
    %c3_59 = arith.constant 3 : index
    %c0_60 = arith.constant 0 : index
    %c0_61 = arith.constant 0 : index
    %62 = vector.load %arg4[%c3_59, %c0_60, %c0_61] : memref<4x128x64xbf16, #tpu.memory_space<vmem>>, vector<1x128x64xbf16>
    %63 = vector.shape_cast %62 : vector<1x128x64xbf16> to vector<128x64xbf16>
    %cst_62 = arith.constant dense<0.000000e+00> : vector<36x64xf32>
    %64 = tpu.matmul %61, %63, %cst_62 {dimension_numbers = #tpu.dot_dimension_numbers<[1], [0], [0], [1], [0, 0, 1, 1], [], []>} : vector<36x128xbf16>, vector<128x64xbf16>, vector<36x64xf32> -> vector<36x64xf32>
    %65 = arith.addf %59, %64 : vector<36x64xf32>
    %c0_63 = arith.constant 0 : index
    %c0_64 = arith.constant 0 : index
    %66 = vector.load %arg5[%c0_63, %c0_64] : memref<1x64xf32, #tpu.memory_space<vmem>>, vector<1x64xf32>
    %67 = vector.broadcast %66 : vector<1x64xf32> to vector<36x64xf32>
    %68 = arith.addf %65, %67 : vector<36x64xf32>
    %cst_65 = arith.constant 0.000000e+00 : f32
    %69 = vector.broadcast %cst_65 : f32 to vector<36x64xf32>
    %70 = arith.maximumf %68, %69 : vector<36x64xf32>
    %c0_66 = arith.constant 0 : index
    %c0_67 = arith.constant 0 : index
    %71 = vector.load %arg14[%c0_66, %c0_67] : memref<56x64xf32, #tpu.memory_space<vmem>>, vector<36x64xf32>
    tpu.vector_store %arg14[%c0_66, %c0_67], %70 {strides = array<i32>} : memref<56x64xf32, #tpu.memory_space<vmem>>, vector<36x64xf32>,
    %cst_68 = arith.constant 0.000000e+00 : f32
    %72 = vector.broadcast %cst_68 : f32 to vector<36x64xf32>
    %c0_69 = arith.constant 0 : index
    %c0_70 = arith.constant 0 : index
    %73 = vector.load %arg14[%c0_69, %c0_70] : memref<56x64xf32, #tpu.memory_space<vmem>>, vector<36x64xf32>
    %74 = arith.truncf %73 : vector<36x64xf32> to vector<36x64xbf16>
    %c0_71 = arith.constant 0 : index
    %c0_72 = arith.constant 0 : index
    %c0_73 = arith.constant 0 : index
    %75 = vector.load %arg6[%c0_71, %c0_72, %c0_73] : memref<9x64x64xbf16, #tpu.memory_space<vmem>>, vector<1x64x64xbf16>
    %76 = vector.shape_cast %75 : vector<1x64x64xbf16> to vector<64x64xbf16>
    %cst_74 = arith.constant dense<0.000000e+00> : vector<36x64xf32>
    %77 = tpu.matmul %74, %76, %cst_74 {dimension_numbers = #tpu.dot_dimension_numbers<[1], [0], [0], [1], [0, 0, 1, 1], [], []>} : vector<36x64xbf16>, vector<64x64xbf16>, vector<36x64xf32> -> vector<36x64xf32>
    %78 = arith.addf %72, %77 : vector<36x64xf32>
    %c1_75 = arith.constant 1 : index
    %c0_76 = arith.constant 0 : index
    %79 = vector.load %arg14[%c1_75, %c0_76] : memref<56x64xf32, #tpu.memory_space<vmem>>, vector<36x64xf32>
    %80 = arith.truncf %79 : vector<36x64xf32> to vector<36x64xbf16>
    %c1_77 = arith.constant 1 : index
    %c0_78 = arith.constant 0 : index
    %c0_79 = arith.constant 0 : index
    %81 = vector.load %arg6[%c1_77, %c0_78, %c0_79] : memref<9x64x64xbf16, #tpu.memory_space<vmem>>, vector<1x64x64xbf16>
    %82 = vector.shape_cast %81 : vector<1x64x64xbf16> to vector<64x64xbf16>
    %cst_80 = arith.constant dense<0.000000e+00> : vector<36x64xf32>
    %83 = tpu.matmul %80, %82, %cst_80 {dimension_numbers = #tpu.dot_dimension_numbers<[1], [0], [0], [1], [0, 0, 1, 1], [], []>} : vector<36x64xbf16>, vector<64x64xbf16>, vector<36x64xf32> -> vector<36x64xf32>
    %84 = arith.addf %78, %83 : vector<36x64xf32>
    %c2_81 = arith.constant 2 : index
    %c0_82 = arith.constant 0 : index
    %85 = vector.load %arg14[%c2_81, %c0_82] : memref<56x64xf32, #tpu.memory_space<vmem>>, vector<36x64xf32>
    %86 = arith.truncf %85 : vector<36x64xf32> to vector<36x64xbf16>
    %c2_83 = arith.constant 2 : index
    %c0_84 = arith.constant 0 : index
    %c0_85 = arith.constant 0 : index
    %87 = vector.load %arg6[%c2_83, %c0_84, %c0_85] : memref<9x64x64xbf16, #tpu.memory_space<vmem>>, vector<1x64x64xbf16>
    %88 = vector.shape_cast %87 : vector<1x64x64xbf16> to vector<64x64xbf16>
    %cst_86 = arith.constant dense<0.000000e+00> : vector<36x64xf32>
    %89 = tpu.matmul %86, %88, %cst_86 {dimension_numbers = #tpu.dot_dimension_numbers<[1], [0], [0], [1], [0, 0, 1, 1], [], []>} : vector<36x64xbf16>, vector<64x64xbf16>, vector<36x64xf32> -> vector<36x64xf32>
    %90 = arith.addf %84, %89 : vector<36x64xf32>
    %c6_87 = arith.constant 6 : index
    %c0_88 = arith.constant 0 : index
    %91 = vector.load %arg14[%c6_87, %c0_88] : memref<56x64xf32, #tpu.memory_space<vmem>>, vector<36x64xf32>
    %92 = arith.truncf %91 : vector<36x64xf32> to vector<36x64xbf16>
    %c3_89 = arith.constant 3 : index
    %c0_90 = arith.constant 0 : index
    %c0_91 = arith.constant 0 : index
    %93 = vector.load %arg6[%c3_89, %c0_90, %c0_91] : memref<9x64x64xbf16, #tpu.memory_space<vmem>>, vector<1x64x64xbf16>
    %94 = vector.shape_cast %93 : vector<1x64x64xbf16> to vector<64x64xbf16>
    %cst_92 = arith.constant dense<0.000000e+00> : vector<36x64xf32>
    %95 = tpu.matmul %92, %94, %cst_92 {dimension_numbers = #tpu.dot_dimension_numbers<[1], [0], [0], [1], [0, 0, 1, 1], [], []>} : vector<36x64xbf16>, vector<64x64xbf16>, vector<36x64xf32> -> vector<36x64xf32>
    %96 = arith.addf %90, %95 : vector<36x64xf32>
    %c7_93 = arith.constant 7 : index
    %c0_94 = arith.constant 0 : index
    %97 = vector.load %arg14[%c7_93, %c0_94] : memref<56x64xf32, #tpu.memory_space<vmem>>, vector<36x64xf32>
    %98 = arith.truncf %97 : vector<36x64xf32> to vector<36x64xbf16>
    %c4 = arith.constant 4 : index
    %c0_95 = arith.constant 0 : index
    %c0_96 = arith.constant 0 : index
    %99 = vector.load %arg6[%c4, %c0_95, %c0_96] : memref<9x64x64xbf16, #tpu.memory_space<vmem>>, vector<1x64x64xbf16>
    %100 = vector.shape_cast %99 : vector<1x64x64xbf16> to vector<64x64xbf16>
    %cst_97 = arith.constant dense<0.000000e+00> : vector<36x64xf32>
    %101 = tpu.matmul %98, %100, %cst_97 {dimension_numbers = #tpu.dot_dimension_numbers<[1], [0], [0], [1], [0, 0, 1, 1], [], []>} : vector<36x64xbf16>, vector<64x64xbf16>, vector<36x64xf32> -> vector<36x64xf32>
    %102 = arith.addf %96, %101 : vector<36x64xf32>
    %c8 = arith.constant 8 : index
    %c0_98 = arith.constant 0 : index
    %103 = vector.load %arg14[%c8, %c0_98] : memref<56x64xf32, #tpu.memory_space<vmem>>, vector<36x64xf32>
    %104 = arith.truncf %103 : vector<36x64xf32> to vector<36x64xbf16>
    %c5 = arith.constant 5 : index
    %c0_99 = arith.constant 0 : index
    %c0_100 = arith.constant 0 : index
    %105 = vector.load %arg6[%c5, %c0_99, %c0_100] : memref<9x64x64xbf16, #tpu.memory_space<vmem>>, vector<1x64x64xbf16>
    %106 = vector.shape_cast %105 : vector<1x64x64xbf16> to vector<64x64xbf16>
    %cst_101 = arith.constant dense<0.000000e+00> : vector<36x64xf32>
    %107 = tpu.matmul %104, %106, %cst_101 {dimension_numbers = #tpu.dot_dimension_numbers<[1], [0], [0], [1], [0, 0, 1, 1], [], []>} : vector<36x64xbf16>, vector<64x64xbf16>, vector<36x64xf32> -> vector<36x64xf32>
    %108 = arith.addf %102, %107 : vector<36x64xf32>
    %c12 = arith.constant 12 : index
    %c0_102 = arith.constant 0 : index
    %109 = vector.load %arg14[%c12, %c0_102] : memref<56x64xf32, #tpu.memory_space<vmem>>, vector<36x64xf32>
    %110 = arith.truncf %109 : vector<36x64xf32> to vector<36x64xbf16>
    %c6_103 = arith.constant 6 : index
    %c0_104 = arith.constant 0 : index
    %c0_105 = arith.constant 0 : index
    %111 = vector.load %arg6[%c6_103, %c0_104, %c0_105] : memref<9x64x64xbf16, #tpu.memory_space<vmem>>, vector<1x64x64xbf16>
    %112 = vector.shape_cast %111 : vector<1x64x64xbf16> to vector<64x64xbf16>
    %cst_106 = arith.constant dense<0.000000e+00> : vector<36x64xf32>
    %113 = tpu.matmul %110, %112, %cst_106 {dimension_numbers = #tpu.dot_dimension_numbers<[1], [0], [0], [1], [0, 0, 1, 1], [], []>} : vector<36x64xbf16>, vector<64x64xbf16>, vector<36x64xf32> -> vector<36x64xf32>
    %114 = arith.addf %108, %113 : vector<36x64xf32>
    %c13 = arith.constant 13 : index
    %c0_107 = arith.constant 0 : index
    %115 = vector.load %arg14[%c13, %c0_107] : memref<56x64xf32, #tpu.memory_space<vmem>>, vector<36x64xf32>
    %116 = arith.truncf %115 : vector<36x64xf32> to vector<36x64xbf16>
    %c7_108 = arith.constant 7 : index
    %c0_109 = arith.constant 0 : index
    %c0_110 = arith.constant 0 : index
    %117 = vector.load %arg6[%c7_108, %c0_109, %c0_110] : memref<9x64x64xbf16, #tpu.memory_space<vmem>>, vector<1x64x64xbf16>
    %118 = vector.shape_cast %117 : vector<1x64x64xbf16> to vector<64x64xbf16>
    %cst_111 = arith.constant dense<0.000000e+00> : vector<36x64xf32>
    %119 = tpu.matmul %116, %118, %cst_111 {dimension_numbers = #tpu.dot_dimension_numbers<[1], [0], [0], [1], [0, 0, 1, 1], [], []>} : vector<36x64xbf16>, vector<64x64xbf16>, vector<36x64xf32> -> vector<36x64xf32>
    %120 = arith.addf %114, %119 : vector<36x64xf32>
    %c14 = arith.constant 14 : index
    %c0_112 = arith.constant 0 : index
    %121 = vector.load %arg14[%c14, %c0_112] : memref<56x64xf32, #tpu.memory_space<vmem>>, vector<36x64xf32>
    %122 = arith.truncf %121 : vector<36x64xf32> to vector<36x64xbf16>
    %c8_113 = arith.constant 8 : index
    %c0_114 = arith.constant 0 : index
    %c0_115 = arith.constant 0 : index
    %123 = vector.load %arg6[%c8_113, %c0_114, %c0_115] : memref<9x64x64xbf16, #tpu.memory_space<vmem>>, vector<1x64x64xbf16>
    %124 = vector.shape_cast %123 : vector<1x64x64xbf16> to vector<64x64xbf16>
    %cst_116 = arith.constant dense<0.000000e+00> : vector<36x64xf32>
    %125 = tpu.matmul %122, %124, %cst_116 {dimension_numbers = #tpu.dot_dimension_numbers<[1], [0], [0], [1], [0, 0, 1, 1], [], []>} : vector<36x64xbf16>, vector<64x64xbf16>, vector<36x64xf32> -> vector<36x64xf32>
    %126 = arith.addf %120, %125 : vector<36x64xf32>
    %c0_117 = arith.constant 0 : index
    %c0_118 = arith.constant 0 : index
    %127 = vector.load %arg7[%c0_117, %c0_118] : memref<1x64xf32, #tpu.memory_space<vmem>>, vector<1x64xf32>
    %128 = vector.broadcast %127 : vector<1x64xf32> to vector<36x64xf32>
    %129 = arith.addf %126, %128 : vector<36x64xf32>
    %cst_119 = arith.constant 0.000000e+00 : f32
    %130 = vector.broadcast %cst_119 : f32 to vector<36x64xf32>
    %131 = arith.maximumf %129, %130 : vector<36x64xf32>
    %c0_120 = arith.constant 0 : index
    %c0_121 = arith.constant 0 : index
    %132 = vector.load %arg9[%c0_120, %c0_121] : memref<1x512xf32, #tpu.memory_space<vmem>>, vector<1x512xf32>
    %133 = vector.extract_strided_slice %131 {offsets = [0, 0], sizes = [1, 64], strides = [1, 1]} : vector<36x64xf32> to vector<1x64xf32>
    %134 = arith.truncf %133 : vector<1x64xf32> to vector<1x64xbf16>
    %c0_122 = arith.constant 0 : index
    %c0_123 = arith.constant 0 : index
    %c0_124 = arith.constant 0 : index
    %135 = vector.load %arg8[%c0_122, %c0_123, %c0_124] : memref<9x64x512xbf16, #tpu.memory_space<vmem>>, vector<1x64x512xbf16>
    %136 = vector.shape_cast %135 : vector<1x64x512xbf16> to vector<64x512xbf16>
    %cst_125 = arith.constant dense<0.000000e+00> : vector<1x512xf32>
    %137 = tpu.matmul %134, %136, %cst_125 {dimension_numbers = #tpu.dot_dimension_numbers<[1], [0], [0], [1], [0, 0, 1, 1], [], []>} : vector<1x64xbf16>, vector<64x512xbf16>, vector<1x512xf32> -> vector<1x512xf32>
    %138 = arith.addf %132, %137 : vector<1x512xf32>
    %139 = vector.extract_strided_slice %131 {offsets = [1, 0], sizes = [1, 64], strides = [1, 1]} : vector<36x64xf32> to vector<1x64xf32>
    %140 = arith.truncf %139 : vector<1x64xf32> to vector<1x64xbf16>
    %c1_126 = arith.constant 1 : index
    %c0_127 = arith.constant 0 : index
    %c0_128 = arith.constant 0 : index
    %141 = vector.load %arg8[%c1_126, %c0_127, %c0_128] : memref<9x64x512xbf16, #tpu.memory_space<vmem>>, vector<1x64x512xbf16>
    %142 = vector.shape_cast %141 : vector<1x64x512xbf16> to vector<64x512xbf16>
    %cst_129 = arith.constant dense<0.000000e+00> : vector<1x512xf32>
    %143 = tpu.matmul %140, %142, %cst_129 {dimension_numbers = #tpu.dot_dimension_numbers<[1], [0], [0], [1], [0, 0, 1, 1], [], []>} : vector<1x64xbf16>, vector<64x512xbf16>, vector<1x512xf32> -> vector<1x512xf32>
    %144 = arith.addf %138, %143 : vector<1x512xf32>
    %145 = vector.extract_strided_slice %131 {offsets = [2, 0], sizes = [1, 64], strides = [1, 1]} : vector<36x64xf32> to vector<1x64xf32>
    %146 = arith.truncf %145 : vector<1x64xf32> to vector<1x64xbf16>
    %c2_130 = arith.constant 2 : index
    %c0_131 = arith.constant 0 : index
    %c0_132 = arith.constant 0 : index
    %147 = vector.load %arg8[%c2_130, %c0_131, %c0_132] : memref<9x64x512xbf16, #tpu.memory_space<vmem>>, vector<1x64x512xbf16>
    %148 = vector.shape_cast %147 : vector<1x64x512xbf16> to vector<64x512xbf16>
    %cst_133 = arith.constant dense<0.000000e+00> : vector<1x512xf32>
    %149 = tpu.matmul %146, %148, %cst_133 {dimension_numbers = #tpu.dot_dimension_numbers<[1], [0], [0], [1], [0, 0, 1, 1], [], []>} : vector<1x64xbf16>, vector<64x512xbf16>, vector<1x512xf32> -> vector<1x512xf32>
    %150 = arith.addf %144, %149 : vector<1x512xf32>
    %151 = vector.extract_strided_slice %131 {offsets = [6, 0], sizes = [1, 64], strides = [1, 1]} : vector<36x64xf32> to vector<1x64xf32>
    %152 = arith.truncf %151 : vector<1x64xf32> to vector<1x64xbf16>
    %c3_134 = arith.constant 3 : index
    %c0_135 = arith.constant 0 : index
    %c0_136 = arith.constant 0 : index
    %153 = vector.load %arg8[%c3_134, %c0_135, %c0_136] : memref<9x64x512xbf16, #tpu.memory_space<vmem>>, vector<1x64x512xbf16>
    %154 = vector.shape_cast %153 : vector<1x64x512xbf16> to vector<64x512xbf16>
    %cst_137 = arith.constant dense<0.000000e+00> : vector<1x512xf32>
    %155 = tpu.matmul %152, %154, %cst_137 {dimension_numbers = #tpu.dot_dimension_numbers<[1], [0], [0], [1], [0, 0, 1, 1], [], []>} : vector<1x64xbf16>, vector<64x512xbf16>, vector<1x512xf32> -> vector<1x512xf32>
    %156 = arith.addf %150, %155 : vector<1x512xf32>
    %157 = vector.extract_strided_slice %131 {offsets = [7, 0], sizes = [1, 64], strides = [1, 1]} : vector<36x64xf32> to vector<1x64xf32>
    %158 = arith.truncf %157 : vector<1x64xf32> to vector<1x64xbf16>
    %c4_138 = arith.constant 4 : index
    %c0_139 = arith.constant 0 : index
    %c0_140 = arith.constant 0 : index
    %159 = vector.load %arg8[%c4_138, %c0_139, %c0_140] : memref<9x64x512xbf16, #tpu.memory_space<vmem>>, vector<1x64x512xbf16>
    %160 = vector.shape_cast %159 : vector<1x64x512xbf16> to vector<64x512xbf16>
    %cst_141 = arith.constant dense<0.000000e+00> : vector<1x512xf32>
    %161 = tpu.matmul %158, %160, %cst_141 {dimension_numbers = #tpu.dot_dimension_numbers<[1], [0], [0], [1], [0, 0, 1, 1], [], []>} : vector<1x64xbf16>, vector<64x512xbf16>, vector<1x512xf32> -> vector<1x512xf32>
    %162 = arith.addf %156, %161 : vector<1x512xf32>
    %163 = vector.extract_strided_slice %131 {offsets = [8, 0], sizes = [1, 64], strides = [1, 1]} : vector<36x64xf32> to vector<1x64xf32>
    %164 = arith.truncf %163 : vector<1x64xf32> to vector<1x64xbf16>
    %c5_142 = arith.constant 5 : index
    %c0_143 = arith.constant 0 : index
    %c0_144 = arith.constant 0 : index
    %165 = vector.load %arg8[%c5_142, %c0_143, %c0_144] : memref<9x64x512xbf16, #tpu.memory_space<vmem>>, vector<1x64x512xbf16>
    %166 = vector.shape_cast %165 : vector<1x64x512xbf16> to vector<64x512xbf16>
    %cst_145 = arith.constant dense<0.000000e+00> : vector<1x512xf32>
    %167 = tpu.matmul %164, %166, %cst_145 {dimension_numbers = #tpu.dot_dimension_numbers<[1], [0], [0], [1], [0, 0, 1, 1], [], []>} : vector<1x64xbf16>, vector<64x512xbf16>, vector<1x512xf32> -> vector<1x512xf32>
    %168 = arith.addf %162, %167 : vector<1x512xf32>
    %169 = vector.extract_strided_slice %131 {offsets = [12, 0], sizes = [1, 64], strides = [1, 1]} : vector<36x64xf32> to vector<1x64xf32>
    %170 = arith.truncf %169 : vector<1x64xf32> to vector<1x64xbf16>
    %c6_146 = arith.constant 6 : index
    %c0_147 = arith.constant 0 : index
    %c0_148 = arith.constant 0 : index
    %171 = vector.load %arg8[%c6_146, %c0_147, %c0_148] : memref<9x64x512xbf16, #tpu.memory_space<vmem>>, vector<1x64x512xbf16>
    %172 = vector.shape_cast %171 : vector<1x64x512xbf16> to vector<64x512xbf16>
    %cst_149 = arith.constant dense<0.000000e+00> : vector<1x512xf32>
    %173 = tpu.matmul %170, %172, %cst_149 {dimension_numbers = #tpu.dot_dimension_numbers<[1], [0], [0], [1], [0, 0, 1, 1], [], []>} : vector<1x64xbf16>, vector<64x512xbf16>, vector<1x512xf32> -> vector<1x512xf32>
    %174 = arith.addf %168, %173 : vector<1x512xf32>
    %175 = vector.extract_strided_slice %131 {offsets = [13, 0], sizes = [1, 64], strides = [1, 1]} : vector<36x64xf32> to vector<1x64xf32>
    %176 = arith.truncf %175 : vector<1x64xf32> to vector<1x64xbf16>
    %c7_150 = arith.constant 7 : index
    %c0_151 = arith.constant 0 : index
    %c0_152 = arith.constant 0 : index
    %177 = vector.load %arg8[%c7_150, %c0_151, %c0_152] : memref<9x64x512xbf16, #tpu.memory_space<vmem>>, vector<1x64x512xbf16>
    %178 = vector.shape_cast %177 : vector<1x64x512xbf16> to vector<64x512xbf16>
    %cst_153 = arith.constant dense<0.000000e+00> : vector<1x512xf32>
    %179 = tpu.matmul %176, %178, %cst_153 {dimension_numbers = #tpu.dot_dimension_numbers<[1], [0], [0], [1], [0, 0, 1, 1], [], []>} : vector<1x64xbf16>, vector<64x512xbf16>, vector<1x512xf32> -> vector<1x512xf32>
    %180 = arith.addf %174, %179 : vector<1x512xf32>
    %181 = vector.extract_strided_slice %131 {offsets = [14, 0], sizes = [1, 64], strides = [1, 1]} : vector<36x64xf32> to vector<1x64xf32>
    %182 = arith.truncf %181 : vector<1x64xf32> to vector<1x64xbf16>
    %c8_154 = arith.constant 8 : index
    %c0_155 = arith.constant 0 : index
    %c0_156 = arith.constant 0 : index
    %183 = vector.load %arg8[%c8_154, %c0_155, %c0_156] : memref<9x64x512xbf16, #tpu.memory_space<vmem>>, vector<1x64x512xbf16>
    %184 = vector.shape_cast %183 : vector<1x64x512xbf16> to vector<64x512xbf16>
    %cst_157 = arith.constant dense<0.000000e+00> : vector<1x512xf32>
    %185 = tpu.matmul %182, %184, %cst_157 {dimension_numbers = #tpu.dot_dimension_numbers<[1], [0], [0], [1], [0, 0, 1, 1], [], []>} : vector<1x64xbf16>, vector<64x512xbf16>, vector<1x512xf32> -> vector<1x512xf32>
    %186 = arith.addf %180, %185 : vector<1x512xf32>
    %cst_158 = arith.constant 0.000000e+00 : f32
    %187 = vector.broadcast %cst_158 : f32 to vector<1x512xf32>
    %188 = arith.maximumf %186, %187 : vector<1x512xf32>
    %189 = arith.truncf %188 : vector<1x512xf32> to vector<1x512xbf16>
    %c0_159 = arith.constant 0 : index
    %c0_160 = arith.constant 0 : index
    %190 = vector.load %arg10[%c0_159, %c0_160] : memref<512x128xbf16, #tpu.memory_space<vmem>>, vector<512x128xbf16>
    %cst_161 = arith.constant dense<0.000000e+00> : vector<1x128xf32>
    %191 = tpu.matmul %189, %190, %cst_161 {dimension_numbers = #tpu.dot_dimension_numbers<[1], [0], [0], [1], [0, 0, 1, 1], [], []>} : vector<1x512xbf16>, vector<512x128xbf16>, vector<1x128xf32> -> vector<1x128xf32>
    %c0_162 = arith.constant 0 : index
    %c0_163 = arith.constant 0 : index
    %192 = vector.load %arg11[%c0_162, %c0_163] : memref<1x128xf32, #tpu.memory_space<vmem>>, vector<1x128xf32>
    %193 = arith.addf %191, %192 : vector<1x128xf32>
    %c0_164 = arith.constant 0 : index
    %c0_165 = arith.constant 0 : index
    %c0_166 = arith.constant 0 : index
    %194 = vector.load %arg12[%c0_164, %c0_165, %c0_166] : memref<1x1x128xf32, #tpu.memory_space<vmem>>, vector<1x1x128xf32>
    %195 = vector.shape_cast %194 : vector<1x1x128xf32> to vector<1x128xf32>
    %196 = vector.shape_cast %193 : vector<1x128xf32> to vector<1x1x128xf32>
    tpu.vector_store %arg12[%c0_164, %c0_165, %c0_166], %196 {strides = array<i32>} : memref<1x1x128xf32, #tpu.memory_space<vmem>>, vector<1x1x128xf32>,
    return
  }
  func.func @transform_0(%arg0: i32) -> (i32, i32, i32, i32) {
    %c0_i32 = arith.constant 0 : i32
    %c0_i32_0 = arith.constant 0 : i32
    %c0_i32_1 = arith.constant 0 : i32
    %c0_i32_2 = arith.constant 0 : i32
    return %arg0, %c0_i32, %c0_i32_0, %c0_i32_1 : i32, i32, i32, i32
  }
  func.func @transform_1(%arg0: i32) -> (i32, i32) {
    %c0_i32 = arith.constant 0 : i32
    %c0_i32_0 = arith.constant 0 : i32
    %c0_i32_1 = arith.constant 0 : i32
    return %c0_i32, %c0_i32_0 : i32, i32
  }
  func.func @transform_2(%arg0: i32) -> (i32, i32) {
    %c0_i32 = arith.constant 0 : i32
    %c0_i32_0 = arith.constant 0 : i32
    %c0_i32_1 = arith.constant 0 : i32
    return %c0_i32, %c0_i32_0 : i32, i32
  }
  func.func @transform_3(%arg0: i32) -> (i32, i32, i32) {
    %c0_i32 = arith.constant 0 : i32
    %c0_i32_0 = arith.constant 0 : i32
    %c0_i32_1 = arith.constant 0 : i32
    %c0_i32_2 = arith.constant 0 : i32
    return %c0_i32, %c0_i32_0, %c0_i32_1 : i32, i32, i32
  }
  func.func @transform_4(%arg0: i32) -> (i32, i32) {
    %c0_i32 = arith.constant 0 : i32
    %c0_i32_0 = arith.constant 0 : i32
    %c0_i32_1 = arith.constant 0 : i32
    return %c0_i32, %c0_i32_0 : i32, i32
  }
  func.func @transform_5(%arg0: i32) -> (i32, i32, i32) {
    %c0_i32 = arith.constant 0 : i32
    %c0_i32_0 = arith.constant 0 : i32
    %c0_i32_1 = arith.constant 0 : i32
    %c0_i32_2 = arith.constant 0 : i32
    return %c0_i32, %c0_i32_0, %c0_i32_1 : i32, i32, i32
  }
  func.func @transform_6(%arg0: i32) -> (i32, i32) {
    %c0_i32 = arith.constant 0 : i32
    %c0_i32_0 = arith.constant 0 : i32
    %c0_i32_1 = arith.constant 0 : i32
    return %c0_i32, %c0_i32_0 : i32, i32
  }
  func.func @transform_7(%arg0: i32) -> (i32, i32, i32) {
    %c0_i32 = arith.constant 0 : i32
    %c0_i32_0 = arith.constant 0 : i32
    %c0_i32_1 = arith.constant 0 : i32
    %c0_i32_2 = arith.constant 0 : i32
    return %c0_i32, %c0_i32_0, %c0_i32_1 : i32, i32, i32
  }
  func.func @transform_8(%arg0: i32) -> (i32, i32) {
    %c0_i32 = arith.constant 0 : i32
    %c0_i32_0 = arith.constant 0 : i32
    %c0_i32_1 = arith.constant 0 : i32
    return %c0_i32, %c0_i32_0 : i32, i32
  }
  func.func @transform_9(%arg0: i32) -> (i32, i32) {
    %c0_i32 = arith.constant 0 : i32
    %c0_i32_0 = arith.constant 0 : i32
    %c0_i32_1 = arith.constant 0 : i32
    return %c0_i32, %c0_i32_0 : i32, i32
  }
  func.func @transform_10(%arg0: i32) -> (i32, i32) {
    %c0_i32 = arith.constant 0 : i32
    %c0_i32_0 = arith.constant 0 : i32
    %c0_i32_1 = arith.constant 0 : i32
    return %c0_i32, %c0_i32_0 : i32, i32
  }
  func.func @transform_11(%arg0: i32) -> (i32, i32, i32) {
    %c0_i32 = arith.constant 0 : i32
    %c0_i32_0 = arith.constant 0 : i32
    %c0_i32_1 = arith.constant 0 : i32
    return %arg0, %c0_i32, %c0_i32_0 : i32, i32, i32
  }
}

</mosaic_0001>

<llo_original>
// kernel: vanilla_dqn_forward.1
$region0: #{vanilla_dqn_forward.1}
  #allocation0 [shape = 'u32[]', space=smem, size = 0x4, offset = 0x4, fixed_abs, tag = 'smem constant byte address 0x4 - core index']
  #allocation1 [shape = 'u32[144,128]{1,0:T(1,128)}', space=vmem, size = 0x12000, scoped, tag = 'internal scratch']
  #allocation2 [shape = 'f32[48,128]{1,0:T(8,128)}', space=vmem, size = 0x6000, scoped, tag = 'scratch operand']
  #allocation3 [shape = 'f32[56,64]{1,0:T(8,128)}', space=vmem, size = 0x7000, scoped, tag = 'scratch operand']
  %s0 = inlined_call_operand.vmem [shape: bf16[2,4,36,256], index: 0, kind: input, shape index: {}]
  %s1 = inlined_call_operand.vmem [shape: bf16[256,32], index: 1, kind: input, shape index: {}]
  %s2 = inlined_call_operand.vmem [shape: f32[1,32], index: 2, kind: input, shape index: {}]
  %s3 = inlined_call_operand.vmem [shape: bf16[4,128,64], index: 3, kind: input, shape index: {}]
  %s4 = inlined_call_operand.vmem [shape: f32[1,64], index: 4, kind: input, shape index: {}]
  %s5 = inlined_call_operand.vmem [shape: bf16[9,64,64], index: 5, kind: input, shape index: {}]
  %s6 = inlined_call_operand.vmem [shape: f32[1,64], index: 6, kind: input, shape index: {}]
  %s7 = inlined_call_operand.vmem [shape: bf16[9,64,512], index: 7, kind: input, shape index: {}]
  %s8 = inlined_call_operand.vmem [shape: f32[1,512], index: 8, kind: input, shape index: {}]
  %s9 = inlined_call_operand.vmem [shape: bf16[512,128], index: 9, kind: input, shape index: {}]
  %s10 = inlined_call_operand.vmem [shape: f32[1,128], index: 10, kind: input, shape index: {}]
  %s11 = inlined_call_operand.hbm [shape: f32[2,1,128], index: 11, kind: output, shape index: {}]
  %s12 = sld [smem:[#allocation0]]
  $region77: #{vanilla_dqn_forward.1} parent=0
    _
  %s14 = ssub.s32 1, %s12
  %s15 = scalar_select 0, %s14, %s12
  $region1: #{vanilla_dqn_forward.1} parent=0
    #allocation4 [shape = 'u8[1024]{0}', space=vmem, size = 0x400, scoped, tag = 'output window, operand 0']
    #allocation5 [shape = 's32[2]{0}', space=sflag, size = 0x8, scoped, tag = 'scoped memory for vanilla_dqn_forward.1']
    %16 = vsyncpa [#allocation5], 0
    %s17 = scalar_lea.sflag [#allocation5], 1
    %18 = vsyncpa %s17, 0
    loop: start=0, step=1, limit=4
    $region2: #{vanilla_dqn_forward.1} parent=1 // loop_pre_header
      _
    $region3: #{vanilla_dqn_forward.1} parent=1 // loop_header
      %s20 = sphi 0, %s24
      %p21 = scmp.ge.s32.totalorder %s20, 4
      %s30 = sphi 0, %s32
      %s33 = sphi 0, %s30
      %s34 = sphi 0, %s33
      %s50 = sphi 0, %s34
      %s54 = sphi 0, %s54
      %s56 = sphi 0, %s54
      %s57 = sphi 0, %s56
      %s71 = sphi 0, %s57
      %s75 = sphi 0, %s75
      %s77 = sphi 0, %s75
      %s78 = sphi 0, %s77
      %s92 = sphi 0, %s78
      %s96 = sphi 0, %s96
      %s98 = sphi 0, %s96
      %s99 = sphi 0, %s98
      %s113 = sphi 0, %s99
      %s117 = sphi 0, %s117
      %s119 = sphi 0, %s117
      %s120 = sphi 0, %s119
      %s134 = sphi 0, %s120
      %s138 = sphi 0, %s138
      %s140 = sphi 0, %s138
      %s141 = sphi 0, %s140
      %s155 = sphi 0, %s141
      %s159 = sphi 0, %s159
      %s161 = sphi 0, %s159
      %s162 = sphi 0, %s161
      %s176 = sphi 0, %s162
      %s180 = sphi 0, %s180
      %s182 = sphi 0, %s180
      %s183 = sphi 0, %s182
      %s197 = sphi 0, %s183
      %s201 = sphi 0, %s201
      %s203 = sphi 0, %s201
      %s204 = sphi 0, %s203
      %s218 = sphi 0, %s204
      %s222 = sphi 0, %s222
      %s224 = sphi 0, %s222
      %s225 = sphi 0, %s224
      %s239 = sphi 0, %s225
      %s243 = sphi 0, %s243
      %s245 = sphi 0, %s243
      %s246 = sphi 0, %s245
      %s260 = sphi 0, %s246
      %s266 = sphi 0, %s268
      %s269 = sphi 0, %s266
      %s270 = sphi 0, %s269
      %s286 = sphi 0, %s270
    $region4: #{vanilla_dqn_forward.1} parent=1 // loop_header_branch
      %23 = sbr.rel (%p21) target = $region8
    $region5: #{vanilla_dqn_forward.1} parent=1 // loop_body
      %s25 = ssub.s32 %s20, 1
      %s26 = ssub.s32 %s20, 2
      %s27 = sadd.s32 %s20, 1
      %s28 = ssub.s32 %s20, %s27
      %p29 = scmp.eq.s32.totalorder %s28, 0
      %s31 = sadd.s32 %s30, 1
      %s32 = scalar_select %p29, %s30, %s31
      %p35 = pneg %p29
      %p36 = scmp.eq.s32.totalorder %s20, 1
      %p37 = por %p35, %p36
      %p38 = scmp.ne.s32.totalorder %s30, %s33
      %p39 = scmp.eq.s32.totalorder %s20, 0
      %p40 = por %p38, %p39
      %p41 = scmp.ne.s32.totalorder %s30, %s33
      %p42 = scmp.eq.s32.totalorder %s25, 1
      %p43 = por %p41, %p42
      %p44 = scmp.ne.s32.totalorder %s33, %s34
      %p45 = scmp.eq.s32.totalorder %s25, 0
      %p46 = por %p44, %p45
      %p47 = scmp.ne.s32.totalorder %s33, %s34
      %p48 = scmp.eq.s32.totalorder %s26, 1
      %p49 = por %p47, %p48
      %p51 = scmp.ne.s32.totalorder %s34, %s50
      %p52 = scmp.eq.s32.totalorder %s26, 0
      %p53 = por %p51, %p52
      %s55 = sadd.s32 %s54, 1
      %p58 = scmp.eq.s32.totalorder %s20, 1
      %p59 = scmp.ne.s32.totalorder %s54, %s56
      %p60 = scmp.eq.s32.totalorder %s20, 0
      %p61 = por %p59, %p60
      %p62 = scmp.ne.s32.totalorder %s54, %s56
      %p63 = scmp.eq.s32.totalorder %s25, 1
      %p64 = por %p62, %p63
      %p65 = scmp.ne.s32.totalorder %s56, %s57
      %p66 = scmp.eq.s32.totalorder %s25, 0
      %p67 = por %p65, %p66
      %p68 = scmp.ne.s32.totalorder %s56, %s57
      %p69 = scmp.eq.s32.totalorder %s26, 1
      %p70 = por %p68, %p69
      %p72 = scmp.ne.s32.totalorder %s57, %s71
      %p73 = scmp.eq.s32.totalorder %s26, 0
      %p74 = por %p72, %p73
      %s76 = sadd.s32 %s75, 1
      %p79 = scmp.eq.s32.totalorder %s20, 1
      %p80 = scmp.ne.s32.totalorder %s75, %s77
      %p81 = scmp.eq.s32.totalorder %s20, 0
      %p82 = por %p80, %p81
      %p83 = scmp.ne.s32.totalorder %s75, %s77
      %p84 = scmp.eq.s32.totalorder %s25, 1
      %p85 = por %p83, %p84
      %p86 = scmp.ne.s32.totalorder %s77, %s78
      %p87 = scmp.eq.s32.totalorder %s25, 0
      %p88 = por %p86, %p87
      %p89 = scmp.ne.s32.totalorder %s77, %s78
      %p90 = scmp.eq.s32.totalorder %s26, 1
      %p91 = por %p89, %p90
      %p93 = scmp.ne.s32.totalorder %s78, %s92
      %p94 = scmp.eq.s32.totalorder %s26, 0
      %p95 = por %p93, %p94
      %s97 = sadd.s32 %s96, 1
      %p100 = scmp.eq.s32.totalorder %s20, 1
      %p101 = scmp.ne.s32.totalorder %s96, %s98
      %p102 = scmp.eq.s32.totalorder %s20, 0
      %p103 = por %p101, %p102
      %p104 = scmp.ne.s32.totalorder %s96, %s98
      %p105 = scmp.eq.s32.totalorder %s25, 1
      %p106 = por %p104, %p105
      %p107 = scmp.ne.s32.totalorder %s98, %s99
      %p108 = scmp.eq.s32.totalorder %s25, 0
      %p109 = por %p107, %p108
      %p110 = scmp.ne.s32.totalorder %s98, %s99
      %p111 = scmp.eq.s32.totalorder %s26, 1
      %p112 = por %p110, %p111
      %p114 = scmp.ne.s32.totalorder %s99, %s113
      %p115 = scmp.eq.s32.totalorder %s26, 0
      %p116 = por %p114, %p115
      %s118 = sadd.s32 %s117, 1
      %p121 = scmp.eq.s32.totalorder %s20, 1
      %p122 = scmp.ne.s32.totalorder %s117, %s119
      %p123 = scmp.eq.s32.totalorder %s20, 0
      %p124 = por %p122, %p123
      %p125 = scmp.ne.s32.totalorder %s117, %s119
      %p126 = scmp.eq.s32.totalorder %s25, 1
      %p127 = por %p125, %p126
      %p128 = scmp.ne.s32.totalorder %s119, %s120
      %p129 = scmp.eq.s32.totalorder %s25, 0
      %p130 = por %p128, %p129
      %p131 = scmp.ne.s32.totalorder %s119, %s120
      %p132 = scmp.eq.s32.totalorder %s26, 1
      %p133 = por %p131, %p132
      %p135 = scmp.ne.s32.totalorder %s120, %s134
      %p136 = scmp.eq.s32.totalorder %s26, 0
      %p137 = por %p135, %p136
      %s139 = sadd.s32 %s138, 1
      %p142 = scmp.eq.s32.totalorder %s20, 1
      %p143 = scmp.ne.s32.totalorder %s138, %s140
      %p144 = scmp.eq.s32.totalorder %s20, 0
      %p145 = por %p143, %p144
      %p146 = scmp.ne.s32.totalorder %s138, %s140
      %p147 = scmp.eq.s32.totalorder %s25, 1
      %p148 = por %p146, %p147
      %p149 = scmp.ne.s32.totalorder %s140, %s141
      %p150 = scmp.eq.s32.totalorder %s25, 0
      %p151 = por %p149, %p150
      %p152 = scmp.ne.s32.totalorder %s140, %s141
      %p153 = scmp.eq.s32.totalorder %s26, 1
      %p154 = por %p152, %p153
      %p156 = scmp.ne.s32.totalorder %s141, %s155
      %p157 = scmp.eq.s32.totalorder %s26, 0
      %p158 = por %p156, %p157
      %s160 = sadd.s32 %s159, 1
      %p163 = scmp.eq.s32.totalorder %s20, 1
      %p164 = scmp.ne.s32.totalorder %s159, %s161
      %p165 = scmp.eq.s32.totalorder %s20, 0
      %p166 = por %p164, %p165
      %p167 = scmp.ne.s32.totalorder %s159, %s161
      %p168 = scmp.eq.s32.totalorder %s25, 1
      %p169 = por %p167, %p168
      %p170 = scmp.ne.s32.totalorder %s161, %s162
      %p171 = scmp.eq.s32.totalorder %s25, 0
      %p172 = por %p170, %p171
      %p173 = scmp.ne.s32.totalorder %s161, %s162
      %p174 = scmp.eq.s32.totalorder %s26, 1
      %p175 = por %p173, %p174
      %p177 = scmp.ne.s32.totalorder %s162, %s176
      %p178 = scmp.eq.s32.totalorder %s26, 0
      %p179 = por %p177, %p178
      %s181 = sadd.s32 %s180, 1
      %p184 = scmp.eq.s32.totalorder %s20, 1
      %p185 = scmp.ne.s32.totalorder %s180, %s182
      %p186 = scmp.eq.s32.totalorder %s20, 0
      %p187 = por %p185, %p186
      %p188 = scmp.ne.s32.totalorder %s180, %s182
      %p189 = scmp.eq.s32.totalorder %s25, 1
      %p190 = por %p188, %p189
      %p191 = scmp.ne.s32.totalorder %s182, %s183
      %p192 = scmp.eq.s32.totalorder %s25, 0
      %p193 = por %p191, %p192
      %p194 = scmp.ne.s32.totalorder %s182, %s183
      %p195 = scmp.eq.s32.totalorder %s26, 1
      %p196 = por %p194, %p195
      %p198 = scmp.ne.s32.totalorder %s183, %s197
      %p199 = scmp.eq.s32.totalorder %s26, 0
      %p200 = por %p198, %p199
      %s202 = sadd.s32 %s201, 1
      %p205 = scmp.eq.s32.totalorder %s20, 1
      %p206 = scmp.ne.s32.totalorder %s201, %s203
      %p207 = scmp.eq.s32.totalorder %s20, 0
      %p208 = por %p206, %p207
      %p209 = scmp.ne.s32.totalorder %s201, %s203
      %p210 = scmp.eq.s32.totalorder %s25, 1
      %p211 = por %p209, %p210
      %p212 = scmp.ne.s32.totalorder %s203, %s204
      %p213 = scmp.eq.s32.totalorder %s25, 0
      %p214 = por %p212, %p213
      %p215 = scmp.ne.s32.totalorder %s203, %s204
      %p216 = scmp.eq.s32.totalorder %s26, 1
      %p217 = por %p215, %p216
      %p219 = scmp.ne.s32.totalorder %s204, %s218
      %p220 = scmp.eq.s32.totalorder %s26, 0
      %p221 = por %p219, %p220
      %s223 = sadd.s32 %s222, 1
      %p226 = scmp.eq.s32.totalorder %s20, 1
      %p227 = scmp.ne.s32.totalorder %s222, %s224
      %p228 = scmp.eq.s32.totalorder %s20, 0
      %p229 = por %p227, %p228
      %p230 = scmp.ne.s32.totalorder %s222, %s224
      %p231 = scmp.eq.s32.totalorder %s25, 1
      %p232 = por %p230, %p231
      %p233 = scmp.ne.s32.totalorder %s224, %s225
      %p234 = scmp.eq.s32.totalorder %s25, 0
      %p235 = por %p233, %p234
      %p236 = scmp.ne.s32.totalorder %s224, %s225
      %p237 = scmp.eq.s32.totalorder %s26, 1
      %p238 = por %p236, %p237
      %p240 = scmp.ne.s32.totalorder %s225, %s239
      %p241 = scmp.eq.s32.totalorder %s26, 0
      %p242 = por %p240, %p241
      %s244 = sadd.s32 %s243, 1
      %p247 = scmp.eq.s32.totalorder %s20, 1
      %p248 = scmp.ne.s32.totalorder %s243, %s245
      %p249 = scmp.eq.s32.totalorder %s20, 0
      %p250 = por %p248, %p249
      %p251 = scmp.ne.s32.totalorder %s243, %s245
      %p252 = scmp.eq.s32.totalorder %s25, 1
      %p253 = por %p251, %p252
      %p254 = scmp.ne.s32.totalorder %s245, %s246
      %p255 = scmp.eq.s32.totalorder %s25, 0
      %p256 = por %p254, %p255
      %p257 = scmp.ne.s32.totalorder %s245, %s246
      %p258 = scmp.eq.s32.totalorder %s26, 1
      %p259 = por %p257, %p258
      %p261 = scmp.ne.s32.totalorder %s246, %s260
      %p262 = scmp.eq.s32.totalorder %s26, 0
      %p263 = por %p261, %p262
      %s264 = ssub.s32 %s20, %s27
      %p265 = scmp.eq.s32.totalorder %s264, 0
      %s267 = sadd.s32 %s266, 1
      %s268 = scalar_select %p265, %s266, %s267
      %p271 = pneg %p265
      %p272 = scmp.eq.s32.totalorder %s20, 1
      %p273 = por %p271, %p272
      %p274 = scmp.ne.s32.totalorder %s266, %s269
      %p275 = scmp.eq.s32.totalorder %s20, 0
      %p276 = por %p274, %p275
      %p277 = scmp.ne.s32.totalorder %s266, %s269
      %p278 = scmp.eq.s32.totalorder %s25, 1
      %p279 = por %p277, %p278
      %p280 = scmp.ne.s32.totalorder %s269, %s270
      %p281 = scmp.eq.s32.totalorder %s25, 0
      %p282 = por %p280, %p281
      %p283 = scmp.ne.s32.totalorder %s269, %s270
      %p284 = scmp.eq.s32.totalorder %s26, 1
      %p285 = por %p283, %p284
      %p287 = scmp.ne.s32.totalorder %s270, %s286
      %p288 = scmp.eq.s32.totalorder %s26, 0
      %p289 = por %p287, %p288
      %p290 = scmp.le.s32.totalorder 1, %s20
      %p291 = scmp.lt.s32.totalorder %s20, 3
      %p292 = pnand %p290, %p291
      %p293 = pneg %p292
      // Predicated region
      $region9: #{vanilla_dqn_forward.1} parent=5 // pred_check
        _
      $region10: #{vanilla_dqn_forward.1} parent=5 // pred_check_branch
        %295 = sbr.rel (%p292) target = $region12
      $region11: #{vanilla_dqn_forward.1} parent=5 // pred_region
        %s296 = ssub.s32 %s20, 1
        // Predicated region
        $region13: #{vanilla_dqn_forward.1} parent=11 // pred_check
          %p297 = pneg %p67
        $region14: #{vanilla_dqn_forward.1} parent=11 // pred_check_branch
          %299 = sbr.rel (%p297) target = $region16
        $region15: #{vanilla_dqn_forward.1} parent=11 // pred_region
          _
        $region16: #{vanilla_dqn_forward.1} parent=11 // pred_fallthru
          _
        // Predicated region
        $region17: #{vanilla_dqn_forward.1} parent=11 // pred_check
          %p300 = pneg %p88
        $region18: #{vanilla_dqn_forward.1} parent=11 // pred_check_branch
          %302 = sbr.rel (%p300) target = $region20
        $region19: #{vanilla_dqn_forward.1} parent=11 // pred_region
          _
        $region20: #{vanilla_dqn_forward.1} parent=11 // pred_fallthru
          _
        // Predicated region
        $region21: #{vanilla_dqn_forward.1} parent=11 // pred_check
          %p303 = pneg %p109
        $region22: #{vanilla_dqn_forward.1} parent=11 // pred_check_branch
          %305 = sbr.rel (%p303) target = $region24
        $region23: #{vanilla_dqn_forward.1} parent=11 // pred_region
          _
        $region24: #{vanilla_dqn_forward.1} parent=11 // pred_fallthru
          _
        // Predicated region
        $region25: #{vanilla_dqn_forward.1} parent=11 // pred_check
          %p306 = pneg %p130
        $region26: #{vanilla_dqn_forward.1} parent=11 // pred_check_branch
          %308 = sbr.rel (%p306) target = $region28
        $region27: #{vanilla_dqn_forward.1} parent=11 // pred_region
          _
        $region28: #{vanilla_dqn_forward.1} parent=11 // pred_fallthru
          _
        // Predicated region
        $region29: #{vanilla_dqn_forward.1} parent=11 // pred_check
          %p309 = pneg %p151
        $region30: #{vanilla_dqn_forward.1} parent=11 // pred_check_branch
          %311 = sbr.rel (%p309) target = $region32
        $region31: #{vanilla_dqn_forward.1} parent=11 // pred_region
          _
        $region32: #{vanilla_dqn_forward.1} parent=11 // pred_fallthru
          _
        // Predicated region
        $region33: #{vanilla_dqn_forward.1} parent=11 // pred_check
          %p312 = pneg %p172
        $region34: #{vanilla_dqn_forward.1} parent=11 // pred_check_branch
          %314 = sbr.rel (%p312) target = $region36
        $region35: #{vanilla_dqn_forward.1} parent=11 // pred_region
          _
        $region36: #{vanilla_dqn_forward.1} parent=11 // pred_fallthru
          _
        // Predicated region
        $region37: #{vanilla_dqn_forward.1} parent=11 // pred_check
          %p315 = pneg %p193
        $region38: #{vanilla_dqn_forward.1} parent=11 // pred_check_branch
          %317 = sbr.rel (%p315) target = $region40
        $region39: #{vanilla_dqn_forward.1} parent=11 // pred_region
          _
        $region40: #{vanilla_dqn_forward.1} parent=11 // pred_fallthru
          _
        // Predicated region
        $region41: #{vanilla_dqn_forward.1} parent=11 // pred_check
          %p318 = pneg %p214
        $region42: #{vanilla_dqn_forward.1} parent=11 // pred_check_branch
          %320 = sbr.rel (%p318) target = $region44
        $region43: #{vanilla_dqn_forward.1} parent=11 // pred_region
          _
        $region44: #{vanilla_dqn_forward.1} parent=11 // pred_fallthru
          _
        // Predicated region
        $region45: #{vanilla_dqn_forward.1} parent=11 // pred_check
          %p321 = pneg %p235
        $region46: #{vanilla_dqn_forward.1} parent=11 // pred_check_branch
          %323 = sbr.rel (%p321) target = $region48
        $region47: #{vanilla_dqn_forward.1} parent=11 // pred_region
          _
        $region48: #{vanilla_dqn_forward.1} parent=11 // pred_fallthru
          _
        // Predicated region
        $region49: #{vanilla_dqn_forward.1} parent=11 // pred_check
          %p324 = pneg %p256
        $region50: #{vanilla_dqn_forward.1} parent=11 // pred_check_branch
          %326 = sbr.rel (%p324) target = $region52
        $region51: #{vanilla_dqn_forward.1} parent=11 // pred_region
          _
        $region52: #{vanilla_dqn_forward.1} parent=11 // pred_fallthru
          _
      $region12: #{vanilla_dqn_forward.1} parent=5 // pred_fallthru
        _
      %p327 = scmp.lt.s32.totalorder %s20, 2
      // Predicated region
      $region53: #{vanilla_dqn_forward.1} parent=5 // pred_check
        %p328 = pneg %p327
      $region54: #{vanilla_dqn_forward.1} parent=5 // pred_check_branch
        %330 = sbr.rel (%p328) target = $region56
      $region55: #{vanilla_dqn_forward.1} parent=5 // pred_region
        // Predicated region
        $region57: #{vanilla_dqn_forward.1} parent=55 // pred_check
          %p331 = pneg %p40
        $region58: #{vanilla_dqn_forward.1} parent=55 // pred_check_branch
          %333 = sbr.rel (%p331) target = $region60
        $region59: #{vanilla_dqn_forward.1} parent=55 // pred_region
          %p334 = scmp.lt.s32.totalorder %s20, 1
          %s335 = scalar_select %p334, %s20, 1
          %s336 = smul.addr %s335, 40
          %s337 = smul.addr %s336, 4
          %s338 = scalar_lea.vmem %s0, %s337
        $region60: #{vanilla_dqn_forward.1} parent=55 // pred_fallthru
          _
      $region56: #{vanilla_dqn_forward.1} parent=5 // pred_fallthru
        _
      %p339 = scmp.le.s32.totalorder 1, %s20
      %p340 = scmp.lt.s32.totalorder %s20, 3
      %p341 = pnand %p339, %p340
      %p342 = pneg %p341
      // Predicated region
      $region61: #{vanilla_dqn_forward.1} parent=5 // pred_check
        _
      $region62: #{vanilla_dqn_forward.1} parent=5 // pred_check_branch
        %344 = sbr.rel (%p341) target = $region64
      $region63: #{vanilla_dqn_forward.1} parent=5 // pred_region
        %s345 = ssub.s32 %s20, 1
        %p346 = scmp.lt.s32.totalorder %s25, 1
        %s347 = scalar_select %p346, %s25, 1
        %s348 = smul.addr %s347, 40
        %s349 = smul.addr %s348, 4
        %s350 = scalar_lea.vmem %s0, %s349
        %p351 = pneg %p46
        %p352 = pneg %p43
        %p353 = pneg %p67
        %p354 = pneg %p64
        %p355 = pneg %p88
        %p356 = pneg %p85
        %p357 = pneg %p109
        %p358 = pneg %p106
        %p359 = pneg %p130
        %p360 = pneg %p127
        %p361 = pneg %p151
        %p362 = pneg %p148
        %p363 = pneg %p172
        %p364 = pneg %p169
        %p365 = pneg %p193
        %p366 = pneg %p190
        %p367 = pneg %p214
        %p368 = pneg %p211
        %p369 = pneg %p235
        %p370 = pneg %p232
        %p371 = pneg %p256
        %p372 = pneg %p253
        %p373 = pneg %p282
        %p374 = pneg %p279
        %s375 = sand.u32 %s269, 1
        %s376 = scalar_lea.sflag [#allocation5], %s375
        %s377 = sand.u32 %s269, 1
        %s378 = scalar_lea.vmem [#allocation4], %s377
        %p379 = scmp.lt.s32.totalorder %s25, 1
        %s380 = scalar_select %p379, %s25, 1
        %s381 = smul.addr %s380, 40
        %s382 = smul.addr %s381, 4
        %s383 = scalar_lea.vmem %s0, %s382
        %385 = vst [vmem:[#allocation2] sm:$0xff] 0.0
        %386 = vst [vmem:[#allocation2 + $0x8] sm:$0xff] 0.0
        %387 = vst [vmem:[#allocation2 + $0x10] sm:$0xff] 0.0
        %388 = vst [vmem:[#allocation2 + $0x18] sm:$0xff] 0.0
        %389 = vst [vmem:[#allocation2 + $0x20] sm:$0xff] 0.0
        %390 = vst [vmem:[#allocation2 + $0x28] sm:$0xff] 0.0
        %vm391 = vcmask 523264
        %392 = vst.msk [vmem:[#allocation3] sm:$0xff] %vm391, 0.0
        %393 = vst.msk [vmem:[#allocation3 + $0x8] sm:$0xff] %vm391, 0.0
        %394 = vst.msk [vmem:[#allocation3 + $0x10] sm:$0xff] %vm391, 0.0
        %395 = vst.msk [vmem:[#allocation3 + $0x18] sm:$0xff] %vm391, 0.0
        %396 = vst.msk [vmem:[#allocation3 + $0x20] sm:$0xff] %vm391, 0.0
        %397 = vst.msk [vmem:[#allocation3 + $0x28] sm:$0xff] %vm391, 0.0
        %398 = vst.msk [vmem:[#allocation3 + $0x30] sm:$0xff] %vm391, 0.0
        %v399 = vld [vmem:[%s2] sm:$0x1]
        %v400 = vld [vmem:[%s383] sm:$0xff]
        %v401 = vld [vmem:[%s383 + $0x8] sm:$0xff]
        %v402 = vld [vmem:[%s383 + $0x10] sm:$0xff]
        %v403 = vld [vmem:[%s383 + $0x18] sm:$0xff]
        %v404 = vld [vmem:[%s383 + $0x20] sm:$0x33]
        %v405 = vld [vmem:[%s1] sm:$0xf]
        %v406 = vld [vmem:[%s1 + $0x4] sm:$0xf]
        %v407 = vld [vmem:[%s1 + $0x8] sm:$0xf]
        %v408 = vld [vmem:[%s1 + $0xc] sm:$0xf]
        %v409 = vld [vmem:[%s1 + $0x10] sm:$0xf]
        %v410 = vld [vmem:[%s1 + $0x14] sm:$0xf]
        %v411 = vld [vmem:[%s1 + $0x18] sm:$0xf]
        %v412 = vld [vmem:[%s1 + $0x1c] sm:$0xf]
        %v413 = vld [vmem:[%s1 + $0x20] sm:$0xf]
        %v414 = vld [vmem:[%s1 + $0x24] sm:$0xf]
        %v415 = vld [vmem:[%s1 + $0x28] sm:$0xf]
        %v416 = vld [vmem:[%s1 + $0x2c] sm:$0xf]
        %v417 = vld [vmem:[%s1 + $0x30] sm:$0xf]
        %v418 = vld [vmem:[%s1 + $0x34] sm:$0xf]
        %v419 = vld [vmem:[%s1 + $0x38] sm:$0xf]
        %v420 = vld [vmem:[%s1 + $0x3c] sm:$0xf]
        %v421 = vld [vmem:[%s1 + $0x40] sm:$0xf]
        %v422 = vld [vmem:[%s1 + $0x44] sm:$0xf]
        %v423 = vld [vmem:[%s1 + $0x48] sm:$0xf]
        %v424 = vld [vmem:[%s1 + $0x4c] sm:$0xf]
        %v425 = vld [vmem:[%s1 + $0x50] sm:$0xf]
        %v426 = vld [vmem:[%s1 + $0x54] sm:$0xf]
        %v427 = vld [vmem:[%s1 + $0x58] sm:$0xf]
        %v428 = vld [vmem:[%s1 + $0x5c] sm:$0xf]
        %v429 = vld [vmem:[%s1 + $0x60] sm:$0xf]
        %v430 = vld [vmem:[%s1 + $0x64] sm:$0xf]
        %v431 = vld [vmem:[%s1 + $0x68] sm:$0xf]
        %v432 = vld [vmem:[%s1 + $0x6c] sm:$0xf]
        %v433 = vld [vmem:[%s1 + $0x70] sm:$0xf]
        %v434 = vld [vmem:[%s1 + $0x74] sm:$0xf]
        %v435 = vld [vmem:[%s1 + $0x78] sm:$0xf]
        %v436 = vld [vmem:[%s1 + $0x7c] sm:$0xf]
        %v438 = vlaneseq
        %v439 = vshrl.u32 %v438, 7
        %v440 = vsub.s32 0, %v439
        %v441 = vrot.slane %v399, %v440
        %v448 = vunpack.c.l.b16 %v400
        %v449 = vunpack.c.h.b16 %v400
        %v450 = vunpack.c.l.b16 %v401
        %v451 = vunpack.c.h.b16 %v401
        %v452 = vunpack.c.l.b16 %v402
        %v453 = vunpack.c.h.b16 %v402
        %v454 = vunpack.c.l.b16 %v403
        %v455 = vunpack.c.h.b16 %v403
        %v456 = vunpack.c.l.b16 %v404
        %v457 = vunpack.c.h.b16 %v404
        %v458 = vpack.c.b16 %v450, %v448
        %v459 = vpack.c.b16 %v451, %v449
        %v460 = vpack.c.b16 %v454, %v452
        %v461 = vpack.c.b16 %v455, %v453
        %v462 = vpack.c.b16 %v456, %v456
        %v463 = vpack.c.b16 %v457, %v457
        %v502 = vunpack.c.l.b16 %v405
        %v503 = vunpack.c.l.b16 %v406
        %v504 = vunpack.c.l.b16 %v407
        %v505 = vunpack.c.l.b16 %v408
        %v506 = vunpack.c.l.b16 %v409
        %v507 = vunpack.c.l.b16 %v410
        %v508 = vunpack.c.l.b16 %v411
        %v509 = vunpack.c.l.b16 %v412
        %v510 = vunpack.c.l.b16 %v413
        %v511 = vunpack.c.l.b16 %v414
        %v512 = vunpack.c.l.b16 %v415
        %v513 = vunpack.c.l.b16 %v416
        %v514 = vunpack.c.l.b16 %v417
        %v515 = vunpack.c.l.b16 %v418
        %v516 = vunpack.c.l.b16 %v419
        %v517 = vunpack.c.l.b16 %v420
        %v518 = vunpack.c.l.b16 %v421
        %v519 = vunpack.c.l.b16 %v422
        %v520 = vunpack.c.l.b16 %v423
        %v521 = vunpack.c.l.b16 %v424
        %v522 = vunpack.c.l.b16 %v425
        %v523 = vunpack.c.l.b16 %v426
        %v524 = vunpack.c.l.b16 %v427
        %v525 = vunpack.c.l.b16 %v428
        %v526 = vunpack.c.l.b16 %v429
        %v527 = vunpack.c.l.b16 %v430
        %v528 = vunpack.c.l.b16 %v431
        %v529 = vunpack.c.l.b16 %v432
        %v530 = vunpack.c.l.b16 %v433
        %v531 = vunpack.c.l.b16 %v434
        %v532 = vunpack.c.l.b16 %v435
        %v533 = vunpack.c.l.b16 %v436
        %v534 = vpack.c.b16 %v503, %v502
        %v535 = vpack.c.b16 %v505, %v504
        %v536 = vpack.c.b16 %v507, %v506
        %v537 = vpack.c.b16 %v509, %v508
        %v538 = vpack.c.b16 %v511, %v510
        %v539 = vpack.c.b16 %v513, %v512
        %v540 = vpack.c.b16 %v515, %v514
        %v541 = vpack.c.b16 %v517, %v516
        %v542 = vpack.c.b16 %v519, %v518
        %v543 = vpack.c.b16 %v521, %v520
        %v544 = vpack.c.b16 %v523, %v522
        %v545 = vpack.c.b16 %v525, %v524
        %v546 = vpack.c.b16 %v527, %v526
        %v547 = vpack.c.b16 %v529, %v528
        %v548 = vpack.c.b16 %v531, %v530
        %v549 = vpack.c.b16 %v533, %v532
        %566 = vmatprep.subr.bf16.mxu0 0
        %567 = vmatpush1.bf16.msra.mxu0 %v541
        %568 = vmatprep.subr.bf16.mxu0 0
        %569 = vmatpush1.bf16.msra.mxu0 %v540
        %570 = vmatprep.subr.bf16.mxu0 0
        %571 = vmatpush1.bf16.msra.mxu0 %v539
        %572 = vmatprep.subr.bf16.mxu0 0
        %573 = vmatpush1.bf16.msra.mxu0 %v538
        %574 = vmatprep.subr.bf16.mxu0 0
        %575 = vmatpush1.bf16.msra.mxu0 %v537
        %576 = vmatprep.subr.bf16.mxu0 0
        %577 = vmatpush1.bf16.msra.mxu0 %v536
        %578 = vmatprep.subr.bf16.mxu0 0
        %579 = vmatpush1.bf16.msra.mxu0 %v535
        %580 = vmatprep.subr.bf16.mxu0 0
        %581 = vmatpush1.bf16.msra.mxu0 %v534
        %582 = vmatprep.subr.bf16.mxu0 0
        %583 = vmatpush2.bf16.msra.mxu0 %v549
        %584 = vmatprep.subr.bf16.mxu0 0
        %585 = vmatpush2.bf16.msra.mxu0 %v548
        %586 = vmatprep.subr.bf16.mxu0 0
        %587 = vmatpush2.bf16.msra.mxu0 %v547
        %588 = vmatprep.subr.bf16.mxu0 0
        %589 = vmatpush2.bf16.msra.mxu0 %v546
        %590 = vmatprep.subr.bf16.mxu0 0
        %591 = vmatpush2.bf16.msra.mxu0 %v545
        %592 = vmatprep.subr.bf16.mxu0 0
        %593 = vmatpush2.bf16.msra.mxu0 %v544
        %594 = vmatprep.subr.bf16.mxu0 0
        %595 = vmatpush2.bf16.msra.mxu0 %v543
        %596 = vmatprep.subr.bf16.mxu0 0
        %597 = vmatpush2.bf16.msra.mxu0 %v542
        %598 = vmatprep.mubr.bf16.mxu0 %v459
        %599 = vmatmul.mubr.bf16.gmra.mxu0 %v458
        %v600 = vpop.f32.mrf.mxu0
        %v601 = vadd.f32 %v441, %v600
        %v602 = vpop.f32.mrf.mxu0
        %v603 = vpop.f32.mrf.mxu0
        %v604 = vadd.f32 %v441, %v603
        %v605 = vpop.f32.mrf.mxu0
        %606 = vmatprep.mubr.bf16.mxu0 %v461
        %607 = vmatmul.mubr.bf16.gmra.mxu0 %v460
        %v608 = vpop.f32.mrf.mxu0
        %v609 = vadd.f32 %v441, %v608
        %v610 = vpop.f32.mrf.mxu0
        %v611 = vpop.f32.mrf.mxu0
        %v612 = vadd.f32 %v441, %v611
        %v613 = vpop.f32.mrf.mxu0
        %614 = vmatprep.mubr.bf16.mxu0 %v463
        %615 = vmatmul.mubr.bf16.gmra.mxu0 %v462
        %v616 = vpop.f32.mrf.mxu0
        %v617 = vadd.f32 %v441, %v616
        %v618 = vpop.f32.mrf.mxu0
        %v619 = vpop.f32.mrf.mxu0
        %v620 = vpop.f32.mrf.mxu0
        %621 = vdwg.mxu0
        %v622 = vmax.f32 %v601, 0.0
        %v623 = vmax.f32 %v604, 0.0
        %v624 = vmax.f32 %v609, 0.0
        %v625 = vmax.f32 %v612, 0.0
        %v626 = vmax.f32 %v617, 0.0
        %vm627 = vcmask 261120
        %628 = vst.msk [vmem:[#allocation2] sm:$0xff] %vm627, %v622
        %629 = vst.msk [vmem:[#allocation2 + $0x8] sm:$0xff] %vm627, %v623
        %630 = vst.msk [vmem:[#allocation2 + $0x10] sm:$0xff] %vm627, %v624
        %631 = vst.msk [vmem:[#allocation2 + $0x18] sm:$0xff] %vm627, %v625
        %vm632 = vcmask 257024
        %633 = vst.msk [vmem:[#allocation2 + $0x20] sm:$0xf] %vm632, %v626
        %s634 = scalar_lea.vmem %s383, 40
        %v635 = vld [vmem:[%s634] sm:$0xff]
        %v636 = vld [vmem:[%s634 + $0x8] sm:$0xff]
        %v637 = vld [vmem:[%s634 + $0x10] sm:$0xff]
        %v638 = vld [vmem:[%s634 + $0x18] sm:$0xff]
        %v639 = vld [vmem:[%s634 + $0x20] sm:$0x33]
        %v640 = vld [vmem:[%s1] sm:$0xf]
        %v641 = vld [vmem:[%s1 + $0x4] sm:$0xf]
        %v642 = vld [vmem:[%s1 + $0x8] sm:$0xf]
        %v643 = vld [vmem:[%s1 + $0xc] sm:$0xf]
        %v644 = vld [vmem:[%s1 + $0x10] sm:$0xf]
        %v645 = vld [vmem:[%s1 + $0x14] sm:$0xf]
        %v646 = vld [vmem:[%s1 + $0x18] sm:$0xf]
        %v647 = vld [vmem:[%s1 + $0x1c] sm:$0xf]
        %v648 = vld [vmem:[%s1 + $0x20] sm:$0xf]
        %v649 = vld [vmem:[%s1 + $0x24] sm:$0xf]
        %v650 = vld [vmem:[%s1 + $0x28] sm:$0xf]
        %v651 = vld [vmem:[%s1 + $0x2c] sm:$0xf]
        %v652 = vld [vmem:[%s1 + $0x30] sm:$0xf]
        %v653 = vld [vmem:[%s1 + $0x34] sm:$0xf]
        %v654 = vld [vmem:[%s1 + $0x38] sm:$0xf]
        %v655 = vld [vmem:[%s1 + $0x3c] sm:$0xf]
        %v656 = vld [vmem:[%s1 + $0x40] sm:$0xf]
        %v657 = vld [vmem:[%s1 + $0x44] sm:$0xf]
        %v658 = vld [vmem:[%s1 + $0x48] sm:$0xf]
        %v659 = vld [vmem:[%s1 + $0x4c] sm:$0xf]
        %v660 = vld [vmem:[%s1 + $0x50] sm:$0xf]
        %v661 = vld [vmem:[%s1 + $0x54] sm:$0xf]
        %v662 = vld [vmem:[%s1 + $0x58] sm:$0xf]
        %v663 = vld [vmem:[%s1 + $0x5c] sm:$0xf]
        %v664 = vld [vmem:[%s1 + $0x60] sm:$0xf]
        %v665 = vld [vmem:[%s1 + $0x64] sm:$0xf]
        %v666 = vld [vmem:[%s1 + $0x68] sm:$0xf]
        %v667 = vld [vmem:[%s1 + $0x6c] sm:$0xf]
        %v668 = vld [vmem:[%s1 + $0x70] sm:$0xf]
        %v669 = vld [vmem:[%s1 + $0x74] sm:$0xf]
        %v670 = vld [vmem:[%s1 + $0x78] sm:$0xf]
        %v671 = vld [vmem:[%s1 + $0x7c] sm:$0xf]
        %v677 = vunpack.c.l.b16 %v635
        %v678 = vunpack.c.h.b16 %v635
        %v679 = vunpack.c.l.b16 %v636
        %v680 = vunpack.c.h.b16 %v636
        %v681 = vunpack.c.l.b16 %v637
        %v682 = vunpack.c.h.b16 %v637
        %v683 = vunpack.c.l.b16 %v638
        %v684 = vunpack.c.h.b16 %v638
        %v685 = vunpack.c.l.b16 %v639
        %v686 = vunpack.c.h.b16 %v639
        %v687 = vpack.c.b16 %v679, %v677
        %v688 = vpack.c.b16 %v680, %v678
        %v689 = vpack.c.b16 %v683, %v681
        %v690 = vpack.c.b16 %v684, %v682
        %v691 = vpack.c.b16 %v685, %v685
        %v692 = vpack.c.b16 %v686, %v686
        %v731 = vunpack.c.l.b16 %v640
        %v732 = vunpack.c.l.b16 %v641
        %v733 = vunpack.c.l.b16 %v642
        %v734 = vunpack.c.l.b16 %v643
        %v735 = vunpack.c.l.b16 %v644
        %v736 = vunpack.c.l.b16 %v645
        %v737 = vunpack.c.l.b16 %v646
        %v738 = vunpack.c.l.b16 %v647
        %v739 = vunpack.c.l.b16 %v648
        %v740 = vunpack.c.l.b16 %v649
        %v741 = vunpack.c.l.b16 %v650
        %v742 = vunpack.c.l.b16 %v651
        %v743 = vunpack.c.l.b16 %v652
        %v744 = vunpack.c.l.b16 %v653
        %v745 = vunpack.c.l.b16 %v654
        %v746 = vunpack.c.l.b16 %v655
        %v747 = vunpack.c.l.b16 %v656
        %v748 = vunpack.c.l.b16 %v657
        %v749 = vunpack.c.l.b16 %v658
        %v750 = vunpack.c.l.b16 %v659
        %v751 = vunpack.c.l.b16 %v660
        %v752 = vunpack.c.l.b16 %v661
        %v753 = vunpack.c.l.b16 %v662
        %v754 = vunpack.c.l.b16 %v663
        %v755 = vunpack.c.l.b16 %v664
        %v756 = vunpack.c.l.b16 %v665
        %v757 = vunpack.c.l.b16 %v666
        %v758 = vunpack.c.l.b16 %v667
        %v759 = vunpack.c.l.b16 %v668
        %v760 = vunpack.c.l.b16 %v669
        %v761 = vunpack.c.l.b16 %v670
        %v762 = vunpack.c.l.b16 %v671
        %v763 = vpack.c.b16 %v732, %v731
        %v764 = vpack.c.b16 %v734, %v733
        %v765 = vpack.c.b16 %v736, %v735
        %v766 = vpack.c.b16 %v738, %v737
        %v767 = vpack.c.b16 %v740, %v739
        %v768 = vpack.c.b16 %v742, %v741
        %v769 = vpack.c.b16 %v744, %v743
        %v770 = vpack.c.b16 %v746, %v745
        %v771 = vpack.c.b16 %v748, %v747
        %v772 = vpack.c.b16 %v750, %v749
        %v773 = vpack.c.b16 %v752, %v751
        %v774 = vpack.c.b16 %v754, %v753
        %v775 = vpack.c.b16 %v756, %v755
        %v776 = vpack.c.b16 %v758, %v757
        %v777 = vpack.c.b16 %v760, %v759
        %v778 = vpack.c.b16 %v762, %v761
        %795 = vmatprep.subr.bf16.mxu0 0
        %796 = vmatpush1.bf16.msra.mxu0 %v770
        %797 = vmatprep.subr.bf16.mxu0 0
        %798 = vmatpush1.bf16.msra.mxu0 %v769
        %799 = vmatprep.subr.bf16.mxu0 0
        %800 = vmatpush1.bf16.msra.mxu0 %v768
        %801 = vmatprep.subr.bf16.mxu0 0
        %802 = vmatpush1.bf16.msra.mxu0 %v767
        %803 = vmatprep.subr.bf16.mxu0 0
        %804 = vmatpush1.bf16.msra.mxu0 %v766
        %805 = vmatprep.subr.bf16.mxu0 0
        %806 = vmatpush1.bf16.msra.mxu0 %v765
        %807 = vmatprep.subr.bf16.mxu0 0
        %808 = vmatpush1.bf16.msra.mxu0 %v764
        %809 = vmatprep.subr.bf16.mxu0 0
        %810 = vmatpush1.bf16.msra.mxu0 %v763
        %811 = vmatprep.subr.bf16.mxu0 0
        %812 = vmatpush2.bf16.msra.mxu0 %v778
        %813 = vmatprep.subr.bf16.mxu0 0
        %814 = vmatpush2.bf16.msra.mxu0 %v777
        %815 = vmatprep.subr.bf16.mxu0 0
        %816 = vmatpush2.bf16.msra.mxu0 %v776
        %817 = vmatprep.subr.bf16.mxu0 0
        %818 = vmatpush2.bf16.msra.mxu0 %v775
        %819 = vmatprep.subr.bf16.mxu0 0
        %820 = vmatpush2.bf16.msra.mxu0 %v774
        %821 = vmatprep.subr.bf16.mxu0 0
        %822 = vmatpush2.bf16.msra.mxu0 %v773
        %823 = vmatprep.subr.bf16.mxu0 0
        %824 = vmatpush2.bf16.msra.mxu0 %v772
        %825 = vmatprep.subr.bf16.mxu0 0
        %826 = vmatpush2.bf16.msra.mxu0 %v771
        %827 = vmatprep.mubr.bf16.mxu0 %v688
        %828 = vmatmul.mubr.bf16.gmra.mxu0 %v687
        %v829 = vpop.f32.mrf.mxu0
        %v830 = vadd.f32 %v441, %v829
        %v831 = vpop.f32.mrf.mxu0
        %v832 = vpop.f32.mrf.mxu0
        %v833 = vadd.f32 %v441, %v832
        %v834 = vpop.f32.mrf.mxu0
        %835 = vmatprep.mubr.bf16.mxu0 %v690
        %836 = vmatmul.mubr.bf16.gmra.mxu0 %v689
        %v837 = vpop.f32.mrf.mxu0
        %v838 = vadd.f32 %v441, %v837
        %v839 = vpop.f32.mrf.mxu0
        %v840 = vpop.f32.mrf.mxu0
        %v841 = vadd.f32 %v441, %v840
        %v842 = vpop.f32.mrf.mxu0
        %843 = vmatprep.mubr.bf16.mxu0 %v692
        %844 = vmatmul.mubr.bf16.gmra.mxu0 %v691
        %v845 = vpop.f32.mrf.mxu0
        %v846 = vadd.f32 %v441, %v845
        %v847 = vpop.f32.mrf.mxu0
        %v848 = vpop.f32.mrf.mxu0
        %v849 = vpop.f32.mrf.mxu0
        %850 = vdwg.mxu0
        %v851 = vmax.f32 %v830, 0.0
        %v852 = vmax.f32 %v833, 0.0
        %v853 = vmax.f32 %v838, 0.0
        %v854 = vmax.f32 %v841, 0.0
        %v855 = vmax.f32 %v846, 0.0
        %861 = vrot.lane.b32.xlu0 %v851, 32
        %v862 = vpop.permute.xlu0 %861
        %863 = vrot.lane.b32.xlu0 %v852, 32
        %v864 = vpop.permute.xlu0 %863
        %865 = vrot.lane.b32.xlu0 %v853, 32
        %v866 = vpop.permute.xlu0 %865
        %867 = vrot.lane.b32.xlu0 %v854, 32
        %v868 = vpop.permute.xlu0 %867
        %869 = vrot.lane.b32.xlu0 %v855, 32
        %v870 = vpop.permute.xlu0 %869
        %vm876 = vcmask 523520
        %877 = vst.msk [vmem:[#allocation2] sm:$0xff] %vm876, %v862
        %878 = vst.msk [vmem:[#allocation2 + $0x8] sm:$0xff] %vm876, %v864
        %879 = vst.msk [vmem:[#allocation2 + $0x10] sm:$0xff] %vm876, %v866
        %880 = vst.msk [vmem:[#allocation2 + $0x18] sm:$0xff] %vm876, %v868
        %vm881 = vcmask 519424
        %882 = vst.msk [vmem:[#allocation2 + $0x20] sm:$0xf] %vm881, %v870
        %s883 = scalar_lea.vmem %s383, 80
        %v884 = vld [vmem:[%s883] sm:$0xff]
        %v885 = vld [vmem:[%s883 + $0x8] sm:$0xff]
        %v886 = vld [vmem:[%s883 + $0x10] sm:$0xff]
        %v887 = vld [vmem:[%s883 + $0x18] sm:$0xff]
        %v888 = vld [vmem:[%s883 + $0x20] sm:$0x33]
        %v889 = vld [vmem:[%s1] sm:$0xf]
        %v890 = vld [vmem:[%s1 + $0x4] sm:$0xf]
        %v891 = vld [vmem:[%s1 + $0x8] sm:$0xf]
        %v892 = vld [vmem:[%s1 + $0xc] sm:$0xf]
        %v893 = vld [vmem:[%s1 + $0x10] sm:$0xf]
        %v894 = vld [vmem:[%s1 + $0x14] sm:$0xf]
        %v895 = vld [vmem:[%s1 + $0x18] sm:$0xf]
        %v896 = vld [vmem:[%s1 + $0x1c] sm:$0xf]
        %v897 = vld [vmem:[%s1 + $0x20] sm:$0xf]
        %v898 = vld [vmem:[%s1 + $0x24] sm:$0xf]
        %v899 = vld [vmem:[%s1 + $0x28] sm:$0xf]
        %v900 = vld [vmem:[%s1 + $0x2c] sm:$0xf]
        %v901 = vld [vmem:[%s1 + $0x30] sm:$0xf]
        %v902 = vld [vmem:[%s1 + $0x34] sm:$0xf]
        %v903 = vld [vmem:[%s1 + $0x38] sm:$0xf]
        %v904 = vld [vmem:[%s1 + $0x3c] sm:$0xf]
        %v905 = vld [vmem:[%s1 + $0x40] sm:$0xf]
        %v906 = vld [vmem:[%s1 + $0x44] sm:$0xf]
        %v907 = vld [vmem:[%s1 + $0x48] sm:$0xf]
        %v908 = vld [vmem:[%s1 + $0x4c] sm:$0xf]
        %v909 = vld [vmem:[%s1 + $0x50] sm:$0xf]
        %v910 = vld [vmem:[%s1 + $0x54] sm:$0xf]
        %v911 = vld [vmem:[%s1 + $0x58] sm:$0xf]
        %v912 = vld [vmem:[%s1 + $0x5c] sm:$0xf]
        %v913 = vld [vmem:[%s1 + $0x60] sm:$0xf]
        %v914 = vld [vmem:[%s1 + $0x64] sm:$0xf]
        %v915 = vld [vmem:[%s1 + $0x68] sm:$0xf]
        %v916 = vld [vmem:[%s1 + $0x6c] sm:$0xf]
        %v917 = vld [vmem:[%s1 + $0x70] sm:$0xf]
        %v918 = vld [vmem:[%s1 + $0x74] sm:$0xf]
        %v919 = vld [vmem:[%s1 + $0x78] sm:$0xf]
        %v920 = vld [vmem:[%s1 + $0x7c] sm:$0xf]
        %v926 = vunpack.c.l.b16 %v884
        %v927 = vunpack.c.h.b16 %v884
        %v928 = vunpack.c.l.b16 %v885
        %v929 = vunpack.c.h.b16 %v885
        %v930 = vunpack.c.l.b16 %v886
        %v931 = vunpack.c.h.b16 %v886
        %v932 = vunpack.c.l.b16 %v887
        %v933 = vunpack.c.h.b16 %v887
        %v934 = vunpack.c.l.b16 %v888
        %v935 = vunpack.c.h.b16 %v888
        %v936 = vpack.c.b16 %v928, %v926
        %v937 = vpack.c.b16 %v929, %v927
        %v938 = vpack.c.b16 %v932, %v930
        %v939 = vpack.c.b16 %v933, %v931
        %v940 = vpack.c.b16 %v934, %v934
        %v941 = vpack.c.b16 %v935, %v935
        %v980 = vunpack.c.l.b16 %v889
        %v981 = vunpack.c.l.b16 %v890
        %v982 = vunpack.c.l.b16 %v891
        %v983 = vunpack.c.l.b16 %v892
        %v984 = vunpack.c.l.b16 %v893
        %v985 = vunpack.c.l.b16 %v894
        %v986 = vunpack.c.l.b16 %v895
        %v987 = vunpack.c.l.b16 %v896
        %v988 = vunpack.c.l.b16 %v897
        %v989 = vunpack.c.l.b16 %v898
        %v990 = vunpack.c.l.b16 %v899
        %v991 = vunpack.c.l.b16 %v900
        %v992 = vunpack.c.l.b16 %v901
        %v993 = vunpack.c.l.b16 %v902
        %v994 = vunpack.c.l.b16 %v903
        %v995 = vunpack.c.l.b16 %v904
        %v996 = vunpack.c.l.b16 %v905
        %v997 = vunpack.c.l.b16 %v906
        %v998 = vunpack.c.l.b16 %v907
        %v999 = vunpack.c.l.b16 %v908
        %v1000 = vunpack.c.l.b16 %v909
        %v1001 = vunpack.c.l.b16 %v910
        %v1002 = vunpack.c.l.b16 %v911
        %v1003 = vunpack.c.l.b16 %v912
        %v1004 = vunpack.c.l.b16 %v913
        %v1005 = vunpack.c.l.b16 %v914
        %v1006 = vunpack.c.l.b16 %v915
        %v1007 = vunpack.c.l.b16 %v916
        %v1008 = vunpack.c.l.b16 %v917
        %v1009 = vunpack.c.l.b16 %v918
        %v1010 = vunpack.c.l.b16 %v919
        %v1011 = vunpack.c.l.b16 %v920
        %v1012 = vpack.c.b16 %v981, %v980
        %v1013 = vpack.c.b16 %v983, %v982
        %v1014 = vpack.c.b16 %v985, %v984
        %v1015 = vpack.c.b16 %v987, %v986
        %v1016 = vpack.c.b16 %v989, %v988
        %v1017 = vpack.c.b16 %v991, %v990
        %v1018 = vpack.c.b16 %v993, %v992
        %v1019 = vpack.c.b16 %v995, %v994
        %v1020 = vpack.c.b16 %v997, %v996
        %v1021 = vpack.c.b16 %v999, %v998
        %v1022 = vpack.c.b16 %v1001, %v1000
        %v1023 = vpack.c.b16 %v1003, %v1002
        %v1024 = vpack.c.b16 %v1005, %v1004
        %v1025 = vpack.c.b16 %v1007, %v1006
        %v1026 = vpack.c.b16 %v1009, %v1008
        %v1027 = vpack.c.b16 %v1011, %v1010
        %1044 = vmatprep.subr.bf16.mxu0 0
        %1045 = vmatpush1.bf16.msra.mxu0 %v1019
        %1046 = vmatprep.subr.bf16.mxu0 0
        %1047 = vmatpush1.bf16.msra.mxu0 %v1018
        %1048 = vmatprep.subr.bf16.mxu0 0
        %1049 = vmatpush1.bf16.msra.mxu0 %v1017
        %1050 = vmatprep.subr.bf16.mxu0 0
        %1051 = vmatpush1.bf16.msra.mxu0 %v1016
        %1052 = vmatprep.subr.bf16.mxu0 0
        %1053 = vmatpush1.bf16.msra.mxu0 %v1015
        %1054 = vmatprep.subr.bf16.mxu0 0
        %1055 = vmatpush1.bf16.msra.mxu0 %v1014
        %1056 = vmatprep.subr.bf16.mxu0 0
        %1057 = vmatpush1.bf16.msra.mxu0 %v1013
        %1058 = vmatprep.subr.bf16.mxu0 0
        %1059 = vmatpush1.bf16.msra.mxu0 %v1012
        %1060 = vmatprep.subr.bf16.mxu0 0
        %1061 = vmatpush2.bf16.msra.mxu0 %v1027
        %1062 = vmatprep.subr.bf16.mxu0 0
        %1063 = vmatpush2.bf16.msra.mxu0 %v1026
        %1064 = vmatprep.subr.bf16.mxu0 0
        %1065 = vmatpush2.bf16.msra.mxu0 %v1025
        %1066 = vmatprep.subr.bf16.mxu0 0
        %1067 = vmatpush2.bf16.msra.mxu0 %v1024
        %1068 = vmatprep.subr.bf16.mxu0 0
        %1069 = vmatpush2.bf16.msra.mxu0 %v1023
        %1070 = vmatprep.subr.bf16.mxu0 0
        %1071 = vmatpush2.bf16.msra.mxu0 %v1022
        %1072 = vmatprep.subr.bf16.mxu0 0
        %1073 = vmatpush2.bf16.msra.mxu0 %v1021
        %1074 = vmatprep.subr.bf16.mxu0 0
        %1075 = vmatpush2.bf16.msra.mxu0 %v1020
        %1076 = vmatprep.mubr.bf16.mxu0 %v937
        %1077 = vmatmul.mubr.bf16.gmra.mxu0 %v936
        %v1078 = vpop.f32.mrf.mxu0
        %v1079 = vadd.f32 %v441, %v1078
        %v1080 = vpop.f32.mrf.mxu0
        %v1081 = vpop.f32.mrf.mxu0
        %v1082 = vadd.f32 %v441, %v1081
        %v1083 = vpop.f32.mrf.mxu0
        %1084 = vmatprep.mubr.bf16.mxu0 %v939
        %1085 = vmatmul.mubr.bf16.gmra.mxu0 %v938
        %v1086 = vpop.f32.mrf.mxu0
        %v1087 = vadd.f32 %v441, %v1086
        %v1088 = vpop.f32.mrf.mxu0
        %v1089 = vpop.f32.mrf.mxu0
        %v1090 = vadd.f32 %v441, %v1089
        %v1091 = vpop.f32.mrf.mxu0
        %1092 = vmatprep.mubr.bf16.mxu0 %v941
        %1093 = vmatmul.mubr.bf16.gmra.mxu0 %v940
        %v1094 = vpop.f32.mrf.mxu0
        %v1095 = vadd.f32 %v441, %v1094
        %v1096 = vpop.f32.mrf.mxu0
        %v1097 = vpop.f32.mrf.mxu0
        %v1098 = vpop.f32.mrf.mxu0
        %1099 = vdwg.mxu0
        %v1100 = vmax.f32 %v1079, 0.0
        %v1101 = vmax.f32 %v1082, 0.0
        %v1102 = vmax.f32 %v1087, 0.0
        %v1103 = vmax.f32 %v1090, 0.0
        %v1104 = vmax.f32 %v1095, 0.0
        %1110 = vrot.lane.b32.xlu0 %v1100, 64
        %v1111 = vpop.permute.xlu0 %1110
        %1112 = vrot.lane.b32.xlu0 %v1101, 64
        %v1113 = vpop.permute.xlu0 %1112
        %1114 = vrot.lane.b32.xlu0 %v1102, 64
        %v1115 = vpop.permute.xlu0 %1114
        %1116 = vrot.lane.b32.xlu0 %v1103, 64
        %v1117 = vpop.permute.xlu0 %1116
        %1118 = vrot.lane.b32.xlu0 %v1104, 64
        %v1119 = vpop.permute.xlu0 %1118
        %vm1125 = vcmask 785920
        %1126 = vst.msk [vmem:[#allocation2] sm:$0xff] %vm1125, %v1111
        %1127 = vst.msk [vmem:[#allocation2 + $0x8] sm:$0xff] %vm1125, %v1113
        %1128 = vst.msk [vmem:[#allocation2 + $0x10] sm:$0xff] %vm1125, %v1115
        %1129 = vst.msk [vmem:[#allocation2 + $0x18] sm:$0xff] %vm1125, %v1117
        %vm1130 = vcmask 781824
        %1131 = vst.msk [vmem:[#allocation2 + $0x20] sm:$0xf] %vm1130, %v1119
        %s1132 = scalar_lea.vmem %s383, 120
        %v1133 = vld [vmem:[%s1132] sm:$0xff]
        %v1134 = vld [vmem:[%s1132 + $0x8] sm:$0xff]
        %v1135 = vld [vmem:[%s1132 + $0x10] sm:$0xff]
        %v1136 = vld [vmem:[%s1132 + $0x18] sm:$0xff]
        %v1137 = vld [vmem:[%s1132 + $0x20] sm:$0x33]
        %v1138 = vld [vmem:[%s1] sm:$0xf]
        %v1139 = vld [vmem:[%s1 + $0x4] sm:$0xf]
        %v1140 = vld [vmem:[%s1 + $0x8] sm:$0xf]
        %v1141 = vld [vmem:[%s1 + $0xc] sm:$0xf]
        %v1142 = vld [vmem:[%s1 + $0x10] sm:$0xf]
        %v1143 = vld [vmem:[%s1 + $0x14] sm:$0xf]
        %v1144 = vld [vmem:[%s1 + $0x18] sm:$0xf]
        %v1145 = vld [vmem:[%s1 + $0x1c] sm:$0xf]
        %v1146 = vld [vmem:[%s1 + $0x20] sm:$0xf]
        %v1147 = vld [vmem:[%s1 + $0x24] sm:$0xf]
        %v1148 = vld [vmem:[%s1 + $0x28] sm:$0xf]
        %v1149 = vld [vmem:[%s1 + $0x2c] sm:$0xf]
        %v1150 = vld [vmem:[%s1 + $0x30] sm:$0xf]
        %v1151 = vld [vmem:[%s1 + $0x34] sm:$0xf]
        %v1152 = vld [vmem:[%s1 + $0x38] sm:$0xf]
        %v1153 = vld [vmem:[%s1 + $0x3c] sm:$0xf]
        %v1154 = vld [vmem:[%s1 + $0x40] sm:$0xf]
        %v1155 = vld [vmem:[%s1 + $0x44] sm:$0xf]
        %v1156 = vld [vmem:[%s1 + $0x48] sm:$0xf]
        %v1157 = vld [vmem:[%s1 + $0x4c] sm:$0xf]
        %v1158 = vld [vmem:[%s1 + $0x50] sm:$0xf]
        %v1159 = vld [vmem:[%s1 + $0x54] sm:$0xf]
        %v1160 = vld [vmem:[%s1 + $0x58] sm:$0xf]
        %v1161 = vld [vmem:[%s1 + $0x5c] sm:$0xf]
        %v1162 = vld [vmem:[%s1 + $0x60] sm:$0xf]
        %v1163 = vld [vmem:[%s1 + $0x64] sm:$0xf]
        %v1164 = vld [vmem:[%s1 + $0x68] sm:$0xf]
        %v1165 = vld [vmem:[%s1 + $0x6c] sm:$0xf]
        %v1166 = vld [vmem:[%s1 + $0x70] sm:$0xf]
        %v1167 = vld [vmem:[%s1 + $0x74] sm:$0xf]
        %v1168 = vld [vmem:[%s1 + $0x78] sm:$0xf]
        %v1169 = vld [vmem:[%s1 + $0x7c] sm:$0xf]
        %v1175 = vunpack.c.l.b16 %v1133
        %v1176 = vunpack.c.h.b16 %v1133
        %v1177 = vunpack.c.l.b16 %v1134
        %v1178 = vunpack.c.h.b16 %v1134
        %v1179 = vunpack.c.l.b16 %v1135
        %v1180 = vunpack.c.h.b16 %v1135
        %v1181 = vunpack.c.l.b16 %v1136
        %v1182 = vunpack.c.h.b16 %v1136
        %v1183 = vunpack.c.l.b16 %v1137
        %v1184 = vunpack.c.h.b16 %v1137
        %v1185 = vpack.c.b16 %v1177, %v1175
        %v1186 = vpack.c.b16 %v1178, %v1176
        %v1187 = vpack.c.b16 %v1181, %v1179
        %v1188 = vpack.c.b16 %v1182, %v1180
        %v1189 = vpack.c.b16 %v1183, %v1183
        %v1190 = vpack.c.b16 %v1184, %v1184
        %v1229 = vunpack.c.l.b16 %v1138
        %v1230 = vunpack.c.l.b16 %v1139
        %v1231 = vunpack.c.l.b16 %v1140
        %v1232 = vunpack.c.l.b16 %v1141
        %v1233 = vunpack.c.l.b16 %v1142
        %v1234 = vunpack.c.l.b16 %v1143
        %v1235 = vunpack.c.l.b16 %v1144
        %v1236 = vunpack.c.l.b16 %v1145
        %v1237 = vunpack.c.l.b16 %v1146
        %v1238 = vunpack.c.l.b16 %v1147
        %v1239 = vunpack.c.l.b16 %v1148
        %v1240 = vunpack.c.l.b16 %v1149
        %v1241 = vunpack.c.l.b16 %v1150
        %v1242 = vunpack.c.l.b16 %v1151
        %v1243 = vunpack.c.l.b16 %v1152
        %v1244 = vunpack.c.l.b16 %v1153
        %v1245 = vunpack.c.l.b16 %v1154
        %v1246 = vunpack.c.l.b16 %v1155
        %v1247 = vunpack.c.l.b16 %v1156
        %v1248 = vunpack.c.l.b16 %v1157
        %v1249 = vunpack.c.l.b16 %v1158
        %v1250 = vunpack.c.l.b16 %v1159
        %v1251 = vunpack.c.l.b16 %v1160
        %v1252 = vunpack.c.l.b16 %v1161
        %v1253 = vunpack.c.l.b16 %v1162
        %v1254 = vunpack.c.l.b16 %v1163
        %v1255 = vunpack.c.l.b16 %v1164
        %v1256 = vunpack.c.l.b16 %v1165
        %v1257 = vunpack.c.l.b16 %v1166
        %v1258 = vunpack.c.l.b16 %v1167
        %v1259 = vunpack.c.l.b16 %v1168
        %v1260 = vunpack.c.l.b16 %v1169
        %v1261 = vpack.c.b16 %v1230, %v1229
        %v1262 = vpack.c.b16 %v1232, %v1231
        %v1263 = vpack.c.b16 %v1234, %v1233
        %v1264 = vpack.c.b16 %v1236, %v1235
        %v1265 = vpack.c.b16 %v1238, %v1237
        %v1266 = vpack.c.b16 %v1240, %v1239
        %v1267 = vpack.c.b16 %v1242, %v1241
        %v1268 = vpack.c.b16 %v1244, %v1243
        %v1269 = vpack.c.b16 %v1246, %v1245
        %v1270 = vpack.c.b16 %v1248, %v1247
        %v1271 = vpack.c.b16 %v1250, %v1249
        %v1272 = vpack.c.b16 %v1252, %v1251
        %v1273 = vpack.c.b16 %v1254, %v1253
        %v1274 = vpack.c.b16 %v1256, %v1255
        %v1275 = vpack.c.b16 %v1258, %v1257
        %v1276 = vpack.c.b16 %v1260, %v1259
        %1293 = vmatprep.subr.bf16.mxu0 0
        %1294 = vmatpush1.bf16.msra.mxu0 %v1268
        %1295 = vmatprep.subr.bf16.mxu0 0
        %1296 = vmatpush1.bf16.msra.mxu0 %v1267
        %1297 = vmatprep.subr.bf16.mxu0 0
        %1298 = vmatpush1.bf16.msra.mxu0 %v1266
        %1299 = vmatprep.subr.bf16.mxu0 0
        %1300 = vmatpush1.bf16.msra.mxu0 %v1265
        %1301 = vmatprep.subr.bf16.mxu0 0
        %1302 = vmatpush1.bf16.msra.mxu0 %v1264
        %1303 = vmatprep.subr.bf16.mxu0 0
        %1304 = vmatpush1.bf16.msra.mxu0 %v1263
        %1305 = vmatprep.subr.bf16.mxu0 0
        %1306 = vmatpush1.bf16.msra.mxu0 %v1262
        %1307 = vmatprep.subr.bf16.mxu0 0
        %1308 = vmatpush1.bf16.msra.mxu0 %v1261
        %1309 = vmatprep.subr.bf16.mxu0 0
        %1310 = vmatpush2.bf16.msra.mxu0 %v1276
        %1311 = vmatprep.subr.bf16.mxu0 0
        %1312 = vmatpush2.bf16.msra.mxu0 %v1275
        %1313 = vmatprep.subr.bf16.mxu0 0
        %1314 = vmatpush2.bf16.msra.mxu0 %v1274
        %1315 = vmatprep.subr.bf16.mxu0 0
        %1316 = vmatpush2.bf16.msra.mxu0 %v1273
        %1317 = vmatprep.subr.bf16.mxu0 0
        %1318 = vmatpush2.bf16.msra.mxu0 %v1272
        %1319 = vmatprep.subr.bf16.mxu0 0
        %1320 = vmatpush2.bf16.msra.mxu0 %v1271
        %1321 = vmatprep.subr.bf16.mxu0 0
        %1322 = vmatpush2.bf16.msra.mxu0 %v1270
        %1323 = vmatprep.subr.bf16.mxu0 0
        %1324 = vmatpush2.bf16.msra.mxu0 %v1269
        %1325 = vmatprep.mubr.bf16.mxu0 %v1186
        %1326 = vmatmul.mubr.bf16.gmra.mxu0 %v1185
        %v1327 = vpop.f32.mrf.mxu0
        %v1328 = vadd.f32 %v441, %v1327
        %v1329 = vpop.f32.mrf.mxu0
        %v1330 = vpop.f32.mrf.mxu0
        %v1331 = vadd.f32 %v441, %v1330
        %v1332 = vpop.f32.mrf.mxu0
        %1333 = vmatprep.mubr.bf16.mxu0 %v1188
        %1334 = vmatmul.mubr.bf16.gmra.mxu0 %v1187
        %v1335 = vpop.f32.mrf.mxu0
        %v1336 = vadd.f32 %v441, %v1335
        %v1337 = vpop.f32.mrf.mxu0
        %v1338 = vpop.f32.mrf.mxu0
        %v1339 = vadd.f32 %v441, %v1338
        %v1340 = vpop.f32.mrf.mxu0
        %1341 = vmatprep.mubr.bf16.mxu0 %v1190
        %1342 = vmatmul.mubr.bf16.gmra.mxu0 %v1189
        %v1343 = vpop.f32.mrf.mxu0
        %v1344 = vadd.f32 %v441, %v1343
        %v1345 = vpop.f32.mrf.mxu0
        %v1346 = vpop.f32.mrf.mxu0
        %v1347 = vpop.f32.mrf.mxu0
        %1348 = vdwg.mxu0
        %v1349 = vmax.f32 %v1328, 0.0
        %v1350 = vmax.f32 %v1331, 0.0
        %v1351 = vmax.f32 %v1336, 0.0
        %v1352 = vmax.f32 %v1339, 0.0
        %v1353 = vmax.f32 %v1344, 0.0
        %1359 = vrot.lane.b32.xlu0 %v1349, 96
        %v1360 = vpop.permute.xlu0 %1359
        %1361 = vrot.lane.b32.xlu0 %v1350, 96
        %v1362 = vpop.permute.xlu0 %1361
        %1363 = vrot.lane.b32.xlu0 %v1351, 96
        %v1364 = vpop.permute.xlu0 %1363
        %1365 = vrot.lane.b32.xlu0 %v1352, 96
        %v1366 = vpop.permute.xlu0 %1365
        %1367 = vrot.lane.b32.xlu0 %v1353, 96
        %v1368 = vpop.permute.xlu0 %1367
        %vm1374 = vcmask 1048320
        %1375 = vst.msk [vmem:[#allocation2] sm:$0xff] %vm1374, %v1360
        %1376 = vst.msk [vmem:[#allocation2 + $0x8] sm:$0xff] %vm1374, %v1362
        %1377 = vst.msk [vmem:[#allocation2 + $0x10] sm:$0xff] %vm1374, %v1364
        %1378 = vst.msk [vmem:[#allocation2 + $0x18] sm:$0xff] %vm1374, %v1366
        %vm1379 = vcmask 1044224
        %1380 = vst.msk [vmem:[#allocation2 + $0x20] sm:$0xf] %vm1379, %v1368
        %v1381 = vld [vmem:[#allocation2] sm:$0xff]
        %v1382 = vld [vmem:[#allocation2 + $0x8] sm:$0xff]
        %v1383 = vld [vmem:[#allocation2 + $0x10] sm:$0xff]
        %v1384 = vld [vmem:[#allocation2 + $0x18] sm:$0xff]
        %v1385 = vld [vmem:[#allocation2 + $0x20] sm:$0xf]
        %v1386 = vpack.c.bf16 %v1382, %v1381
        %v1387 = vpack.c.bf16 %v1384, %v1383
        %v1388 = vpack.c.bf16 %v1385, %v1385
        %v1389 = vld [vmem:[%s3] sm:$0xf]
        %v1390 = vld [vmem:[%s3 + $0x4] sm:$0xf]
        %v1391 = vld [vmem:[%s3 + $0x8] sm:$0xf]
        %v1392 = vld [vmem:[%s3 + $0xc] sm:$0xf]
        %v1393 = vld [vmem:[%s3 + $0x10] sm:$0xf]
        %v1394 = vld [vmem:[%s3 + $0x14] sm:$0xf]
        %v1395 = vld [vmem:[%s3 + $0x18] sm:$0xf]
        %v1396 = vld [vmem:[%s3 + $0x1c] sm:$0xf]
        %v1397 = vld [vmem:[%s3 + $0x20] sm:$0xf]
        %v1398 = vld [vmem:[%s3 + $0x24] sm:$0xf]
        %v1399 = vld [vmem:[%s3 + $0x28] sm:$0xf]
        %v1400 = vld [vmem:[%s3 + $0x2c] sm:$0xf]
        %v1401 = vld [vmem:[%s3 + $0x30] sm:$0xf]
        %v1402 = vld [vmem:[%s3 + $0x34] sm:$0xf]
        %v1403 = vld [vmem:[%s3 + $0x38] sm:$0xf]
        %v1404 = vld [vmem:[%s3 + $0x3c] sm:$0xf]
        %v1405 = vld [vmem:[#allocation2 + $0x1] sm:$0xff]
        %v1406 = vld [vmem:[#allocation2 + $0x9] sm:$0xff]
        %v1407 = vld [vmem:[#allocation2 + $0x11] sm:$0xff]
        %v1408 = vld [vmem:[#allocation2 + $0x19] sm:$0xff]
        %v1409 = vld [vmem:[#allocation2 + $0x21] sm:$0xf]
        %v1410 = vpack.c.bf16 %v1406, %v1405
        %v1411 = vpack.c.bf16 %v1408, %v1407
        %v1412 = vpack.c.bf16 %v1409, %v1409
        %s1413 = scalar_lea.vmem %s3, 64
        %v1414 = vld [vmem:[%s1413] sm:$0xf]
        %v1415 = vld [vmem:[%s1413 + $0x4] sm:$0xf]
        %v1416 = vld [vmem:[%s1413 + $0x8] sm:$0xf]
        %v1417 = vld [vmem:[%s1413 + $0xc] sm:$0xf]
        %v1418 = vld [vmem:[%s1413 + $0x10] sm:$0xf]
        %v1419 = vld [vmem:[%s1413 + $0x14] sm:$0xf]
        %v1420 = vld [vmem:[%s1413 + $0x18] sm:$0xf]
        %v1421 = vld [vmem:[%s1413 + $0x1c] sm:$0xf]
        %v1422 = vld [vmem:[%s1413 + $0x20] sm:$0xf]
        %v1423 = vld [vmem:[%s1413 + $0x24] sm:$0xf]
        %v1424 = vld [vmem:[%s1413 + $0x28] sm:$0xf]
        %v1425 = vld [vmem:[%s1413 + $0x2c] sm:$0xf]
        %v1426 = vld [vmem:[%s1413 + $0x30] sm:$0xf]
        %v1427 = vld [vmem:[%s1413 + $0x34] sm:$0xf]
        %v1428 = vld [vmem:[%s1413 + $0x38] sm:$0xf]
        %v1429 = vld [vmem:[%s1413 + $0x3c] sm:$0xf]
        %v1446 = vunpack.c.l.b16 %v1414
        %v1447 = vunpack.c.l.b16 %v1415
        %v1448 = vunpack.c.l.b16 %v1416
        %v1449 = vunpack.c.l.b16 %v1417
        %v1450 = vunpack.c.l.b16 %v1418
        %v1451 = vunpack.c.l.b16 %v1419
        %v1452 = vunpack.c.l.b16 %v1420
        %v1453 = vunpack.c.l.b16 %v1421
        %v1454 = vunpack.c.l.b16 %v1422
        %v1455 = vunpack.c.l.b16 %v1423
        %v1456 = vunpack.c.l.b16 %v1424
        %v1457 = vunpack.c.l.b16 %v1425
        %v1458 = vunpack.c.l.b16 %v1426
        %v1459 = vunpack.c.l.b16 %v1427
        %v1460 = vunpack.c.l.b16 %v1428
        %v1461 = vunpack.c.l.b16 %v1429
        %v1462 = vpack.c.b16 %v1447, %v1446
        %v1463 = vpack.c.b16 %v1449, %v1448
        %v1464 = vpack.c.b16 %v1451, %v1450
        %v1465 = vpack.c.b16 %v1453, %v1452
        %v1466 = vpack.c.b16 %v1455, %v1454
        %v1467 = vpack.c.b16 %v1457, %v1456
        %v1468 = vpack.c.b16 %v1459, %v1458
        %v1469 = vpack.c.b16 %v1461, %v1460
        %1478 = vmatprep.subr.bf16.mxu0 0
        %1479 = vmatpush1.bf16.msra.mxu0 %v1469
        %1480 = vmatprep.subr.bf16.mxu0 0
        %1481 = vmatpush1.bf16.msra.mxu0 %v1468
        %1482 = vmatprep.subr.bf16.mxu0 0
        %1483 = vmatpush1.bf16.msra.mxu0 %v1467
        %1484 = vmatprep.subr.bf16.mxu0 0
        %1485 = vmatpush1.bf16.msra.mxu0 %v1466
        %1486 = vmatprep.subr.bf16.mxu0 0
        %1487 = vmatpush1.bf16.msra.mxu0 %v1465
        %1488 = vmatprep.subr.bf16.mxu0 0
        %1489 = vmatpush1.bf16.msra.mxu0 %v1464
        %1490 = vmatprep.subr.bf16.mxu0 0
        %1491 = vmatpush1.bf16.msra.mxu0 %v1463
        %1492 = vmatprep.subr.bf16.mxu0 0
        %1493 = vmatpush1.bf16.msra.mxu0 %v1462
        %1494 = vmatprep.subr.bf16.mxu0 0
        %1495 = vmatpush2.bf16.msra.mxu0 0
        %1496 = vmatprep.subr.bf16.mxu0 0
        %1497 = vmatpush2.bf16.msra.mxu0 0
        %1498 = vmatprep.subr.bf16.mxu0 0
        %1499 = vmatpush2.bf16.msra.mxu0 0
        %1500 = vmatprep.subr.bf16.mxu0 0
        %1501 = vmatpush2.bf16.msra.mxu0 0
        %1502 = vmatprep.subr.bf16.mxu0 0
        %1503 = vmatpush2.bf16.msra.mxu0 0
        %1504 = vmatprep.subr.bf16.mxu0 0
        %1505 = vmatpush2.bf16.msra.mxu0 0
        %1506 = vmatprep.subr.bf16.mxu0 0
        %1507 = vmatpush2.bf16.msra.mxu0 0
        %1508 = vmatprep.subr.bf16.mxu0 0
        %1509 = vmatpush2.bf16.msra.mxu0 0
        %1510 = vmatprep.mubr.bf16.mxu0 0
        %1511 = vmatmul.mubr.bf16.gmra.mxu0 %v1410
        %v1512 = vpop.f32.mrf.mxu0
        %v1513 = vadd.f32 0.0, %v1512
        %v1514 = vpop.f32.mrf.mxu0
        %v1515 = vpop.f32.mrf.mxu0
        %v1516 = vadd.f32 0.0, %v1515
        %v1517 = vpop.f32.mrf.mxu0
        %1518 = vmatprep.mubr.bf16.mxu0 0
        %1519 = vmatmul.mubr.bf16.gmra.mxu0 %v1411
        %v1520 = vpop.f32.mrf.mxu0
        %v1521 = vadd.f32 0.0, %v1520
        %v1522 = vpop.f32.mrf.mxu0
        %v1523 = vpop.f32.mrf.mxu0
        %v1524 = vadd.f32 0.0, %v1523
        %v1525 = vpop.f32.mrf.mxu0
        %1526 = vmatprep.mubr.bf16.mxu0 0
        %1527 = vmatmul.mubr.bf16.gmra.mxu0 %v1412
        %v1528 = vpop.f32.mrf.mxu0
        %v1529 = vadd.f32 0.0, %v1528
        %v1530 = vpop.f32.mrf.mxu0
        %v1531 = vpop.f32.mrf.mxu0
        %v1532 = vpop.f32.mrf.mxu0
        %1533 = vdwg.mxu0
        %v1550 = vunpack.c.l.b16 %v1389
        %v1551 = vunpack.c.l.b16 %v1390
        %v1552 = vunpack.c.l.b16 %v1391
        %v1553 = vunpack.c.l.b16 %v1392
        %v1554 = vunpack.c.l.b16 %v1393
        %v1555 = vunpack.c.l.b16 %v1394
        %v1556 = vunpack.c.l.b16 %v1395
        %v1557 = vunpack.c.l.b16 %v1396
        %v1558 = vunpack.c.l.b16 %v1397
        %v1559 = vunpack.c.l.b16 %v1398
        %v1560 = vunpack.c.l.b16 %v1399
        %v1561 = vunpack.c.l.b16 %v1400
        %v1562 = vunpack.c.l.b16 %v1401
        %v1563 = vunpack.c.l.b16 %v1402
        %v1564 = vunpack.c.l.b16 %v1403
        %v1565 = vunpack.c.l.b16 %v1404
        %v1566 = vpack.c.b16 %v1551, %v1550
        %v1567 = vpack.c.b16 %v1553, %v1552
        %v1568 = vpack.c.b16 %v1555, %v1554
        %v1569 = vpack.c.b16 %v1557, %v1556
        %v1570 = vpack.c.b16 %v1559, %v1558
        %v1571 = vpack.c.b16 %v1561, %v1560
        %v1572 = vpack.c.b16 %v1563, %v1562
        %v1573 = vpack.c.b16 %v1565, %v1564
        %1582 = vmatprep.subr.bf16.mxu0 0
        %1583 = vmatpush1.bf16.msra.mxu0 %v1573
        %1584 = vmatprep.subr.bf16.mxu0 0
        %1585 = vmatpush1.bf16.msra.mxu0 %v1572
        %1586 = vmatprep.subr.bf16.mxu0 0
        %1587 = vmatpush1.bf16.msra.mxu0 %v1571
        %1588 = vmatprep.subr.bf16.mxu0 0
        %1589 = vmatpush1.bf16.msra.mxu0 %v1570
        %1590 = vmatprep.subr.bf16.mxu0 0
        %1591 = vmatpush1.bf16.msra.mxu0 %v1569
        %1592 = vmatprep.subr.bf16.mxu0 0
        %1593 = vmatpush1.bf16.msra.mxu0 %v1568
        %1594 = vmatprep.subr.bf16.mxu0 0
        %1595 = vmatpush1.bf16.msra.mxu0 %v1567
        %1596 = vmatprep.subr.bf16.mxu0 0
        %1597 = vmatpush1.bf16.msra.mxu0 %v1566
        %1598 = vmatprep.subr.bf16.mxu0 0
        %1599 = vmatpush2.bf16.msra.mxu0 0
        %1600 = vmatprep.subr.bf16.mxu0 0
        %1601 = vmatpush2.bf16.msra.mxu0 0
        %1602 = vmatprep.subr.bf16.mxu0 0
        %1603 = vmatpush2.bf16.msra.mxu0 0
        %1604 = vmatprep.subr.bf16.mxu0 0
        %1605 = vmatpush2.bf16.msra.mxu0 0
        %1606 = vmatprep.subr.bf16.mxu0 0
        %1607 = vmatpush2.bf16.msra.mxu0 0
        %1608 = vmatprep.subr.bf16.mxu0 0
        %1609 = vmatpush2.bf16.msra.mxu0 0
        %1610 = vmatprep.subr.bf16.mxu0 0
        %1611 = vmatpush2.bf16.msra.mxu0 0
        %1612 = vmatprep.subr.bf16.mxu0 0
        %1613 = vmatpush2.bf16.msra.mxu0 0
        %1614 = vmatprep.mubr.bf16.mxu0 0
        %1615 = vmatmul.mubr.bf16.gmra.mxu0 %v1386
        %v1616 = vpop.f32.mrf.mxu0
        %v1617 = vadd.f32 %v1513, %v1616
        %v1618 = vpop.f32.mrf.mxu0
        %v1619 = vpop.f32.mrf.mxu0
        %v1620 = vadd.f32 %v1516, %v1619
        %v1621 = vpop.f32.mrf.mxu0
        %1622 = vmatprep.mubr.bf16.mxu0 0
        %1623 = vmatmul.mubr.bf16.gmra.mxu0 %v1387
        %v1624 = vpop.f32.mrf.mxu0
        %v1625 = vadd.f32 %v1521, %v1624
        %v1626 = vpop.f32.mrf.mxu0
        %v1627 = vpop.f32.mrf.mxu0
        %v1628 = vadd.f32 %v1524, %v1627
        %v1629 = vpop.f32.mrf.mxu0
        %1630 = vmatprep.mubr.bf16.mxu0 0
        %1631 = vmatmul.mubr.bf16.gmra.mxu0 %v1388
        %v1632 = vpop.f32.mrf.mxu0
        %v1633 = vadd.f32 %v1529, %v1632
        %v1634 = vpop.f32.mrf.mxu0
        %v1635 = vpop.f32.mrf.mxu0
        %v1636 = vpop.f32.mrf.mxu0
        %1637 = vdwg.mxu0
        %v1638 = vld [vmem:[#allocation2 + $0x6] sm:$0xff]
        %v1639 = vld [vmem:[#allocation2 + $0xe] sm:$0xff]
        %v1640 = vld [vmem:[#allocation2 + $0x16] sm:$0xff]
        %v1641 = vld [vmem:[#allocation2 + $0x1e] sm:$0xff]
        %v1642 = vld [vmem:[#allocation2 + $0x26] sm:$0xf]
        %v1643 = vpack.c.bf16 %v1639, %v1638
        %v1644 = vpack.c.bf16 %v1641, %v1640
        %v1645 = vpack.c.bf16 %v1642, %v1642
        %s1646 = scalar_lea.vmem %s3, 128
        %v1647 = vld [vmem:[%s1646] sm:$0xf]
        %v1648 = vld [vmem:[%s1646 + $0x4] sm:$0xf]
        %v1649 = vld [vmem:[%s1646 + $0x8] sm:$0xf]
        %v1650 = vld [vmem:[%s1646 + $0xc] sm:$0xf]
        %v1651 = vld [vmem:[%s1646 + $0x10] sm:$0xf]
        %v1652 = vld [vmem:[%s1646 + $0x14] sm:$0xf]
        %v1653 = vld [vmem:[%s1646 + $0x18] sm:$0xf]
        %v1654 = vld [vmem:[%s1646 + $0x1c] sm:$0xf]
        %v1655 = vld [vmem:[%s1646 + $0x20] sm:$0xf]
        %v1656 = vld [vmem:[%s1646 + $0x24] sm:$0xf]
        %v1657 = vld [vmem:[%s1646 + $0x28] sm:$0xf]
        %v1658 = vld [vmem:[%s1646 + $0x2c] sm:$0xf]
        %v1659 = vld [vmem:[%s1646 + $0x30] sm:$0xf]
        %v1660 = vld [vmem:[%s1646 + $0x34] sm:$0xf]
        %v1661 = vld [vmem:[%s1646 + $0x38] sm:$0xf]
        %v1662 = vld [vmem:[%s1646 + $0x3c] sm:$0xf]
        %v1679 = vunpack.c.l.b16 %v1647
        %v1680 = vunpack.c.l.b16 %v1648
        %v1681 = vunpack.c.l.b16 %v1649
        %v1682 = vunpack.c.l.b16 %v1650
        %v1683 = vunpack.c.l.b16 %v1651
        %v1684 = vunpack.c.l.b16 %v1652
        %v1685 = vunpack.c.l.b16 %v1653
        %v1686 = vunpack.c.l.b16 %v1654
        %v1687 = vunpack.c.l.b16 %v1655
        %v1688 = vunpack.c.l.b16 %v1656
        %v1689 = vunpack.c.l.b16 %v1657
        %v1690 = vunpack.c.l.b16 %v1658
        %v1691 = vunpack.c.l.b16 %v1659
        %v1692 = vunpack.c.l.b16 %v1660
        %v1693 = vunpack.c.l.b16 %v1661
        %v1694 = vunpack.c.l.b16 %v1662
        %v1695 = vpack.c.b16 %v1680, %v1679
        %v1696 = vpack.c.b16 %v1682, %v1681
        %v1697 = vpack.c.b16 %v1684, %v1683
        %v1698 = vpack.c.b16 %v1686, %v1685
        %v1699 = vpack.c.b16 %v1688, %v1687
        %v1700 = vpack.c.b16 %v1690, %v1689
        %v1701 = vpack.c.b16 %v1692, %v1691
        %v1702 = vpack.c.b16 %v1694, %v1693
        %1711 = vmatprep.subr.bf16.mxu0 0
        %1712 = vmatpush1.bf16.msra.mxu0 %v1702
        %1713 = vmatprep.subr.bf16.mxu0 0
        %1714 = vmatpush1.bf16.msra.mxu0 %v1701
        %1715 = vmatprep.subr.bf16.mxu0 0
        %1716 = vmatpush1.bf16.msra.mxu0 %v1700
        %1717 = vmatprep.subr.bf16.mxu0 0
        %1718 = vmatpush1.bf16.msra.mxu0 %v1699
        %1719 = vmatprep.subr.bf16.mxu0 0
        %1720 = vmatpush1.bf16.msra.mxu0 %v1698
        %1721 = vmatprep.subr.bf16.mxu0 0
        %1722 = vmatpush1.bf16.msra.mxu0 %v1697
        %1723 = vmatprep.subr.bf16.mxu0 0
        %1724 = vmatpush1.bf16.msra.mxu0 %v1696
        %1725 = vmatprep.subr.bf16.mxu0 0
        %1726 = vmatpush1.bf16.msra.mxu0 %v1695
        %1727 = vmatprep.subr.bf16.mxu0 0
        %1728 = vmatpush2.bf16.msra.mxu0 0
        %1729 = vmatprep.subr.bf16.mxu0 0
        %1730 = vmatpush2.bf16.msra.mxu0 0
        %1731 = vmatprep.subr.bf16.mxu0 0
        %1732 = vmatpush2.bf16.msra.mxu0 0
        %1733 = vmatprep.subr.bf16.mxu0 0
        %1734 = vmatpush2.bf16.msra.mxu0 0
        %1735 = vmatprep.subr.bf16.mxu0 0
        %1736 = vmatpush2.bf16.msra.mxu0 0
        %1737 = vmatprep.subr.bf16.mxu0 0
        %1738 = vmatpush2.bf16.msra.mxu0 0
        %1739 = vmatprep.subr.bf16.mxu0 0
        %1740 = vmatpush2.bf16.msra.mxu0 0
        %1741 = vmatprep.subr.bf16.mxu0 0
        %1742 = vmatpush2.bf16.msra.mxu0 0
        %1743 = vmatprep.mubr.bf16.mxu0 0
        %1744 = vmatmul.mubr.bf16.gmra.mxu0 %v1643
        %v1745 = vpop.f32.mrf.mxu0
        %v1746 = vadd.f32 0.0, %v1745
        %v1747 = vpop.f32.mrf.mxu0
        %v1748 = vpop.f32.mrf.mxu0
        %v1749 = vadd.f32 0.0, %v1748
        %v1750 = vpop.f32.mrf.mxu0
        %1751 = vmatprep.mubr.bf16.mxu0 0
        %1752 = vmatmul.mubr.bf16.gmra.mxu0 %v1644
        %v1753 = vpop.f32.mrf.mxu0
        %v1754 = vadd.f32 0.0, %v1753
        %v1755 = vpop.f32.mrf.mxu0
        %v1756 = vpop.f32.mrf.mxu0
        %v1757 = vadd.f32 0.0, %v1756
        %v1758 = vpop.f32.mrf.mxu0
        %1759 = vmatprep.mubr.bf16.mxu0 0
        %1760 = vmatmul.mubr.bf16.gmra.mxu0 %v1645
        %v1761 = vpop.f32.mrf.mxu0
        %v1762 = vadd.f32 0.0, %v1761
        %v1763 = vpop.f32.mrf.mxu0
        %v1764 = vpop.f32.mrf.mxu0
        %v1765 = vpop.f32.mrf.mxu0
        %1766 = vdwg.mxu0
        %v1767 = vadd.f32 %v1617, %v1746
        %v1768 = vadd.f32 %v1620, %v1749
        %v1769 = vadd.f32 %v1625, %v1754
        %v1770 = vadd.f32 %v1628, %v1757
        %v1771 = vadd.f32 %v1633, %v1762
        %v1772 = vld [vmem:[#allocation2 + $0x7] sm:$0xff]
        %v1773 = vld [vmem:[#allocation2 + $0xf] sm:$0xff]
        %v1774 = vld [vmem:[#allocation2 + $0x17] sm:$0xff]
        %v1775 = vld [vmem:[#allocation2 + $0x1f] sm:$0xff]
        %v1776 = vld [vmem:[#allocation2 + $0x27] sm:$0xf]
        %v1777 = vpack.c.bf16 %v1773, %v1772
        %v1778 = vpack.c.bf16 %v1775, %v1774
        %v1779 = vpack.c.bf16 %v1776, %v1776
        %s1780 = scalar_lea.vmem %s3, 192
        %v1781 = vld [vmem:[%s1780] sm:$0xf]
        %v1782 = vld [vmem:[%s1780 + $0x4] sm:$0xf]
        %v1783 = vld [vmem:[%s1780 + $0x8] sm:$0xf]
        %v1784 = vld [vmem:[%s1780 + $0xc] sm:$0xf]
        %v1785 = vld [vmem:[%s1780 + $0x10] sm:$0xf]
        %v1786 = vld [vmem:[%s1780 + $0x14] sm:$0xf]
        %v1787 = vld [vmem:[%s1780 + $0x18] sm:$0xf]
        %v1788 = vld [vmem:[%s1780 + $0x1c] sm:$0xf]
        %v1789 = vld [vmem:[%s1780 + $0x20] sm:$0xf]
        %v1790 = vld [vmem:[%s1780 + $0x24] sm:$0xf]
        %v1791 = vld [vmem:[%s1780 + $0x28] sm:$0xf]
        %v1792 = vld [vmem:[%s1780 + $0x2c] sm:$0xf]
        %v1793 = vld [vmem:[%s1780 + $0x30] sm:$0xf]
        %v1794 = vld [vmem:[%s1780 + $0x34] sm:$0xf]
        %v1795 = vld [vmem:[%s1780 + $0x38] sm:$0xf]
        %v1796 = vld [vmem:[%s1780 + $0x3c] sm:$0xf]
        %v1813 = vunpack.c.l.b16 %v1781
        %v1814 = vunpack.c.l.b16 %v1782
        %v1815 = vunpack.c.l.b16 %v1783
        %v1816 = vunpack.c.l.b16 %v1784
        %v1817 = vunpack.c.l.b16 %v1785
        %v1818 = vunpack.c.l.b16 %v1786
        %v1819 = vunpack.c.l.b16 %v1787
        %v1820 = vunpack.c.l.b16 %v1788
        %v1821 = vunpack.c.l.b16 %v1789
        %v1822 = vunpack.c.l.b16 %v1790
        %v1823 = vunpack.c.l.b16 %v1791
        %v1824 = vunpack.c.l.b16 %v1792
        %v1825 = vunpack.c.l.b16 %v1793
        %v1826 = vunpack.c.l.b16 %v1794
        %v1827 = vunpack.c.l.b16 %v1795
        %v1828 = vunpack.c.l.b16 %v1796
        %v1829 = vpack.c.b16 %v1814, %v1813
        %v1830 = vpack.c.b16 %v1816, %v1815
        %v1831 = vpack.c.b16 %v1818, %v1817
        %v1832 = vpack.c.b16 %v1820, %v1819
        %v1833 = vpack.c.b16 %v1822, %v1821
        %v1834 = vpack.c.b16 %v1824, %v1823
        %v1835 = vpack.c.b16 %v1826, %v1825
        %v1836 = vpack.c.b16 %v1828, %v1827
        %1845 = vmatprep.subr.bf16.mxu0 0
        %1846 = vmatpush1.bf16.msra.mxu0 %v1836
        %1847 = vmatprep.subr.bf16.mxu0 0
        %1848 = vmatpush1.bf16.msra.mxu0 %v1835
        %1849 = vmatprep.subr.bf16.mxu0 0
        %1850 = vmatpush1.bf16.msra.mxu0 %v1834
        %1851 = vmatprep.subr.bf16.mxu0 0
        %1852 = vmatpush1.bf16.msra.mxu0 %v1833
        %1853 = vmatprep.subr.bf16.mxu0 0
        %1854 = vmatpush1.bf16.msra.mxu0 %v1832
        %1855 = vmatprep.subr.bf16.mxu0 0
        %1856 = vmatpush1.bf16.msra.mxu0 %v1831
        %1857 = vmatprep.subr.bf16.mxu0 0
        %1858 = vmatpush1.bf16.msra.mxu0 %v1830
        %1859 = vmatprep.subr.bf16.mxu0 0
        %1860 = vmatpush1.bf16.msra.mxu0 %v1829
        %1861 = vmatprep.subr.bf16.mxu0 0
        %1862 = vmatpush2.bf16.msra.mxu0 0
        %1863 = vmatprep.subr.bf16.mxu0 0
        %1864 = vmatpush2.bf16.msra.mxu0 0
        %1865 = vmatprep.subr.bf16.mxu0 0
        %1866 = vmatpush2.bf16.msra.mxu0 0
        %1867 = vmatprep.subr.bf16.mxu0 0
        %1868 = vmatpush2.bf16.msra.mxu0 0
        %1869 = vmatprep.subr.bf16.mxu0 0
        %1870 = vmatpush2.bf16.msra.mxu0 0
        %1871 = vmatprep.subr.bf16.mxu0 0
        %1872 = vmatpush2.bf16.msra.mxu0 0
        %1873 = vmatprep.subr.bf16.mxu0 0
        %1874 = vmatpush2.bf16.msra.mxu0 0
        %1875 = vmatprep.subr.bf16.mxu0 0
        %1876 = vmatpush2.bf16.msra.mxu0 0
        %1877 = vmatprep.mubr.bf16.mxu0 0
        %1878 = vmatmul.mubr.bf16.gmra.mxu0 %v1777
        %v1879 = vpop.f32.mrf.mxu0
        %v1880 = vadd.f32 0.0, %v1879
        %v1881 = vpop.f32.mrf.mxu0
        %v1882 = vpop.f32.mrf.mxu0
        %v1883 = vadd.f32 0.0, %v1882
        %v1884 = vpop.f32.mrf.mxu0
        %1885 = vmatprep.mubr.bf16.mxu0 0
        %1886 = vmatmul.mubr.bf16.gmra.mxu0 %v1778
        %v1887 = vpop.f32.mrf.mxu0
        %v1888 = vadd.f32 0.0, %v1887
        %v1889 = vpop.f32.mrf.mxu0
        %v1890 = vpop.f32.mrf.mxu0
        %v1891 = vadd.f32 0.0, %v1890
        %v1892 = vpop.f32.mrf.mxu0
        %1893 = vmatprep.mubr.bf16.mxu0 0
        %1894 = vmatmul.mubr.bf16.gmra.mxu0 %v1779
        %v1895 = vpop.f32.mrf.mxu0
        %v1896 = vadd.f32 0.0, %v1895
        %v1897 = vpop.f32.mrf.mxu0
        %v1898 = vpop.f32.mrf.mxu0
        %v1899 = vpop.f32.mrf.mxu0
        %1900 = vdwg.mxu0
        %v1901 = vadd.f32 %v1767, %v1880
        %v1902 = vadd.f32 %v1768, %v1883
        %v1903 = vadd.f32 %v1769, %v1888
        %v1904 = vadd.f32 %v1770, %v1891
        %v1905 = vadd.f32 %v1771, %v1896
        %v1906 = vld [vmem:[%s4] sm:$0x1]
        %v1908 = vlaneseq
        %v1909 = vshrl.u32 %v1908, 7
        %v1910 = vsub.s32 0, %v1909
        %v1911 = vrot.slane %v1906, %v1910
        %v1913 = vadd.f32 %v1901, %v1911
        %v1914 = vadd.f32 %v1902, %v1911
        %v1915 = vadd.f32 %v1903, %v1911
        %v1916 = vadd.f32 %v1904, %v1911
        %v1917 = vadd.f32 %v1905, %v1911
        %v1918 = vmax.f32 %v1913, 0.0
        %v1919 = vmax.f32 %v1914, 0.0
        %v1920 = vmax.f32 %v1915, 0.0
        %v1921 = vmax.f32 %v1916, 0.0
        %v1922 = vmax.f32 %v1917, 0.0
        %1923 = vst.msk [vmem:[#allocation3] sm:$0xff] %vm391, %v1918
        %1924 = vst.msk [vmem:[#allocation3 + $0x8] sm:$0xff] %vm391, %v1919
        %1925 = vst.msk [vmem:[#allocation3 + $0x10] sm:$0xff] %vm391, %v1920
        %1926 = vst.msk [vmem:[#allocation3 + $0x18] sm:$0xff] %vm391, %v1921
        %vm1927 = vcmask 519168
        %1928 = vst.msk [vmem:[#allocation3 + $0x20] sm:$0xf] %vm1927, %v1922
        %v1929 = vld [vmem:[#allocation3] sm:$0xff]
        %v1930 = vld [vmem:[#allocation3 + $0x8] sm:$0xff]
        %v1931 = vld [vmem:[#allocation3 + $0x10] sm:$0xff]
        %v1932 = vld [vmem:[#allocation3 + $0x18] sm:$0xff]
        %v1933 = vld [vmem:[#allocation3 + $0x20] sm:$0xf]
        %v1934 = vpack.c.bf16 %v1930, %v1929
        %v1935 = vpack.c.bf16 %v1932, %v1931
        %v1936 = vpack.c.bf16 %v1933, %v1933
        %v1937 = vld [vmem:[%s5] sm:$0xf]
        %v1938 = vld [vmem:[%s5 + $0x4] sm:$0xf]
        %v1939 = vld [vmem:[%s5 + $0x8] sm:$0xf]
        %v1940 = vld [vmem:[%s5 + $0xc] sm:$0xf]
        %v1941 = vld [vmem:[%s5 + $0x10] sm:$0xf]
        %v1942 = vld [vmem:[%s5 + $0x14] sm:$0xf]
        %v1943 = vld [vmem:[%s5 + $0x18] sm:$0xf]
        %v1944 = vld [vmem:[%s5 + $0x1c] sm:$0xf]
        %v1945 = vld [vmem:[#allocation3 + $0x1] sm:$0xff]
        %v1946 = vld [vmem:[#allocation3 + $0x9] sm:$0xff]
        %v1947 = vld [vmem:[#allocation3 + $0x11] sm:$0xff]
        %v1948 = vld [vmem:[#allocation3 + $0x19] sm:$0xff]
        %v1949 = vld [vmem:[#allocation3 + $0x21] sm:$0xf]
        %v1950 = vpack.c.bf16 %v1946, %v1945
        %v1951 = vpack.c.bf16 %v1948, %v1947
        %v1952 = vpack.c.bf16 %v1949, %v1949
        %s1953 = scalar_lea.vmem %s5, 32
        %v1954 = vld [vmem:[%s1953] sm:$0xf]
        %v1955 = vld [vmem:[%s1953 + $0x4] sm:$0xf]
        %v1956 = vld [vmem:[%s1953 + $0x8] sm:$0xf]
        %v1957 = vld [vmem:[%s1953 + $0xc] sm:$0xf]
        %v1958 = vld [vmem:[%s1953 + $0x10] sm:$0xf]
        %v1959 = vld [vmem:[%s1953 + $0x14] sm:$0xf]
        %v1960 = vld [vmem:[%s1953 + $0x18] sm:$0xf]
        %v1961 = vld [vmem:[%s1953 + $0x1c] sm:$0xf]
        %v1970 = vunpack.c.l.b16 %v1954
        %v1971 = vunpack.c.l.b16 %v1955
        %v1972 = vunpack.c.l.b16 %v1956
        %v1973 = vunpack.c.l.b16 %v1957
        %v1974 = vunpack.c.l.b16 %v1958
        %v1975 = vunpack.c.l.b16 %v1959
        %v1976 = vunpack.c.l.b16 %v1960
        %v1977 = vunpack.c.l.b16 %v1961
        %v1978 = vpack.c.b16 %v1971, %v1970
        %v1979 = vpack.c.b16 %v1973, %v1972
        %v1980 = vpack.c.b16 %v1975, %v1974
        %v1981 = vpack.c.b16 %v1977, %v1976
        %v1987 = vsel %vm391, %v1950, 0
        %v1990 = vsel %vm391, %v1951, 0
        %v1993 = vsel %vm391, %v1952, 0
        %1995 = vmatprep.subr.bf16.mxu0 0
        %1996 = vmatpush1.bf16.msra.mxu0 0
        %1997 = vmatprep.subr.bf16.mxu0 0
        %1998 = vmatpush1.bf16.msra.mxu0 0
        %1999 = vmatprep.subr.bf16.mxu0 0
        %2000 = vmatpush1.bf16.msra.mxu0 0
        %2001 = vmatprep.subr.bf16.mxu0 0
        %2002 = vmatpush1.bf16.msra.mxu0 0
        %2003 = vmatprep.subr.bf16.mxu0 0
        %2004 = vmatpush1.bf16.msra.mxu0 %v1981
        %2005 = vmatprep.subr.bf16.mxu0 0
        %2006 = vmatpush1.bf16.msra.mxu0 %v1980
        %2007 = vmatprep.subr.bf16.mxu0 0
        %2008 = vmatpush1.bf16.msra.mxu0 %v1979
        %2009 = vmatprep.subr.bf16.mxu0 0
        %2010 = vmatpush1.bf16.msra.mxu0 %v1978
        %2011 = vmatprep.subr.bf16.mxu0 0
        %2012 = vmatpush2.bf16.msra.mxu0 0
        %2013 = vmatprep.subr.bf16.mxu0 0
        %2014 = vmatpush2.bf16.msra.mxu0 0
        %2015 = vmatprep.subr.bf16.mxu0 0
        %2016 = vmatpush2.bf16.msra.mxu0 0
        %2017 = vmatprep.subr.bf16.mxu0 0
        %2018 = vmatpush2.bf16.msra.mxu0 0
        %2019 = vmatprep.subr.bf16.mxu0 0
        %2020 = vmatpush2.bf16.msra.mxu0 0
        %2021 = vmatprep.subr.bf16.mxu0 0
        %2022 = vmatpush2.bf16.msra.mxu0 0
        %2023 = vmatprep.subr.bf16.mxu0 0
        %2024 = vmatpush2.bf16.msra.mxu0 0
        %2025 = vmatprep.subr.bf16.mxu0 0
        %2026 = vmatpush2.bf16.msra.mxu0 0
        %2027 = vmatprep.mubr.bf16.mxu0 0
        %2028 = vmatmul.mubr.bf16.gmra.mxu0 %v1987
        %v2029 = vpop.f32.mrf.mxu0
        %v2030 = vadd.f32 0.0, %v2029
        %v2031 = vpop.f32.mrf.mxu0
        %v2032 = vpop.f32.mrf.mxu0
        %v2033 = vadd.f32 0.0, %v2032
        %v2034 = vpop.f32.mrf.mxu0
        %2035 = vmatprep.mubr.bf16.mxu0 0
        %2036 = vmatmul.mubr.bf16.gmra.mxu0 %v1990
        %v2037 = vpop.f32.mrf.mxu0
        %v2038 = vpop.f32.mrf.mxu0
        %v2039 = vpop.f32.mrf.mxu0
        %v2040 = vpop.f32.mrf.mxu0
        %2041 = vmatprep.mubr.bf16.mxu0 0
        %2042 = vmatmul.mubr.bf16.gmra.mxu0 %v1993
        %v2043 = vpop.f32.mrf.mxu0
        %v2044 = vpop.f32.mrf.mxu0
        %v2045 = vpop.f32.mrf.mxu0
        %v2046 = vpop.f32.mrf.mxu0
        %2047 = vdwg.mxu0
        %v2056 = vunpack.c.l.b16 %v1937
        %v2057 = vunpack.c.l.b16 %v1938
        %v2058 = vunpack.c.l.b16 %v1939
        %v2059 = vunpack.c.l.b16 %v1940
        %v2060 = vunpack.c.l.b16 %v1941
        %v2061 = vunpack.c.l.b16 %v1942
        %v2062 = vunpack.c.l.b16 %v1943
        %v2063 = vunpack.c.l.b16 %v1944
        %v2064 = vpack.c.b16 %v2057, %v2056
        %v2065 = vpack.c.b16 %v2059, %v2058
        %v2066 = vpack.c.b16 %v2061, %v2060
        %v2067 = vpack.c.b16 %v2063, %v2062
        %v2073 = vsel %vm391, %v1934, 0
        %v2076 = vsel %vm391, %v1935, 0
        %v2079 = vsel %vm391, %v1936, 0
        %2081 = vmatprep.subr.bf16.mxu0 0
        %2082 = vmatpush1.bf16.msra.mxu0 0
        %2083 = vmatprep.subr.bf16.mxu0 0
        %2084 = vmatpush1.bf16.msra.mxu0 0
        %2085 = vmatprep.subr.bf16.mxu0 0
        %2086 = vmatpush1.bf16.msra.mxu0 0
        %2087 = vmatprep.subr.bf16.mxu0 0
        %2088 = vmatpush1.bf16.msra.mxu0 0
        %2089 = vmatprep.subr.bf16.mxu0 0
        %2090 = vmatpush1.bf16.msra.mxu0 %v2067
        %2091 = vmatprep.subr.bf16.mxu0 0
        %2092 = vmatpush1.bf16.msra.mxu0 %v2066
        %2093 = vmatprep.subr.bf16.mxu0 0
        %2094 = vmatpush1.bf16.msra.mxu0 %v2065
        %2095 = vmatprep.subr.bf16.mxu0 0
        %2096 = vmatpush1.bf16.msra.mxu0 %v2064
        %2097 = vmatprep.subr.bf16.mxu0 0
        %2098 = vmatpush2.bf16.msra.mxu0 0
        %2099 = vmatprep.subr.bf16.mxu0 0
        %2100 = vmatpush2.bf16.msra.mxu0 0
        %2101 = vmatprep.subr.bf16.mxu0 0
        %2102 = vmatpush2.bf16.msra.mxu0 0
        %2103 = vmatprep.subr.bf16.mxu0 0
        %2104 = vmatpush2.bf16.msra.mxu0 0
        %2105 = vmatprep.subr.bf16.mxu0 0
        %2106 = vmatpush2.bf16.msra.mxu0 0
        %2107 = vmatprep.subr.bf16.mxu0 0
        %2108 = vmatpush2.bf16.msra.mxu0 0
        %2109 = vmatprep.subr.bf16.mxu0 0
        %2110 = vmatpush2.bf16.msra.mxu0 0
        %2111 = vmatprep.subr.bf16.mxu0 0
        %2112 = vmatpush2.bf16.msra.mxu0 0
        %2113 = vmatprep.mubr.bf16.mxu0 0
        %2114 = vmatmul.mubr.bf16.gmra.mxu0 %v2073
        %v2115 = vpop.f32.mrf.mxu0
        %v2116 = vadd.f32 %v2030, %v2115
        %v2117 = vpop.f32.mrf.mxu0
        %v2118 = vpop.f32.mrf.mxu0
        %v2119 = vadd.f32 %v2033, %v2118
        %v2120 = vpop.f32.mrf.mxu0
        %2121 = vmatprep.mubr.bf16.mxu0 0
        %2122 = vmatmul.mubr.bf16.gmra.mxu0 %v2076
        %v2123 = vpop.f32.mrf.mxu0
        %v2124 = vpop.f32.mrf.mxu0
        %v2125 = vpop.f32.mrf.mxu0
        %v2126 = vpop.f32.mrf.mxu0
        %2127 = vmatprep.mubr.bf16.mxu0 0
        %2128 = vmatmul.mubr.bf16.gmra.mxu0 %v2079
        %v2129 = vpop.f32.mrf.mxu0
        %v2130 = vpop.f32.mrf.mxu0
        %v2131 = vpop.f32.mrf.mxu0
        %v2132 = vpop.f32.mrf.mxu0
        %2133 = vdwg.mxu0
        %v2134 = vld [vmem:[#allocation3 + $0x2] sm:$0xff]
        %v2135 = vld [vmem:[#allocation3 + $0xa] sm:$0xff]
        %v2136 = vld [vmem:[#allocation3 + $0x12] sm:$0xff]
        %v2137 = vld [vmem:[#allocation3 + $0x1a] sm:$0xff]
        %v2138 = vld [vmem:[#allocation3 + $0x22] sm:$0xf]
        %v2139 = vpack.c.bf16 %v2135, %v2134
        %v2140 = vpack.c.bf16 %v2137, %v2136
        %v2141 = vpack.c.bf16 %v2138, %v2138
        %s2142 = scalar_lea.vmem %s5, 64
        %v2143 = vld [vmem:[%s2142] sm:$0xf]
        %v2144 = vld [vmem:[%s2142 + $0x4] sm:$0xf]
        %v2145 = vld [vmem:[%s2142 + $0x8] sm:$0xf]
        %v2146 = vld [vmem:[%s2142 + $0xc] sm:$0xf]
        %v2147 = vld [vmem:[%s2142 + $0x10] sm:$0xf]
        %v2148 = vld [vmem:[%s2142 + $0x14] sm:$0xf]
        %v2149 = vld [vmem:[%s2142 + $0x18] sm:$0xf]
        %v2150 = vld [vmem:[%s2142 + $0x1c] sm:$0xf]
        %v2159 = vunpack.c.l.b16 %v2143
        %v2160 = vunpack.c.l.b16 %v2144
        %v2161 = vunpack.c.l.b16 %v2145
        %v2162 = vunpack.c.l.b16 %v2146
        %v2163 = vunpack.c.l.b16 %v2147
        %v2164 = vunpack.c.l.b16 %v2148
        %v2165 = vunpack.c.l.b16 %v2149
        %v2166 = vunpack.c.l.b16 %v2150
        %v2167 = vpack.c.b16 %v2160, %v2159
        %v2168 = vpack.c.b16 %v2162, %v2161
        %v2169 = vpack.c.b16 %v2164, %v2163
        %v2170 = vpack.c.b16 %v2166, %v2165
        %v2176 = vsel %vm391, %v2139, 0
        %v2179 = vsel %vm391, %v2140, 0
        %v2182 = vsel %vm391, %v2141, 0
        %2184 = vmatprep.subr.bf16.mxu0 0
        %2185 = vmatpush1.bf16.msra.mxu0 0
        %2186 = vmatprep.subr.bf16.mxu0 0
        %2187 = vmatpush1.bf16.msra.mxu0 0
        %2188 = vmatprep.subr.bf16.mxu0 0
        %2189 = vmatpush1.bf16.msra.mxu0 0
        %2190 = vmatprep.subr.bf16.mxu0 0
        %2191 = vmatpush1.bf16.msra.mxu0 0
        %2192 = vmatprep.subr.bf16.mxu0 0
        %2193 = vmatpush1.bf16.msra.mxu0 %v2170
        %2194 = vmatprep.subr.bf16.mxu0 0
        %2195 = vmatpush1.bf16.msra.mxu0 %v2169
        %2196 = vmatprep.subr.bf16.mxu0 0
        %2197 = vmatpush1.bf16.msra.mxu0 %v2168
        %2198 = vmatprep.subr.bf16.mxu0 0
        %2199 = vmatpush1.bf16.msra.mxu0 %v2167
        %2200 = vmatprep.subr.bf16.mxu0 0
        %2201 = vmatpush2.bf16.msra.mxu0 0
        %2202 = vmatprep.subr.bf16.mxu0 0
        %2203 = vmatpush2.bf16.msra.mxu0 0
        %2204 = vmatprep.subr.bf16.mxu0 0
        %2205 = vmatpush2.bf16.msra.mxu0 0
        %2206 = vmatprep.subr.bf16.mxu0 0
        %2207 = vmatpush2.bf16.msra.mxu0 0
        %2208 = vmatprep.subr.bf16.mxu0 0
        %2209 = vmatpush2.bf16.msra.mxu0 0
        %2210 = vmatprep.subr.bf16.mxu0 0
        %2211 = vmatpush2.bf16.msra.mxu0 0
        %2212 = vmatprep.subr.bf16.mxu0 0
        %2213 = vmatpush2.bf16.msra.mxu0 0
        %2214 = vmatprep.subr.bf16.mxu0 0
        %2215 = vmatpush2.bf16.msra.mxu0 0
        %2216 = vmatprep.mubr.bf16.mxu0 0
        %2217 = vmatmul.mubr.bf16.gmra.mxu0 %v2176
        %v2218 = vpop.f32.mrf.mxu0
        %v2219 = vadd.f32 0.0, %v2218
        %v2220 = vpop.f32.mrf.mxu0
        %v2221 = vpop.f32.mrf.mxu0
        %v2222 = vadd.f32 0.0, %v2221
        %v2223 = vpop.f32.mrf.mxu0
        %2224 = vmatprep.mubr.bf16.mxu0 0
        %2225 = vmatmul.mubr.bf16.gmra.mxu0 %v2179
        %v2226 = vpop.f32.mrf.mxu0
        %v2227 = vpop.f32.mrf.mxu0
        %v2228 = vpop.f32.mrf.mxu0
        %v2229 = vpop.f32.mrf.mxu0
        %2230 = vmatprep.mubr.bf16.mxu0 0
        %2231 = vmatmul.mubr.bf16.gmra.mxu0 %v2182
        %v2232 = vpop.f32.mrf.mxu0
        %v2233 = vpop.f32.mrf.mxu0
        %v2234 = vpop.f32.mrf.mxu0
        %v2235 = vpop.f32.mrf.mxu0
        %2236 = vdwg.mxu0
        %v2237 = vadd.f32 %v2116, %v2219
        %v2238 = vadd.f32 %v2119, %v2222
        %v2239 = vld [vmem:[#allocation3 + $0x6] sm:$0xff]
        %v2240 = vld [vmem:[#allocation3 + $0xe] sm:$0xff]
        %v2241 = vld [vmem:[#allocation3 + $0x16] sm:$0xff]
        %v2242 = vld [vmem:[#allocation3 + $0x1e] sm:$0xff]
        %v2243 = vld [vmem:[#allocation3 + $0x26] sm:$0xf]
        %v2244 = vpack.c.bf16 %v2240, %v2239
        %v2245 = vpack.c.bf16 %v2242, %v2241
        %v2246 = vpack.c.bf16 %v2243, %v2243
        %s2247 = scalar_lea.vmem %s5, 96
        %v2248 = vld [vmem:[%s2247] sm:$0xf]
        %v2249 = vld [vmem:[%s2247 + $0x4] sm:$0xf]
        %v2250 = vld [vmem:[%s2247 + $0x8] sm:$0xf]
        %v2251 = vld [vmem:[%s2247 + $0xc] sm:$0xf]
        %v2252 = vld [vmem:[%s2247 + $0x10] sm:$0xf]
        %v2253 = vld [vmem:[%s2247 + $0x14] sm:$0xf]
        %v2254 = vld [vmem:[%s2247 + $0x18] sm:$0xf]
        %v2255 = vld [vmem:[%s2247 + $0x1c] sm:$0xf]
        %v2264 = vunpack.c.l.b16 %v2248
        %v2265 = vunpack.c.l.b16 %v2249
        %v2266 = vunpack.c.l.b16 %v2250
        %v2267 = vunpack.c.l.b16 %v2251
        %v2268 = vunpack.c.l.b16 %v2252
        %v2269 = vunpack.c.l.b16 %v2253
        %v2270 = vunpack.c.l.b16 %v2254
        %v2271 = vunpack.c.l.b16 %v2255
        %v2272 = vpack.c.b16 %v2265, %v2264
        %v2273 = vpack.c.b16 %v2267, %v2266
        %v2274 = vpack.c.b16 %v2269, %v2268
        %v2275 = vpack.c.b16 %v2271, %v2270
        %v2281 = vsel %vm391, %v2244, 0
        %v2284 = vsel %vm391, %v2245, 0
        %v2287 = vsel %vm391, %v2246, 0
        %2289 = vmatprep.subr.bf16.mxu0 0
        %2290 = vmatpush1.bf16.msra.mxu0 0
        %2291 = vmatprep.subr.bf16.mxu0 0
        %2292 = vmatpush1.bf16.msra.mxu0 0
        %2293 = vmatprep.subr.bf16.mxu0 0
        %2294 = vmatpush1.bf16.msra.mxu0 0
        %2295 = vmatprep.subr.bf16.mxu0 0
        %2296 = vmatpush1.bf16.msra.mxu0 0
        %2297 = vmatprep.subr.bf16.mxu0 0
        %2298 = vmatpush1.bf16.msra.mxu0 %v2275
        %2299 = vmatprep.subr.bf16.mxu0 0
        %2300 = vmatpush1.bf16.msra.mxu0 %v2274
        %2301 = vmatprep.subr.bf16.mxu0 0
        %2302 = vmatpush1.bf16.msra.mxu0 %v2273
        %2303 = vmatprep.subr.bf16.mxu0 0
        %2304 = vmatpush1.bf16.msra.mxu0 %v2272
        %2305 = vmatprep.subr.bf16.mxu0 0
        %2306 = vmatpush2.bf16.msra.mxu0 0
        %2307 = vmatprep.subr.bf16.mxu0 0
        %2308 = vmatpush2.bf16.msra.mxu0 0
        %2309 = vmatprep.subr.bf16.mxu0 0
        %2310 = vmatpush2.bf16.msra.mxu0 0
        %2311 = vmatprep.subr.bf16.mxu0 0
        %2312 = vmatpush2.bf16.msra.mxu0 0
        %2313 = vmatprep.subr.bf16.mxu0 0
        %2314 = vmatpush2.bf16.msra.mxu0 0
        %2315 = vmatprep.subr.bf16.mxu0 0
        %2316 = vmatpush2.bf16.msra.mxu0 0
        %2317 = vmatprep.subr.bf16.mxu0 0
        %2318 = vmatpush2.bf16.msra.mxu0 0
        %2319 = vmatprep.subr.bf16.mxu0 0
        %2320 = vmatpush2.bf16.msra.mxu0 0
        %2321 = vmatprep.mubr.bf16.mxu0 0
        %2322 = vmatmul.mubr.bf16.gmra.mxu0 %v2281
        %v2323 = vpop.f32.mrf.mxu0
        %v2324 = vadd.f32 0.0, %v2323
        %v2325 = vpop.f32.mrf.mxu0
        %v2326 = vpop.f32.mrf.mxu0
        %v2327 = vadd.f32 0.0, %v2326
        %v2328 = vpop.f32.mrf.mxu0
        %2329 = vmatprep.mubr.bf16.mxu0 0
        %2330 = vmatmul.mubr.bf16.gmra.mxu0 %v2284
        %v2331 = vpop.f32.mrf.mxu0
        %v2332 = vpop.f32.mrf.mxu0
        %v2333 = vpop.f32.mrf.mxu0
        %v2334 = vpop.f32.mrf.mxu0
        %2335 = vmatprep.mubr.bf16.mxu0 0
        %2336 = vmatmul.mubr.bf16.gmra.mxu0 %v2287
        %v2337 = vpop.f32.mrf.mxu0
        %v2338 = vpop.f32.mrf.mxu0
        %v2339 = vpop.f32.mrf.mxu0
        %v2340 = vpop.f32.mrf.mxu0
        %2341 = vdwg.mxu0
        %v2342 = vadd.f32 %v2237, %v2324
        %v2343 = vadd.f32 %v2238, %v2327
        %v2344 = vld [vmem:[#allocation3 + $0x7] sm:$0xff]
        %v2345 = vld [vmem:[#allocation3 + $0xf] sm:$0xff]
        %v2346 = vld [vmem:[#allocation3 + $0x17] sm:$0xff]
        %v2347 = vld [vmem:[#allocation3 + $0x1f] sm:$0xff]
        %v2348 = vld [vmem:[#allocation3 + $0x27] sm:$0xf]
        %v2349 = vpack.c.bf16 %v2345, %v2344
        %v2350 = vpack.c.bf16 %v2347, %v2346
        %v2351 = vpack.c.bf16 %v2348, %v2348
        %s2352 = scalar_lea.vmem %s5, 128
        %v2353 = vld [vmem:[%s2352] sm:$0xf]
        %v2354 = vld [vmem:[%s2352 + $0x4] sm:$0xf]
        %v2355 = vld [vmem:[%s2352 + $0x8] sm:$0xf]
        %v2356 = vld [vmem:[%s2352 + $0xc] sm:$0xf]
        %v2357 = vld [vmem:[%s2352 + $0x10] sm:$0xf]
        %v2358 = vld [vmem:[%s2352 + $0x14] sm:$0xf]
        %v2359 = vld [vmem:[%s2352 + $0x18] sm:$0xf]
        %v2360 = vld [vmem:[%s2352 + $0x1c] sm:$0xf]
        %v2369 = vunpack.c.l.b16 %v2353
        %v2370 = vunpack.c.l.b16 %v2354
        %v2371 = vunpack.c.l.b16 %v2355
        %v2372 = vunpack.c.l.b16 %v2356
        %v2373 = vunpack.c.l.b16 %v2357
        %v2374 = vunpack.c.l.b16 %v2358
        %v2375 = vunpack.c.l.b16 %v2359
        %v2376 = vunpack.c.l.b16 %v2360
        %v2377 = vpack.c.b16 %v2370, %v2369
        %v2378 = vpack.c.b16 %v2372, %v2371
        %v2379 = vpack.c.b16 %v2374, %v2373
        %v2380 = vpack.c.b16 %v2376, %v2375
        %v2386 = vsel %vm391, %v2349, 0
        %v2389 = vsel %vm391, %v2350, 0
        %v2392 = vsel %vm391, %v2351, 0
        %2394 = vmatprep.subr.bf16.mxu0 0
        %2395 = vmatpush1.bf16.msra.mxu0 0
        %2396 = vmatprep.subr.bf16.mxu0 0
        %2397 = vmatpush1.bf16.msra.mxu0 0
        %2398 = vmatprep.subr.bf16.mxu0 0
        %2399 = vmatpush1.bf16.msra.mxu0 0
        %2400 = vmatprep.subr.bf16.mxu0 0
        %2401 = vmatpush1.bf16.msra.mxu0 0
        %2402 = vmatprep.subr.bf16.mxu0 0
        %2403 = vmatpush1.bf16.msra.mxu0 %v2380
        %2404 = vmatprep.subr.bf16.mxu0 0
        %2405 = vmatpush1.bf16.msra.mxu0 %v2379
        %2406 = vmatprep.subr.bf16.mxu0 0
        %2407 = vmatpush1.bf16.msra.mxu0 %v2378
        %2408 = vmatprep.subr.bf16.mxu0 0
        %2409 = vmatpush1.bf16.msra.mxu0 %v2377
        %2410 = vmatprep.subr.bf16.mxu0 0
        %2411 = vmatpush2.bf16.msra.mxu0 0
        %2412 = vmatprep.subr.bf16.mxu0 0
        %2413 = vmatpush2.bf16.msra.mxu0 0
        %2414 = vmatprep.subr.bf16.mxu0 0
        %2415 = vmatpush2.bf16.msra.mxu0 0
        %2416 = vmatprep.subr.bf16.mxu0 0
        %2417 = vmatpush2.bf16.msra.mxu0 0
        %2418 = vmatprep.subr.bf16.mxu0 0
        %2419 = vmatpush2.bf16.msra.mxu0 0
        %2420 = vmatprep.subr.bf16.mxu0 0
        %2421 = vmatpush2.bf16.msra.mxu0 0
        %2422 = vmatprep.subr.bf16.mxu0 0
        %2423 = vmatpush2.bf16.msra.mxu0 0
        %2424 = vmatprep.subr.bf16.mxu0 0
        %2425 = vmatpush2.bf16.msra.mxu0 0
        %2426 = vmatprep.mubr.bf16.mxu0 0
        %2427 = vmatmul.mubr.bf16.gmra.mxu0 %v2386
        %v2428 = vpop.f32.mrf.mxu0
        %v2429 = vadd.f32 0.0, %v2428
        %v2430 = vpop.f32.mrf.mxu0
        %v2431 = vpop.f32.mrf.mxu0
        %v2432 = vadd.f32 0.0, %v2431
        %v2433 = vpop.f32.mrf.mxu0
        %2434 = vmatprep.mubr.bf16.mxu0 0
        %2435 = vmatmul.mubr.bf16.gmra.mxu0 %v2389
        %v2436 = vpop.f32.mrf.mxu0
        %v2437 = vpop.f32.mrf.mxu0
        %v2438 = vpop.f32.mrf.mxu0
        %v2439 = vpop.f32.mrf.mxu0
        %2440 = vmatprep.mubr.bf16.mxu0 0
        %2441 = vmatmul.mubr.bf16.gmra.mxu0 %v2392
        %v2442 = vpop.f32.mrf.mxu0
        %v2443 = vpop.f32.mrf.mxu0
        %v2444 = vpop.f32.mrf.mxu0
        %v2445 = vpop.f32.mrf.mxu0
        %2446 = vdwg.mxu0
        %v2447 = vadd.f32 %v2342, %v2429
        %v2448 = vadd.f32 %v2343, %v2432
        %v2449 = vld [vmem:[#allocation3 + $0x8] sm:$0xff]
        %v2450 = vld [vmem:[#allocation3 + $0x10] sm:$0xff]
        %v2451 = vld [vmem:[#allocation3 + $0x18] sm:$0xff]
        %v2452 = vld [vmem:[#allocation3 + $0x20] sm:$0xff]
        %v2453 = vld [vmem:[#allocation3 + $0x28] sm:$0xf]
        %v2454 = vpack.c.bf16 %v2450, %v2449
        %v2455 = vpack.c.bf16 %v2452, %v2451
        %v2456 = vpack.c.bf16 %v2453, %v2453
        %s2457 = scalar_lea.vmem %s5, 160
        %v2458 = vld [vmem:[%s2457] sm:$0xf]
        %v2459 = vld [vmem:[%s2457 + $0x4] sm:$0xf]
        %v2460 = vld [vmem:[%s2457 + $0x8] sm:$0xf]
        %v2461 = vld [vmem:[%s2457 + $0xc] sm:$0xf]
        %v2462 = vld [vmem:[%s2457 + $0x10] sm:$0xf]
        %v2463 = vld [vmem:[%s2457 + $0x14] sm:$0xf]
        %v2464 = vld [vmem:[%s2457 + $0x18] sm:$0xf]
        %v2465 = vld [vmem:[%s2457 + $0x1c] sm:$0xf]
        %v2474 = vunpack.c.l.b16 %v2458
        %v2475 = vunpack.c.l.b16 %v2459
        %v2476 = vunpack.c.l.b16 %v2460
        %v2477 = vunpack.c.l.b16 %v2461
        %v2478 = vunpack.c.l.b16 %v2462
        %v2479 = vunpack.c.l.b16 %v2463
        %v2480 = vunpack.c.l.b16 %v2464
        %v2481 = vunpack.c.l.b16 %v2465
        %v2482 = vpack.c.b16 %v2475, %v2474
        %v2483 = vpack.c.b16 %v2477, %v2476
        %v2484 = vpack.c.b16 %v2479, %v2478
        %v2485 = vpack.c.b16 %v2481, %v2480
        %v2491 = vsel %vm391, %v2454, 0
        %v2494 = vsel %vm391, %v2455, 0
        %v2497 = vsel %vm391, %v2456, 0
        %2499 = vmatprep.subr.bf16.mxu0 0
        %2500 = vmatpush1.bf16.msra.mxu0 0
        %2501 = vmatprep.subr.bf16.mxu0 0
        %2502 = vmatpush1.bf16.msra.mxu0 0
        %2503 = vmatprep.subr.bf16.mxu0 0
        %2504 = vmatpush1.bf16.msra.mxu0 0
        %2505 = vmatprep.subr.bf16.mxu0 0
        %2506 = vmatpush1.bf16.msra.mxu0 0
        %2507 = vmatprep.subr.bf16.mxu0 0
        %2508 = vmatpush1.bf16.msra.mxu0 %v2485
        %2509 = vmatprep.subr.bf16.mxu0 0
        %2510 = vmatpush1.bf16.msra.mxu0 %v2484
        %2511 = vmatprep.subr.bf16.mxu0 0
        %2512 = vmatpush1.bf16.msra.mxu0 %v2483
        %2513 = vmatprep.subr.bf16.mxu0 0
        %2514 = vmatpush1.bf16.msra.mxu0 %v2482
        %2515 = vmatprep.subr.bf16.mxu0 0
        %2516 = vmatpush2.bf16.msra.mxu0 0
        %2517 = vmatprep.subr.bf16.mxu0 0
        %2518 = vmatpush2.bf16.msra.mxu0 0
        %2519 = vmatprep.subr.bf16.mxu0 0
        %2520 = vmatpush2.bf16.msra.mxu0 0
        %2521 = vmatprep.subr.bf16.mxu0 0
        %2522 = vmatpush2.bf16.msra.mxu0 0
        %2523 = vmatprep.subr.bf16.mxu0 0
        %2524 = vmatpush2.bf16.msra.mxu0 0
        %2525 = vmatprep.subr.bf16.mxu0 0
        %2526 = vmatpush2.bf16.msra.mxu0 0
        %2527 = vmatprep.subr.bf16.mxu0 0
        %2528 = vmatpush2.bf16.msra.mxu0 0
        %2529 = vmatprep.subr.bf16.mxu0 0
        %2530 = vmatpush2.bf16.msra.mxu0 0
        %2531 = vmatprep.mubr.bf16.mxu0 0
        %2532 = vmatmul.mubr.bf16.gmra.mxu0 %v2491
        %v2533 = vpop.f32.mrf.mxu0
        %v2534 = vadd.f32 0.0, %v2533
        %v2535 = vpop.f32.mrf.mxu0
        %v2536 = vpop.f32.mrf.mxu0
        %v2537 = vadd.f32 0.0, %v2536
        %v2538 = vpop.f32.mrf.mxu0
        %2539 = vmatprep.mubr.bf16.mxu0 0
        %2540 = vmatmul.mubr.bf16.gmra.mxu0 %v2494
        %v2541 = vpop.f32.mrf.mxu0
        %v2542 = vpop.f32.mrf.mxu0
        %v2543 = vpop.f32.mrf.mxu0
        %v2544 = vpop.f32.mrf.mxu0
        %2545 = vmatprep.mubr.bf16.mxu0 0
        %2546 = vmatmul.mubr.bf16.gmra.mxu0 %v2497
        %v2547 = vpop.f32.mrf.mxu0
        %v2548 = vpop.f32.mrf.mxu0
        %v2549 = vpop.f32.mrf.mxu0
        %v2550 = vpop.f32.mrf.mxu0
        %2551 = vdwg.mxu0
        %v2552 = vadd.f32 %v2447, %v2534
        %v2553 = vadd.f32 %v2448, %v2537
        %v2554 = vld [vmem:[#allocation3 + $0xc] sm:$0xff]
        %v2555 = vld [vmem:[#allocation3 + $0x14] sm:$0xff]
        %v2556 = vld [vmem:[#allocation3 + $0x1c] sm:$0xff]
        %v2557 = vld [vmem:[#allocation3 + $0x24] sm:$0xff]
        %v2558 = vld [vmem:[#allocation3 + $0x2c] sm:$0xf]
        %v2559 = vpack.c.bf16 %v2555, %v2554
        %v2560 = vpack.c.bf16 %v2557, %v2556
        %v2561 = vpack.c.bf16 %v2558, %v2558
        %s2562 = scalar_lea.vmem %s5, 192
        %v2563 = vld [vmem:[%s2562] sm:$0xf]
        %v2564 = vld [vmem:[%s2562 + $0x4] sm:$0xf]
        %v2565 = vld [vmem:[%s2562 + $0x8] sm:$0xf]
        %v2566 = vld [vmem:[%s2562 + $0xc] sm:$0xf]
        %v2567 = vld [vmem:[%s2562 + $0x10] sm:$0xf]
        %v2568 = vld [vmem:[%s2562 + $0x14] sm:$0xf]
        %v2569 = vld [vmem:[%s2562 + $0x18] sm:$0xf]
        %v2570 = vld [vmem:[%s2562 + $0x1c] sm:$0xf]
        %v2579 = vunpack.c.l.b16 %v2563
        %v2580 = vunpack.c.l.b16 %v2564
        %v2581 = vunpack.c.l.b16 %v2565
        %v2582 = vunpack.c.l.b16 %v2566
        %v2583 = vunpack.c.l.b16 %v2567
        %v2584 = vunpack.c.l.b16 %v2568
        %v2585 = vunpack.c.l.b16 %v2569
        %v2586 = vunpack.c.l.b16 %v2570
        %v2587 = vpack.c.b16 %v2580, %v2579
        %v2588 = vpack.c.b16 %v2582, %v2581
        %v2589 = vpack.c.b16 %v2584, %v2583
        %v2590 = vpack.c.b16 %v2586, %v2585
        %v2596 = vsel %vm391, %v2559, 0
        %v2599 = vsel %vm391, %v2560, 0
        %v2602 = vsel %vm391, %v2561, 0
        %2604 = vmatprep.subr.bf16.mxu0 0
        %2605 = vmatpush1.bf16.msra.mxu0 0
        %2606 = vmatprep.subr.bf16.mxu0 0
        %2607 = vmatpush1.bf16.msra.mxu0 0
        %2608 = vmatprep.subr.bf16.mxu0 0
        %2609 = vmatpush1.bf16.msra.mxu0 0
        %2610 = vmatprep.subr.bf16.mxu0 0
        %2611 = vmatpush1.bf16.msra.mxu0 0
        %2612 = vmatprep.subr.bf16.mxu0 0
        %2613 = vmatpush1.bf16.msra.mxu0 %v2590
        %2614 = vmatprep.subr.bf16.mxu0 0
        %2615 = vmatpush1.bf16.msra.mxu0 %v2589
        %2616 = vmatprep.subr.bf16.mxu0 0
        %2617 = vmatpush1.bf16.msra.mxu0 %v2588
        %2618 = vmatprep.subr.bf16.mxu0 0
        %2619 = vmatpush1.bf16.msra.mxu0 %v2587
        %2620 = vmatprep.subr.bf16.mxu0 0
        %2621 = vmatpush2.bf16.msra.mxu0 0
        %2622 = vmatprep.subr.bf16.mxu0 0
        %2623 = vmatpush2.bf16.msra.mxu0 0
        %2624 = vmatprep.subr.bf16.mxu0 0
        %2625 = vmatpush2.bf16.msra.mxu0 0
        %2626 = vmatprep.subr.bf16.mxu0 0
        %2627 = vmatpush2.bf16.msra.mxu0 0
        %2628 = vmatprep.subr.bf16.mxu0 0
        %2629 = vmatpush2.bf16.msra.mxu0 0
        %2630 = vmatprep.subr.bf16.mxu0 0
        %2631 = vmatpush2.bf16.msra.mxu0 0
        %2632 = vmatprep.subr.bf16.mxu0 0
        %2633 = vmatpush2.bf16.msra.mxu0 0
        %2634 = vmatprep.subr.bf16.mxu0 0
        %2635 = vmatpush2.bf16.msra.mxu0 0
        %2636 = vmatprep.mubr.bf16.mxu0 0
        %2637 = vmatmul.mubr.bf16.gmra.mxu0 %v2596
        %v2638 = vpop.f32.mrf.mxu0
        %v2639 = vadd.f32 0.0, %v2638
        %v2640 = vpop.f32.mrf.mxu0
        %v2641 = vpop.f32.mrf.mxu0
        %v2642 = vadd.f32 0.0, %v2641
        %v2643 = vpop.f32.mrf.mxu0
        %2644 = vmatprep.mubr.bf16.mxu0 0
        %2645 = vmatmul.mubr.bf16.gmra.mxu0 %v2599
        %v2646 = vpop.f32.mrf.mxu0
        %v2647 = vpop.f32.mrf.mxu0
        %v2648 = vpop.f32.mrf.mxu0
        %v2649 = vpop.f32.mrf.mxu0
        %2650 = vmatprep.mubr.bf16.mxu0 0
        %2651 = vmatmul.mubr.bf16.gmra.mxu0 %v2602
        %v2652 = vpop.f32.mrf.mxu0
        %v2653 = vpop.f32.mrf.mxu0
        %v2654 = vpop.f32.mrf.mxu0
        %v2655 = vpop.f32.mrf.mxu0
        %2656 = vdwg.mxu0
        %v2657 = vadd.f32 %v2552, %v2639
        %v2658 = vadd.f32 %v2553, %v2642
        %v2659 = vld [vmem:[#allocation3 + $0xd] sm:$0xff]
        %v2660 = vld [vmem:[#allocation3 + $0x15] sm:$0xff]
        %v2661 = vld [vmem:[#allocation3 + $0x1d] sm:$0xff]
        %v2662 = vld [vmem:[#allocation3 + $0x25] sm:$0xff]
        %v2663 = vld [vmem:[#allocation3 + $0x2d] sm:$0xf]
        %v2664 = vpack.c.bf16 %v2660, %v2659
        %v2665 = vpack.c.bf16 %v2662, %v2661
        %v2666 = vpack.c.bf16 %v2663, %v2663
        %s2667 = scalar_lea.vmem %s5, 224
        %v2668 = vld [vmem:[%s2667] sm:$0xf]
        %v2669 = vld [vmem:[%s2667 + $0x4] sm:$0xf]
        %v2670 = vld [vmem:[%s2667 + $0x8] sm:$0xf]
        %v2671 = vld [vmem:[%s2667 + $0xc] sm:$0xf]
        %v2672 = vld [vmem:[%s2667 + $0x10] sm:$0xf]
        %v2673 = vld [vmem:[%s2667 + $0x14] sm:$0xf]
        %v2674 = vld [vmem:[%s2667 + $0x18] sm:$0xf]
        %v2675 = vld [vmem:[%s2667 + $0x1c] sm:$0xf]
        %v2684 = vunpack.c.l.b16 %v2668
        %v2685 = vunpack.c.l.b16 %v2669
        %v2686 = vunpack.c.l.b16 %v2670
        %v2687 = vunpack.c.l.b16 %v2671
        %v2688 = vunpack.c.l.b16 %v2672
        %v2689 = vunpack.c.l.b16 %v2673
        %v2690 = vunpack.c.l.b16 %v2674
        %v2691 = vunpack.c.l.b16 %v2675
        %v2692 = vpack.c.b16 %v2685, %v2684
        %v2693 = vpack.c.b16 %v2687, %v2686
        %v2694 = vpack.c.b16 %v2689, %v2688
        %v2695 = vpack.c.b16 %v2691, %v2690
        %v2701 = vsel %vm391, %v2664, 0
        %v2704 = vsel %vm391, %v2665, 0
        %v2707 = vsel %vm391, %v2666, 0
        %2709 = vmatprep.subr.bf16.mxu0 0
        %2710 = vmatpush1.bf16.msra.mxu0 0
        %2711 = vmatprep.subr.bf16.mxu0 0
        %2712 = vmatpush1.bf16.msra.mxu0 0
        %2713 = vmatprep.subr.bf16.mxu0 0
        %2714 = vmatpush1.bf16.msra.mxu0 0
        %2715 = vmatprep.subr.bf16.mxu0 0
        %2716 = vmatpush1.bf16.msra.mxu0 0
        %2717 = vmatprep.subr.bf16.mxu0 0
        %2718 = vmatpush1.bf16.msra.mxu0 %v2695
        %2719 = vmatprep.subr.bf16.mxu0 0
        %2720 = vmatpush1.bf16.msra.mxu0 %v2694
        %2721 = vmatprep.subr.bf16.mxu0 0
        %2722 = vmatpush1.bf16.msra.mxu0 %v2693
        %2723 = vmatprep.subr.bf16.mxu0 0
        %2724 = vmatpush1.bf16.msra.mxu0 %v2692
        %2725 = vmatprep.subr.bf16.mxu0 0
        %2726 = vmatpush2.bf16.msra.mxu0 0
        %2727 = vmatprep.subr.bf16.mxu0 0
        %2728 = vmatpush2.bf16.msra.mxu0 0
        %2729 = vmatprep.subr.bf16.mxu0 0
        %2730 = vmatpush2.bf16.msra.mxu0 0
        %2731 = vmatprep.subr.bf16.mxu0 0
        %2732 = vmatpush2.bf16.msra.mxu0 0
        %2733 = vmatprep.subr.bf16.mxu0 0
        %2734 = vmatpush2.bf16.msra.mxu0 0
        %2735 = vmatprep.subr.bf16.mxu0 0
        %2736 = vmatpush2.bf16.msra.mxu0 0
        %2737 = vmatprep.subr.bf16.mxu0 0
        %2738 = vmatpush2.bf16.msra.mxu0 0
        %2739 = vmatprep.subr.bf16.mxu0 0
        %2740 = vmatpush2.bf16.msra.mxu0 0
        %2741 = vmatprep.mubr.bf16.mxu0 0
        %2742 = vmatmul.mubr.bf16.gmra.mxu0 %v2701
        %v2743 = vpop.f32.mrf.mxu0
        %v2744 = vadd.f32 0.0, %v2743
        %v2745 = vpop.f32.mrf.mxu0
        %v2746 = vpop.f32.mrf.mxu0
        %v2747 = vadd.f32 0.0, %v2746
        %v2748 = vpop.f32.mrf.mxu0
        %2749 = vmatprep.mubr.bf16.mxu0 0
        %2750 = vmatmul.mubr.bf16.gmra.mxu0 %v2704
        %v2751 = vpop.f32.mrf.mxu0
        %v2752 = vpop.f32.mrf.mxu0
        %v2753 = vpop.f32.mrf.mxu0
        %v2754 = vpop.f32.mrf.mxu0
        %2755 = vmatprep.mubr.bf16.mxu0 0
        %2756 = vmatmul.mubr.bf16.gmra.mxu0 %v2707
        %v2757 = vpop.f32.mrf.mxu0
        %v2758 = vpop.f32.mrf.mxu0
        %v2759 = vpop.f32.mrf.mxu0
        %v2760 = vpop.f32.mrf.mxu0
        %2761 = vdwg.mxu0
        %v2762 = vadd.f32 %v2657, %v2744
        %v2763 = vadd.f32 %v2658, %v2747
        %v2764 = vld [vmem:[#allocation3 + $0xe] sm:$0xff]
        %v2765 = vld [vmem:[#allocation3 + $0x16] sm:$0xff]
        %v2766 = vld [vmem:[#allocation3 + $0x1e] sm:$0xff]
        %v2767 = vld [vmem:[#allocation3 + $0x26] sm:$0xff]
        %v2768 = vld [vmem:[#allocation3 + $0x2e] sm:$0xf]
        %v2769 = vpack.c.bf16 %v2765, %v2764
        %v2770 = vpack.c.bf16 %v2767, %v2766
        %v2771 = vpack.c.bf16 %v2768, %v2768
        %s2772 = scalar_lea.vmem %s5, 256
        %v2773 = vld [vmem:[%s2772] sm:$0xf]
        %v2774 = vld [vmem:[%s2772 + $0x4] sm:$0xf]
        %v2775 = vld [vmem:[%s2772 + $0x8] sm:$0xf]
        %v2776 = vld [vmem:[%s2772 + $0xc] sm:$0xf]
        %v2777 = vld [vmem:[%s2772 + $0x10] sm:$0xf]
        %v2778 = vld [vmem:[%s2772 + $0x14] sm:$0xf]
        %v2779 = vld [vmem:[%s2772 + $0x18] sm:$0xf]
        %v2780 = vld [vmem:[%s2772 + $0x1c] sm:$0xf]
        %v2789 = vunpack.c.l.b16 %v2773
        %v2790 = vunpack.c.l.b16 %v2774
        %v2791 = vunpack.c.l.b16 %v2775
        %v2792 = vunpack.c.l.b16 %v2776
        %v2793 = vunpack.c.l.b16 %v2777
        %v2794 = vunpack.c.l.b16 %v2778
        %v2795 = vunpack.c.l.b16 %v2779
        %v2796 = vunpack.c.l.b16 %v2780
        %v2797 = vpack.c.b16 %v2790, %v2789
        %v2798 = vpack.c.b16 %v2792, %v2791
        %v2799 = vpack.c.b16 %v2794, %v2793
        %v2800 = vpack.c.b16 %v2796, %v2795
        %v2806 = vsel %vm391, %v2769, 0
        %v2809 = vsel %vm391, %v2770, 0
        %v2812 = vsel %vm391, %v2771, 0
        %2814 = vmatprep.subr.bf16.mxu0 0
        %2815 = vmatpush1.bf16.msra.mxu0 0
        %2816 = vmatprep.subr.bf16.mxu0 0
        %2817 = vmatpush1.bf16.msra.mxu0 0
        %2818 = vmatprep.subr.bf16.mxu0 0
        %2819 = vmatpush1.bf16.msra.mxu0 0
        %2820 = vmatprep.subr.bf16.mxu0 0
        %2821 = vmatpush1.bf16.msra.mxu0 0
        %2822 = vmatprep.subr.bf16.mxu0 0
        %2823 = vmatpush1.bf16.msra.mxu0 %v2800
        %2824 = vmatprep.subr.bf16.mxu0 0
        %2825 = vmatpush1.bf16.msra.mxu0 %v2799
        %2826 = vmatprep.subr.bf16.mxu0 0
        %2827 = vmatpush1.bf16.msra.mxu0 %v2798
        %2828 = vmatprep.subr.bf16.mxu0 0
        %2829 = vmatpush1.bf16.msra.mxu0 %v2797
        %2830 = vmatprep.subr.bf16.mxu0 0
        %2831 = vmatpush2.bf16.msra.mxu0 0
        %2832 = vmatprep.subr.bf16.mxu0 0
        %2833 = vmatpush2.bf16.msra.mxu0 0
        %2834 = vmatprep.subr.bf16.mxu0 0
        %2835 = vmatpush2.bf16.msra.mxu0 0
        %2836 = vmatprep.subr.bf16.mxu0 0
        %2837 = vmatpush2.bf16.msra.mxu0 0
        %2838 = vmatprep.subr.bf16.mxu0 0
        %2839 = vmatpush2.bf16.msra.mxu0 0
        %2840 = vmatprep.subr.bf16.mxu0 0
        %2841 = vmatpush2.bf16.msra.mxu0 0
        %2842 = vmatprep.subr.bf16.mxu0 0
        %2843 = vmatpush2.bf16.msra.mxu0 0
        %2844 = vmatprep.subr.bf16.mxu0 0
        %2845 = vmatpush2.bf16.msra.mxu0 0
        %2846 = vmatprep.mubr.bf16.mxu0 0
        %2847 = vmatmul.mubr.bf16.gmra.mxu0 %v2806
        %v2848 = vpop.f32.mrf.mxu0
        %v2849 = vadd.f32 0.0, %v2848
        %v2850 = vpop.f32.mrf.mxu0
        %v2851 = vpop.f32.mrf.mxu0
        %v2852 = vadd.f32 0.0, %v2851
        %v2853 = vpop.f32.mrf.mxu0
        %2854 = vmatprep.mubr.bf16.mxu0 0
        %2855 = vmatmul.mubr.bf16.gmra.mxu0 %v2809
        %v2856 = vpop.f32.mrf.mxu0
        %v2857 = vpop.f32.mrf.mxu0
        %v2858 = vpop.f32.mrf.mxu0
        %v2859 = vpop.f32.mrf.mxu0
        %2860 = vmatprep.mubr.bf16.mxu0 0
        %2861 = vmatmul.mubr.bf16.gmra.mxu0 %v2812
        %v2862 = vpop.f32.mrf.mxu0
        %v2863 = vpop.f32.mrf.mxu0
        %v2864 = vpop.f32.mrf.mxu0
        %v2865 = vpop.f32.mrf.mxu0
        %2866 = vdwg.mxu0
        %v2867 = vadd.f32 %v2762, %v2849
        %v2868 = vadd.f32 %v2763, %v2852
        %v2869 = vld [vmem:[%s6] sm:$0x1]
        %v2871 = vlaneseq
        %v2872 = vshrl.u32 %v2871, 7
        %v2873 = vsub.s32 0, %v2872
        %v2874 = vrot.slane %v2869, %v2873
        %v2876 = vadd.f32 %v2867, %v2874
        %v2877 = vadd.f32 %v2868, %v2874
        %v2878 = vmax.f32 %v2876, 0.0
        %v2879 = vmax.f32 %v2877, 0.0
        %v2880 = vld [vmem:[%s8] sm:$0xf]
        %v2881 = vpack.c.bf16 %v2878, %v2878
        %v2882 = vld [vmem:[%s7] sm:$0xff]
        %v2883 = vld [vmem:[%s7 + $0x8] sm:$0xff]
        %v2884 = vld [vmem:[%s7 + $0x10] sm:$0xff]
        %v2885 = vld [vmem:[%s7 + $0x18] sm:$0xff]
        %v2886 = vld [vmem:[%s7 + $0x20] sm:$0xff]
        %v2887 = vld [vmem:[%s7 + $0x28] sm:$0xff]
        %v2888 = vld [vmem:[%s7 + $0x30] sm:$0xff]
        %v2889 = vld [vmem:[%s7 + $0x38] sm:$0xff]
        %v2890 = vld [vmem:[%s7 + $0x40] sm:$0xff]
        %v2891 = vld [vmem:[%s7 + $0x48] sm:$0xff]
        %v2892 = vld [vmem:[%s7 + $0x50] sm:$0xff]
        %v2893 = vld [vmem:[%s7 + $0x58] sm:$0xff]
        %v2894 = vld [vmem:[%s7 + $0x60] sm:$0xff]
        %v2895 = vld [vmem:[%s7 + $0x68] sm:$0xff]
        %v2896 = vld [vmem:[%s7 + $0x70] sm:$0xff]
        %v2897 = vld [vmem:[%s7 + $0x78] sm:$0xff]
        %v2914 = vunpack.c.l.b16 %v2882
        %v2915 = vunpack.c.h.b16 %v2882
        %v2916 = vunpack.c.l.b16 %v2883
        %v2917 = vunpack.c.h.b16 %v2883
        %v2918 = vunpack.c.l.b16 %v2884
        %v2919 = vunpack.c.h.b16 %v2884
        %v2920 = vunpack.c.l.b16 %v2885
        %v2921 = vunpack.c.h.b16 %v2885
        %v2922 = vunpack.c.l.b16 %v2886
        %v2923 = vunpack.c.h.b16 %v2886
        %v2924 = vunpack.c.l.b16 %v2887
        %v2925 = vunpack.c.h.b16 %v2887
        %v2926 = vunpack.c.l.b16 %v2888
        %v2927 = vunpack.c.h.b16 %v2888
        %v2928 = vunpack.c.l.b16 %v2889
        %v2929 = vunpack.c.h.b16 %v2889
        %v2930 = vunpack.c.l.b16 %v2890
        %v2931 = vunpack.c.h.b16 %v2890
        %v2932 = vunpack.c.l.b16 %v2891
        %v2933 = vunpack.c.h.b16 %v2891
        %v2934 = vunpack.c.l.b16 %v2892
        %v2935 = vunpack.c.h.b16 %v2892
        %v2936 = vunpack.c.l.b16 %v2893
        %v2937 = vunpack.c.h.b16 %v2893
        %v2938 = vunpack.c.l.b16 %v2894
        %v2939 = vunpack.c.h.b16 %v2894
        %v2940 = vunpack.c.l.b16 %v2895
        %v2941 = vunpack.c.h.b16 %v2895
        %v2942 = vunpack.c.l.b16 %v2896
        %v2943 = vunpack.c.h.b16 %v2896
        %v2944 = vunpack.c.l.b16 %v2897
        %v2945 = vunpack.c.h.b16 %v2897
        %v2946 = vpack.c.b16 %v2918, %v2914
        %v2947 = vpack.c.b16 %v2919, %v2915
        %v2948 = vpack.c.b16 %v2920, %v2916
        %v2949 = vpack.c.b16 %v2921, %v2917
        %v2950 = vpack.c.b16 %v2926, %v2922
        %v2951 = vpack.c.b16 %v2927, %v2923
        %v2952 = vpack.c.b16 %v2928, %v2924
        %v2953 = vpack.c.b16 %v2929, %v2925
        %v2954 = vpack.c.b16 %v2934, %v2930
        %v2955 = vpack.c.b16 %v2935, %v2931
        %v2956 = vpack.c.b16 %v2936, %v2932
        %v2957 = vpack.c.b16 %v2937, %v2933
        %v2958 = vpack.c.b16 %v2942, %v2938
        %v2959 = vpack.c.b16 %v2943, %v2939
        %v2960 = vpack.c.b16 %v2944, %v2940
        %v2961 = vpack.c.b16 %v2945, %v2941
        %v2979 = vsel %vm391, %v2881, 0
        %2981 = vmatprep.subr.bf16.mxu0 0
        %2982 = vmatpush1.bf16.msra.mxu0 0
        %2983 = vmatprep.subr.bf16.mxu0 0
        %2984 = vmatpush1.bf16.msra.mxu0 0
        %2985 = vmatprep.subr.bf16.mxu0 0
        %2986 = vmatpush1.bf16.msra.mxu0 0
        %2987 = vmatprep.subr.bf16.mxu0 0
        %2988 = vmatpush1.bf16.msra.mxu0 0
        %2989 = vmatprep.subr.bf16.mxu0 %v2959
        %2990 = vmatpush1.bf16.msra.mxu0 %v2958
        %2991 = vmatprep.subr.bf16.mxu0 %v2955
        %2992 = vmatpush1.bf16.msra.mxu0 %v2954
        %2993 = vmatprep.subr.bf16.mxu0 %v2951
        %2994 = vmatpush1.bf16.msra.mxu0 %v2950
        %2995 = vmatprep.subr.bf16.mxu0 %v2947
        %2996 = vmatpush1.bf16.msra.mxu0 %v2946
        %2997 = vmatprep.subr.bf16.mxu0 0
        %2998 = vmatpush2.bf16.msra.mxu0 0
        %2999 = vmatprep.subr.bf16.mxu0 0
        %3000 = vmatpush2.bf16.msra.mxu0 0
        %3001 = vmatprep.subr.bf16.mxu0 0
        %3002 = vmatpush2.bf16.msra.mxu0 0
        %3003 = vmatprep.subr.bf16.mxu0 0
        %3004 = vmatpush2.bf16.msra.mxu0 0
        %3005 = vmatprep.subr.bf16.mxu0 0
        %3006 = vmatpush2.bf16.msra.mxu0 0
        %3007 = vmatprep.subr.bf16.mxu0 0
        %3008 = vmatpush2.bf16.msra.mxu0 0
        %3009 = vmatprep.subr.bf16.mxu0 0
        %3010 = vmatpush2.bf16.msra.mxu0 0
        %3011 = vmatprep.subr.bf16.mxu0 0
        %3012 = vmatpush2.bf16.msra.mxu0 0
        %3013 = vmatprep.mubr.bf16.mxu0 0
        %3014 = vmatmul.mubr.bf16.gmra.mxu0 %v2979
        %v3015 = vpop.f32.mrf.mxu0
        %v3016 = vadd.f32 0.0, %v3015
        %v3017 = vpop.f32.mrf.mxu0
        %v3018 = vadd.f32 0.0, %v3017
        %v3019 = vpop.f32.mrf.mxu0
        %v3020 = vpop.f32.mrf.mxu0
        %3021 = vdwg.mxu0
        %3022 = vmatprep.subr.bf16.mxu0 0
        %3023 = vmatpush1.bf16.msra.mxu0 0
        %3024 = vmatprep.subr.bf16.mxu0 0
        %3025 = vmatpush1.bf16.msra.mxu0 0
        %3026 = vmatprep.subr.bf16.mxu0 0
        %3027 = vmatpush1.bf16.msra.mxu0 0
        %3028 = vmatprep.subr.bf16.mxu0 0
        %3029 = vmatpush1.bf16.msra.mxu0 0
        %3030 = vmatprep.subr.bf16.mxu0 %v2961
        %3031 = vmatpush1.bf16.msra.mxu0 %v2960
        %3032 = vmatprep.subr.bf16.mxu0 %v2957
        %3033 = vmatpush1.bf16.msra.mxu0 %v2956
        %3034 = vmatprep.subr.bf16.mxu0 %v2953
        %3035 = vmatpush1.bf16.msra.mxu0 %v2952
        %3036 = vmatprep.subr.bf16.mxu0 %v2949
        %3037 = vmatpush1.bf16.msra.mxu0 %v2948
        %3038 = vmatprep.subr.bf16.mxu0 0
        %3039 = vmatpush2.bf16.msra.mxu0 0
        %3040 = vmatprep.subr.bf16.mxu0 0
        %3041 = vmatpush2.bf16.msra.mxu0 0
        %3042 = vmatprep.subr.bf16.mxu0 0
        %3043 = vmatpush2.bf16.msra.mxu0 0
        %3044 = vmatprep.subr.bf16.mxu0 0
        %3045 = vmatpush2.bf16.msra.mxu0 0
        %3046 = vmatprep.subr.bf16.mxu0 0
        %3047 = vmatpush2.bf16.msra.mxu0 0
        %3048 = vmatprep.subr.bf16.mxu0 0
        %3049 = vmatpush2.bf16.msra.mxu0 0
        %3050 = vmatprep.subr.bf16.mxu0 0
        %3051 = vmatpush2.bf16.msra.mxu0 0
        %3052 = vmatprep.subr.bf16.mxu0 0
        %3053 = vmatpush2.bf16.msra.mxu0 0
        %3054 = vmatprep.mubr.bf16.mxu0 0
        %3055 = vmatmul.mubr.bf16.gmra.mxu0 %v2979
        %v3056 = vpop.f32.mrf.mxu0
        %v3057 = vadd.f32 0.0, %v3056
        %v3058 = vpop.f32.mrf.mxu0
        %v3059 = vadd.f32 0.0, %v3058
        %v3060 = vpop.f32.mrf.mxu0
        %v3061 = vpop.f32.mrf.mxu0
        %3062 = vdwg.mxu0
        %v3067 = vcombine.low %v3016, %v3018
        %v3068 = vcombine.low %v3057, %v3059
        %v3070 = vunpack.c.l.s4 1966171168
        %v3071 = vunpack.c.0.s8 %v3070
        %v3072 = vlaneseq
        %v3073 = vshrl.u32 %v3072, 7
        %v3074 = vsub.s32 %v3071, %v3073
        %v3075 = vrot.slane %v3067, %v3074
        %v3077 = vunpack.c.l.s4 1966171168
        %v3078 = vunpack.c.0.s8 %v3077
        %v3079 = vlaneseq
        %v3080 = vshrl.u32 %v3079, 7
        %v3081 = vsub.s32 %v3078, %v3080
        %v3082 = vrot.slane %v3068, %v3081
        %v3083 = vcombine.low %v3075, %v3082
        %v3085 = vunpack.c.l.s4 1966171168
        %v3086 = vunpack.c.0.s8 %v3085
        %v3087 = vlaneseq
        %v3088 = vshrl.u32 %v3087, 7
        %v3089 = vsub.s32 %v3086, %v3088
        %v3090 = vrot.slane %v3083, %v3089
        %v3092 = vadd.f32 %v2880, %v3090
        %s3093 = scalar_lea.vmem %s7, 128
        %v3094 = vld [vmem:[%s3093] sm:$0xff]
        %v3095 = vld [vmem:[%s3093 + $0x8] sm:$0xff]
        %v3096 = vld [vmem:[%s3093 + $0x10] sm:$0xff]
        %v3097 = vld [vmem:[%s3093 + $0x18] sm:$0xff]
        %v3098 = vld [vmem:[%s3093 + $0x20] sm:$0xff]
        %v3099 = vld [vmem:[%s3093 + $0x28] sm:$0xff]
        %v3100 = vld [vmem:[%s3093 + $0x30] sm:$0xff]
        %v3101 = vld [vmem:[%s3093 + $0x38] sm:$0xff]
        %v3102 = vld [vmem:[%s3093 + $0x40] sm:$0xff]
        %v3103 = vld [vmem:[%s3093 + $0x48] sm:$0xff]
        %v3104 = vld [vmem:[%s3093 + $0x50] sm:$0xff]
        %v3105 = vld [vmem:[%s3093 + $0x58] sm:$0xff]
        %v3106 = vld [vmem:[%s3093 + $0x60] sm:$0xff]
        %v3107 = vld [vmem:[%s3093 + $0x68] sm:$0xff]
        %v3108 = vld [vmem:[%s3093 + $0x70] sm:$0xff]
        %v3109 = vld [vmem:[%s3093 + $0x78] sm:$0xff]
        %v3110 = vshrl.u32 %v2881, 16
        %v3128 = vunpack.c.l.b16 %v3094
        %v3129 = vunpack.c.h.b16 %v3094
        %v3130 = vunpack.c.l.b16 %v3095
        %v3131 = vunpack.c.h.b16 %v3095
        %v3132 = vunpack.c.l.b16 %v3096
        %v3133 = vunpack.c.h.b16 %v3096
        %v3134 = vunpack.c.l.b16 %v3097
        %v3135 = vunpack.c.h.b16 %v3097
        %v3136 = vunpack.c.l.b16 %v3098
        %v3137 = vunpack.c.h.b16 %v3098
        %v3138 = vunpack.c.l.b16 %v3099
        %v3139 = vunpack.c.h.b16 %v3099
        %v3140 = vunpack.c.l.b16 %v3100
        %v3141 = vunpack.c.h.b16 %v3100
        %v3142 = vunpack.c.l.b16 %v3101
        %v3143 = vunpack.c.h.b16 %v3101
        %v3144 = vunpack.c.l.b16 %v3102
        %v3145 = vunpack.c.h.b16 %v3102
        %v3146 = vunpack.c.l.b16 %v3103
        %v3147 = vunpack.c.h.b16 %v3103
        %v3148 = vunpack.c.l.b16 %v3104
        %v3149 = vunpack.c.h.b16 %v3104
        %v3150 = vunpack.c.l.b16 %v3105
        %v3151 = vunpack.c.h.b16 %v3105
        %v3152 = vunpack.c.l.b16 %v3106
        %v3153 = vunpack.c.h.b16 %v3106
        %v3154 = vunpack.c.l.b16 %v3107
        %v3155 = vunpack.c.h.b16 %v3107
        %v3156 = vunpack.c.l.b16 %v3108
        %v3157 = vunpack.c.h.b16 %v3108
        %v3158 = vunpack.c.l.b16 %v3109
        %v3159 = vunpack.c.h.b16 %v3109
        %v3160 = vpack.c.b16 %v3132, %v3128
        %v3161 = vpack.c.b16 %v3133, %v3129
        %v3162 = vpack.c.b16 %v3134, %v3130
        %v3163 = vpack.c.b16 %v3135, %v3131
        %v3164 = vpack.c.b16 %v3140, %v3136
        %v3165 = vpack.c.b16 %v3141, %v3137
        %v3166 = vpack.c.b16 %v3142, %v3138
        %v3167 = vpack.c.b16 %v3143, %v3139
        %v3168 = vpack.c.b16 %v3148, %v3144
        %v3169 = vpack.c.b16 %v3149, %v3145
        %v3170 = vpack.c.b16 %v3150, %v3146
        %v3171 = vpack.c.b16 %v3151, %v3147
        %v3172 = vpack.c.b16 %v3156, %v3152
        %v3173 = vpack.c.b16 %v3157, %v3153
        %v3174 = vpack.c.b16 %v3158, %v3154
        %v3175 = vpack.c.b16 %v3159, %v3155
        %v3193 = vsel %vm391, %v3110, 0
        %3195 = vmatprep.subr.bf16.mxu0 0
        %3196 = vmatpush1.bf16.msra.mxu0 0
        %3197 = vmatprep.subr.bf16.mxu0 0
        %3198 = vmatpush1.bf16.msra.mxu0 0
        %3199 = vmatprep.subr.bf16.mxu0 0
        %3200 = vmatpush1.bf16.msra.mxu0 0
        %3201 = vmatprep.subr.bf16.mxu0 0
        %3202 = vmatpush1.bf16.msra.mxu0 0
        %3203 = vmatprep.subr.bf16.mxu0 %v3173
        %3204 = vmatpush1.bf16.msra.mxu0 %v3172
        %3205 = vmatprep.subr.bf16.mxu0 %v3169
        %3206 = vmatpush1.bf16.msra.mxu0 %v3168
        %3207 = vmatprep.subr.bf16.mxu0 %v3165
        %3208 = vmatpush1.bf16.msra.mxu0 %v3164
        %3209 = vmatprep.subr.bf16.mxu0 %v3161
        %3210 = vmatpush1.bf16.msra.mxu0 %v3160
        %3211 = vmatprep.subr.bf16.mxu0 0
        %3212 = vmatpush2.bf16.msra.mxu0 0
        %3213 = vmatprep.subr.bf16.mxu0 0
        %3214 = vmatpush2.bf16.msra.mxu0 0
        %3215 = vmatprep.subr.bf16.mxu0 0
        %3216 = vmatpush2.bf16.msra.mxu0 0
        %3217 = vmatprep.subr.bf16.mxu0 0
        %3218 = vmatpush2.bf16.msra.mxu0 0
        %3219 = vmatprep.subr.bf16.mxu0 0
        %3220 = vmatpush2.bf16.msra.mxu0 0
        %3221 = vmatprep.subr.bf16.mxu0 0
        %3222 = vmatpush2.bf16.msra.mxu0 0
        %3223 = vmatprep.subr.bf16.mxu0 0
        %3224 = vmatpush2.bf16.msra.mxu0 0
        %3225 = vmatprep.subr.bf16.mxu0 0
        %3226 = vmatpush2.bf16.msra.mxu0 0
        %3227 = vmatprep.mubr.bf16.mxu0 0
        %3228 = vmatmul.mubr.bf16.gmra.mxu0 %v3193
        %v3229 = vpop.f32.mrf.mxu0
        %v3230 = vadd.f32 0.0, %v3229
        %v3231 = vpop.f32.mrf.mxu0
        %v3232 = vadd.f32 0.0, %v3231
        %v3233 = vpop.f32.mrf.mxu0
        %v3234 = vpop.f32.mrf.mxu0
        %3235 = vdwg.mxu0
        %3236 = vmatprep.subr.bf16.mxu0 0
        %3237 = vmatpush1.bf16.msra.mxu0 0
        %3238 = vmatprep.subr.bf16.mxu0 0
        %3239 = vmatpush1.bf16.msra.mxu0 0
        %3240 = vmatprep.subr.bf16.mxu0 0
        %3241 = vmatpush1.bf16.msra.mxu0 0
        %3242 = vmatprep.subr.bf16.mxu0 0
        %3243 = vmatpush1.bf16.msra.mxu0 0
        %3244 = vmatprep.subr.bf16.mxu0 %v3175
        %3245 = vmatpush1.bf16.msra.mxu0 %v3174
        %3246 = vmatprep.subr.bf16.mxu0 %v3171
        %3247 = vmatpush1.bf16.msra.mxu0 %v3170
        %3248 = vmatprep.subr.bf16.mxu0 %v3167
        %3249 = vmatpush1.bf16.msra.mxu0 %v3166
        %3250 = vmatprep.subr.bf16.mxu0 %v3163
        %3251 = vmatpush1.bf16.msra.mxu0 %v3162
        %3252 = vmatprep.subr.bf16.mxu0 0
        %3253 = vmatpush2.bf16.msra.mxu0 0
        %3254 = vmatprep.subr.bf16.mxu0 0
        %3255 = vmatpush2.bf16.msra.mxu0 0
        %3256 = vmatprep.subr.bf16.mxu0 0
        %3257 = vmatpush2.bf16.msra.mxu0 0
        %3258 = vmatprep.subr.bf16.mxu0 0
        %3259 = vmatpush2.bf16.msra.mxu0 0
        %3260 = vmatprep.subr.bf16.mxu0 0
        %3261 = vmatpush2.bf16.msra.mxu0 0
        %3262 = vmatprep.subr.bf16.mxu0 0
        %3263 = vmatpush2.bf16.msra.mxu0 0
        %3264 = vmatprep.subr.bf16.mxu0 0
        %3265 = vmatpush2.bf16.msra.mxu0 0
        %3266 = vmatprep.subr.bf16.mxu0 0
        %3267 = vmatpush2.bf16.msra.mxu0 0
        %3268 = vmatprep.mubr.bf16.mxu0 0
        %3269 = vmatmul.mubr.bf16.gmra.mxu0 %v3193
        %v3270 = vpop.f32.mrf.mxu0
        %v3271 = vadd.f32 0.0, %v3270
        %v3272 = vpop.f32.mrf.mxu0
        %v3273 = vadd.f32 0.0, %v3272
        %v3274 = vpop.f32.mrf.mxu0
        %v3275 = vpop.f32.mrf.mxu0
        %3276 = vdwg.mxu0
        %v3281 = vcombine.low %v3230, %v3232
        %v3282 = vcombine.low %v3271, %v3273
        %v3284 = vunpack.c.l.s4 1966171168
        %v3285 = vunpack.c.0.s8 %v3284
        %v3286 = vlaneseq
        %v3287 = vshrl.u32 %v3286, 7
        %v3288 = vsub.s32 %v3285, %v3287
        %v3289 = vrot.slane %v3281, %v3288
        %v3291 = vunpack.c.l.s4 1966171168
        %v3292 = vunpack.c.0.s8 %v3291
        %v3293 = vlaneseq
        %v3294 = vshrl.u32 %v3293, 7
        %v3295 = vsub.s32 %v3292, %v3294
        %v3296 = vrot.slane %v3282, %v3295
        %v3297 = vcombine.low %v3289, %v3296
        %v3299 = vunpack.c.l.s4 1966171168
        %v3300 = vunpack.c.0.s8 %v3299
        %v3301 = vlaneseq
        %v3302 = vshrl.u32 %v3301, 7
        %v3303 = vsub.s32 %v3300, %v3302
        %v3304 = vrot.slane %v3297, %v3303
        %v3306 = vadd.f32 %v3092, %v3304
        %s3307 = scalar_lea.vmem %s7, 256
        %v3308 = vld [vmem:[%s3307] sm:$0xff]
        %v3309 = vld [vmem:[%s3307 + $0x8] sm:$0xff]
        %v3310 = vld [vmem:[%s3307 + $0x10] sm:$0xff]
        %v3311 = vld [vmem:[%s3307 + $0x18] sm:$0xff]
        %v3312 = vld [vmem:[%s3307 + $0x20] sm:$0xff]
        %v3313 = vld [vmem:[%s3307 + $0x28] sm:$0xff]
        %v3314 = vld [vmem:[%s3307 + $0x30] sm:$0xff]
        %v3315 = vld [vmem:[%s3307 + $0x38] sm:$0xff]
        %v3316 = vld [vmem:[%s3307 + $0x40] sm:$0xff]
        %v3317 = vld [vmem:[%s3307 + $0x48] sm:$0xff]
        %v3318 = vld [vmem:[%s3307 + $0x50] sm:$0xff]
        %v3319 = vld [vmem:[%s3307 + $0x58] sm:$0xff]
        %v3320 = vld [vmem:[%s3307 + $0x60] sm:$0xff]
        %v3321 = vld [vmem:[%s3307 + $0x68] sm:$0xff]
        %v3322 = vld [vmem:[%s3307 + $0x70] sm:$0xff]
        %v3323 = vld [vmem:[%s3307 + $0x78] sm:$0xff]
        %v3325 = vrot.slane %v2881, 1
        %v3342 = vunpack.c.l.b16 %v3308
        %v3343 = vunpack.c.h.b16 %v3308
        %v3344 = vunpack.c.l.b16 %v3309
        %v3345 = vunpack.c.h.b16 %v3309
        %v3346 = vunpack.c.l.b16 %v3310
        %v3347 = vunpack.c.h.b16 %v3310
        %v3348 = vunpack.c.l.b16 %v3311
        %v3349 = vunpack.c.h.b16 %v3311
        %v3350 = vunpack.c.l.b16 %v3312
        %v3351 = vunpack.c.h.b16 %v3312
        %v3352 = vunpack.c.l.b16 %v3313
        %v3353 = vunpack.c.h.b16 %v3313
        %v3354 = vunpack.c.l.b16 %v3314
        %v3355 = vunpack.c.h.b16 %v3314
        %v3356 = vunpack.c.l.b16 %v3315
        %v3357 = vunpack.c.h.b16 %v3315
        %v3358 = vunpack.c.l.b16 %v3316
        %v3359 = vunpack.c.h.b16 %v3316
        %v3360 = vunpack.c.l.b16 %v3317
        %v3361 = vunpack.c.h.b16 %v3317
        %v3362 = vunpack.c.l.b16 %v3318
        %v3363 = vunpack.c.h.b16 %v3318
        %v3364 = vunpack.c.l.b16 %v3319
        %v3365 = vunpack.c.h.b16 %v3319
        %v3366 = vunpack.c.l.b16 %v3320
        %v3367 = vunpack.c.h.b16 %v3320
        %v3368 = vunpack.c.l.b16 %v3321
        %v3369 = vunpack.c.h.b16 %v3321
        %v3370 = vunpack.c.l.b16 %v3322
        %v3371 = vunpack.c.h.b16 %v3322
        %v3372 = vunpack.c.l.b16 %v3323
        %v3373 = vunpack.c.h.b16 %v3323
        %v3374 = vpack.c.b16 %v3346, %v3342
        %v3375 = vpack.c.b16 %v3347, %v3343
        %v3376 = vpack.c.b16 %v3348, %v3344
        %v3377 = vpack.c.b16 %v3349, %v3345
        %v3378 = vpack.c.b16 %v3354, %v3350
        %v3379 = vpack.c.b16 %v3355, %v3351
        %v3380 = vpack.c.b16 %v3356, %v3352
        %v3381 = vpack.c.b16 %v3357, %v3353
        %v3382 = vpack.c.b16 %v3362, %v3358
        %v3383 = vpack.c.b16 %v3363, %v3359
        %v3384 = vpack.c.b16 %v3364, %v3360
        %v3385 = vpack.c.b16 %v3365, %v3361
        %v3386 = vpack.c.b16 %v3370, %v3366
        %v3387 = vpack.c.b16 %v3371, %v3367
        %v3388 = vpack.c.b16 %v3372, %v3368
        %v3389 = vpack.c.b16 %v3373, %v3369
        %v3407 = vsel %vm391, %v3325, 0
        %3409 = vmatprep.subr.bf16.mxu0 0
        %3410 = vmatpush1.bf16.msra.mxu0 0
        %3411 = vmatprep.subr.bf16.mxu0 0
        %3412 = vmatpush1.bf16.msra.mxu0 0
        %3413 = vmatprep.subr.bf16.mxu0 0
        %3414 = vmatpush1.bf16.msra.mxu0 0
        %3415 = vmatprep.subr.bf16.mxu0 0
        %3416 = vmatpush1.bf16.msra.mxu0 0
        %3417 = vmatprep.subr.bf16.mxu0 %v3387
        %3418 = vmatpush1.bf16.msra.mxu0 %v3386
        %3419 = vmatprep.subr.bf16.mxu0 %v3383
        %3420 = vmatpush1.bf16.msra.mxu0 %v3382
        %3421 = vmatprep.subr.bf16.mxu0 %v3379
        %3422 = vmatpush1.bf16.msra.mxu0 %v3378
        %3423 = vmatprep.subr.bf16.mxu0 %v3375
        %3424 = vmatpush1.bf16.msra.mxu0 %v3374
        %3425 = vmatprep.subr.bf16.mxu0 0
        %3426 = vmatpush2.bf16.msra.mxu0 0
        %3427 = vmatprep.subr.bf16.mxu0 0
        %3428 = vmatpush2.bf16.msra.mxu0 0
        %3429 = vmatprep.subr.bf16.mxu0 0
        %3430 = vmatpush2.bf16.msra.mxu0 0
        %3431 = vmatprep.subr.bf16.mxu0 0
        %3432 = vmatpush2.bf16.msra.mxu0 0
        %3433 = vmatprep.subr.bf16.mxu0 0
        %3434 = vmatpush2.bf16.msra.mxu0 0
        %3435 = vmatprep.subr.bf16.mxu0 0
        %3436 = vmatpush2.bf16.msra.mxu0 0
        %3437 = vmatprep.subr.bf16.mxu0 0
        %3438 = vmatpush2.bf16.msra.mxu0 0
        %3439 = vmatprep.subr.bf16.mxu0 0
        %3440 = vmatpush2.bf16.msra.mxu0 0
        %3441 = vmatprep.mubr.bf16.mxu0 0
        %3442 = vmatmul.mubr.bf16.gmra.mxu0 %v3407
        %v3443 = vpop.f32.mrf.mxu0
        %v3444 = vadd.f32 0.0, %v3443
        %v3445 = vpop.f32.mrf.mxu0
        %v3446 = vadd.f32 0.0, %v3445
        %v3447 = vpop.f32.mrf.mxu0
        %v3448 = vpop.f32.mrf.mxu0
        %3449 = vdwg.mxu0
        %3450 = vmatprep.subr.bf16.mxu0 0
        %3451 = vmatpush1.bf16.msra.mxu0 0
        %3452 = vmatprep.subr.bf16.mxu0 0
        %3453 = vmatpush1.bf16.msra.mxu0 0
        %3454 = vmatprep.subr.bf16.mxu0 0
        %3455 = vmatpush1.bf16.msra.mxu0 0
        %3456 = vmatprep.subr.bf16.mxu0 0
        %3457 = vmatpush1.bf16.msra.mxu0 0
        %3458 = vmatprep.subr.bf16.mxu0 %v3389
        %3459 = vmatpush1.bf16.msra.mxu0 %v3388
        %3460 = vmatprep.subr.bf16.mxu0 %v3385
        %3461 = vmatpush1.bf16.msra.mxu0 %v3384
        %3462 = vmatprep.subr.bf16.mxu0 %v3381
        %3463 = vmatpush1.bf16.msra.mxu0 %v3380
        %3464 = vmatprep.subr.bf16.mxu0 %v3377
        %3465 = vmatpush1.bf16.msra.mxu0 %v3376
        %3466 = vmatprep.subr.bf16.mxu0 0
        %3467 = vmatpush2.bf16.msra.mxu0 0
        %3468 = vmatprep.subr.bf16.mxu0 0
        %3469 = vmatpush2.bf16.msra.mxu0 0
        %3470 = vmatprep.subr.bf16.mxu0 0
        %3471 = vmatpush2.bf16.msra.mxu0 0
        %3472 = vmatprep.subr.bf16.mxu0 0
        %3473 = vmatpush2.bf16.msra.mxu0 0
        %3474 = vmatprep.subr.bf16.mxu0 0
        %3475 = vmatpush2.bf16.msra.mxu0 0
        %3476 = vmatprep.subr.bf16.mxu0 0
        %3477 = vmatpush2.bf16.msra.mxu0 0
        %3478 = vmatprep.subr.bf16.mxu0 0
        %3479 = vmatpush2.bf16.msra.mxu0 0
        %3480 = vmatprep.subr.bf16.mxu0 0
        %3481 = vmatpush2.bf16.msra.mxu0 0
        %3482 = vmatprep.mubr.bf16.mxu0 0
        %3483 = vmatmul.mubr.bf16.gmra.mxu0 %v3407
        %v3484 = vpop.f32.mrf.mxu0
        %v3485 = vadd.f32 0.0, %v3484
        %v3486 = vpop.f32.mrf.mxu0
        %v3487 = vadd.f32 0.0, %v3486
        %v3488 = vpop.f32.mrf.mxu0
        %v3489 = vpop.f32.mrf.mxu0
        %3490 = vdwg.mxu0
        %v3495 = vcombine.low %v3444, %v3446
        %v3496 = vcombine.low %v3485, %v3487
        %v3498 = vunpack.c.l.s4 1966171168
        %v3499 = vunpack.c.0.s8 %v3498
        %v3500 = vlaneseq
        %v3501 = vshrl.u32 %v3500, 7
        %v3502 = vsub.s32 %v3499, %v3501
        %v3503 = vrot.slane %v3495, %v3502
        %v3505 = vunpack.c.l.s4 1966171168
        %v3506 = vunpack.c.0.s8 %v3505
        %v3507 = vlaneseq
        %v3508 = vshrl.u32 %v3507, 7
        %v3509 = vsub.s32 %v3506, %v3508
        %v3510 = vrot.slane %v3496, %v3509
        %v3511 = vcombine.low %v3503, %v3510
        %v3513 = vunpack.c.l.s4 1966171168
        %v3514 = vunpack.c.0.s8 %v3513
        %v3515 = vlaneseq
        %v3516 = vshrl.u32 %v3515, 7
        %v3517 = vsub.s32 %v3514, %v3516
        %v3518 = vrot.slane %v3511, %v3517
        %v3520 = vadd.f32 %v3306, %v3518
        %s3521 = scalar_lea.vmem %s7, 384
        %v3522 = vld [vmem:[%s3521] sm:$0xff]
        %v3523 = vld [vmem:[%s3521 + $0x8] sm:$0xff]
        %v3524 = vld [vmem:[%s3521 + $0x10] sm:$0xff]
        %v3525 = vld [vmem:[%s3521 + $0x18] sm:$0xff]
        %v3526 = vld [vmem:[%s3521 + $0x20] sm:$0xff]
        %v3527 = vld [vmem:[%s3521 + $0x28] sm:$0xff]
        %v3528 = vld [vmem:[%s3521 + $0x30] sm:$0xff]
        %v3529 = vld [vmem:[%s3521 + $0x38] sm:$0xff]
        %v3530 = vld [vmem:[%s3521 + $0x40] sm:$0xff]
        %v3531 = vld [vmem:[%s3521 + $0x48] sm:$0xff]
        %v3532 = vld [vmem:[%s3521 + $0x50] sm:$0xff]
        %v3533 = vld [vmem:[%s3521 + $0x58] sm:$0xff]
        %v3534 = vld [vmem:[%s3521 + $0x60] sm:$0xff]
        %v3535 = vld [vmem:[%s3521 + $0x68] sm:$0xff]
        %v3536 = vld [vmem:[%s3521 + $0x70] sm:$0xff]
        %v3537 = vld [vmem:[%s3521 + $0x78] sm:$0xff]
        %v3538 = vrot.slane %v2881, 3
        %v3555 = vunpack.c.l.b16 %v3522
        %v3556 = vunpack.c.h.b16 %v3522
        %v3557 = vunpack.c.l.b16 %v3523
        %v3558 = vunpack.c.h.b16 %v3523
        %v3559 = vunpack.c.l.b16 %v3524
        %v3560 = vunpack.c.h.b16 %v3524
        %v3561 = vunpack.c.l.b16 %v3525
        %v3562 = vunpack.c.h.b16 %v3525
        %v3563 = vunpack.c.l.b16 %v3526
        %v3564 = vunpack.c.h.b16 %v3526
        %v3565 = vunpack.c.l.b16 %v3527
        %v3566 = vunpack.c.h.b16 %v3527
        %v3567 = vunpack.c.l.b16 %v3528
        %v3568 = vunpack.c.h.b16 %v3528
        %v3569 = vunpack.c.l.b16 %v3529
        %v3570 = vunpack.c.h.b16 %v3529
        %v3571 = vunpack.c.l.b16 %v3530
        %v3572 = vunpack.c.h.b16 %v3530
        %v3573 = vunpack.c.l.b16 %v3531
        %v3574 = vunpack.c.h.b16 %v3531
        %v3575 = vunpack.c.l.b16 %v3532
        %v3576 = vunpack.c.h.b16 %v3532
        %v3577 = vunpack.c.l.b16 %v3533
        %v3578 = vunpack.c.h.b16 %v3533
        %v3579 = vunpack.c.l.b16 %v3534
        %v3580 = vunpack.c.h.b16 %v3534
        %v3581 = vunpack.c.l.b16 %v3535
        %v3582 = vunpack.c.h.b16 %v3535
        %v3583 = vunpack.c.l.b16 %v3536
        %v3584 = vunpack.c.h.b16 %v3536
        %v3585 = vunpack.c.l.b16 %v3537
        %v3586 = vunpack.c.h.b16 %v3537
        %v3587 = vpack.c.b16 %v3559, %v3555
        %v3588 = vpack.c.b16 %v3560, %v3556
        %v3589 = vpack.c.b16 %v3561, %v3557
        %v3590 = vpack.c.b16 %v3562, %v3558
        %v3591 = vpack.c.b16 %v3567, %v3563
        %v3592 = vpack.c.b16 %v3568, %v3564
        %v3593 = vpack.c.b16 %v3569, %v3565
        %v3594 = vpack.c.b16 %v3570, %v3566
        %v3595 = vpack.c.b16 %v3575, %v3571
        %v3596 = vpack.c.b16 %v3576, %v3572
        %v3597 = vpack.c.b16 %v3577, %v3573
        %v3598 = vpack.c.b16 %v3578, %v3574
        %v3599 = vpack.c.b16 %v3583, %v3579
        %v3600 = vpack.c.b16 %v3584, %v3580
        %v3601 = vpack.c.b16 %v3585, %v3581
        %v3602 = vpack.c.b16 %v3586, %v3582
        %v3620 = vsel %vm391, %v3538, 0
        %3622 = vmatprep.subr.bf16.mxu0 0
        %3623 = vmatpush1.bf16.msra.mxu0 0
        %3624 = vmatprep.subr.bf16.mxu0 0
        %3625 = vmatpush1.bf16.msra.mxu0 0
        %3626 = vmatprep.subr.bf16.mxu0 0
        %3627 = vmatpush1.bf16.msra.mxu0 0
        %3628 = vmatprep.subr.bf16.mxu0 0
        %3629 = vmatpush1.bf16.msra.mxu0 0
        %3630 = vmatprep.subr.bf16.mxu0 %v3600
        %3631 = vmatpush1.bf16.msra.mxu0 %v3599
        %3632 = vmatprep.subr.bf16.mxu0 %v3596
        %3633 = vmatpush1.bf16.msra.mxu0 %v3595
        %3634 = vmatprep.subr.bf16.mxu0 %v3592
        %3635 = vmatpush1.bf16.msra.mxu0 %v3591
        %3636 = vmatprep.subr.bf16.mxu0 %v3588
        %3637 = vmatpush1.bf16.msra.mxu0 %v3587
        %3638 = vmatprep.subr.bf16.mxu0 0
        %3639 = vmatpush2.bf16.msra.mxu0 0
        %3640 = vmatprep.subr.bf16.mxu0 0
        %3641 = vmatpush2.bf16.msra.mxu0 0
        %3642 = vmatprep.subr.bf16.mxu0 0
        %3643 = vmatpush2.bf16.msra.mxu0 0
        %3644 = vmatprep.subr.bf16.mxu0 0
        %3645 = vmatpush2.bf16.msra.mxu0 0
        %3646 = vmatprep.subr.bf16.mxu0 0
        %3647 = vmatpush2.bf16.msra.mxu0 0
        %3648 = vmatprep.subr.bf16.mxu0 0
        %3649 = vmatpush2.bf16.msra.mxu0 0
        %3650 = vmatprep.subr.bf16.mxu0 0
        %3651 = vmatpush2.bf16.msra.mxu0 0
        %3652 = vmatprep.subr.bf16.mxu0 0
        %3653 = vmatpush2.bf16.msra.mxu0 0
        %3654 = vmatprep.mubr.bf16.mxu0 0
        %3655 = vmatmul.mubr.bf16.gmra.mxu0 %v3620
        %v3656 = vpop.f32.mrf.mxu0
        %v3657 = vadd.f32 0.0, %v3656
        %v3658 = vpop.f32.mrf.mxu0
        %v3659 = vadd.f32 0.0, %v3658
        %v3660 = vpop.f32.mrf.mxu0
        %v3661 = vpop.f32.mrf.mxu0
        %3662 = vdwg.mxu0
        %3663 = vmatprep.subr.bf16.mxu0 0
        %3664 = vmatpush1.bf16.msra.mxu0 0
        %3665 = vmatprep.subr.bf16.mxu0 0
        %3666 = vmatpush1.bf16.msra.mxu0 0
        %3667 = vmatprep.subr.bf16.mxu0 0
        %3668 = vmatpush1.bf16.msra.mxu0 0
        %3669 = vmatprep.subr.bf16.mxu0 0
        %3670 = vmatpush1.bf16.msra.mxu0 0
        %3671 = vmatprep.subr.bf16.mxu0 %v3602
        %3672 = vmatpush1.bf16.msra.mxu0 %v3601
        %3673 = vmatprep.subr.bf16.mxu0 %v3598
        %3674 = vmatpush1.bf16.msra.mxu0 %v3597
        %3675 = vmatprep.subr.bf16.mxu0 %v3594
        %3676 = vmatpush1.bf16.msra.mxu0 %v3593
        %3677 = vmatprep.subr.bf16.mxu0 %v3590
        %3678 = vmatpush1.bf16.msra.mxu0 %v3589
        %3679 = vmatprep.subr.bf16.mxu0 0
        %3680 = vmatpush2.bf16.msra.mxu0 0
        %3681 = vmatprep.subr.bf16.mxu0 0
        %3682 = vmatpush2.bf16.msra.mxu0 0
        %3683 = vmatprep.subr.bf16.mxu0 0
        %3684 = vmatpush2.bf16.msra.mxu0 0
        %3685 = vmatprep.subr.bf16.mxu0 0
        %3686 = vmatpush2.bf16.msra.mxu0 0
        %3687 = vmatprep.subr.bf16.mxu0 0
        %3688 = vmatpush2.bf16.msra.mxu0 0
        %3689 = vmatprep.subr.bf16.mxu0 0
        %3690 = vmatpush2.bf16.msra.mxu0 0
        %3691 = vmatprep.subr.bf16.mxu0 0
        %3692 = vmatpush2.bf16.msra.mxu0 0
        %3693 = vmatprep.subr.bf16.mxu0 0
        %3694 = vmatpush2.bf16.msra.mxu0 0
        %3695 = vmatprep.mubr.bf16.mxu0 0
        %3696 = vmatmul.mubr.bf16.gmra.mxu0 %v3620
        %v3697 = vpop.f32.mrf.mxu0
        %v3698 = vadd.f32 0.0, %v3697
        %v3699 = vpop.f32.mrf.mxu0
        %v3700 = vadd.f32 0.0, %v3699
        %v3701 = vpop.f32.mrf.mxu0
        %v3702 = vpop.f32.mrf.mxu0
        %3703 = vdwg.mxu0
        %v3708 = vcombine.low %v3657, %v3659
        %v3709 = vcombine.low %v3698, %v3700
        %v3711 = vunpack.c.l.s4 1966171168
        %v3712 = vunpack.c.0.s8 %v3711
        %v3713 = vlaneseq
        %v3714 = vshrl.u32 %v3713, 7
        %v3715 = vsub.s32 %v3712, %v3714
        %v3716 = vrot.slane %v3708, %v3715
        %v3718 = vunpack.c.l.s4 1966171168
        %v3719 = vunpack.c.0.s8 %v3718
        %v3720 = vlaneseq
        %v3721 = vshrl.u32 %v3720, 7
        %v3722 = vsub.s32 %v3719, %v3721
        %v3723 = vrot.slane %v3709, %v3722
        %v3724 = vcombine.low %v3716, %v3723
        %v3726 = vunpack.c.l.s4 1966171168
        %v3727 = vunpack.c.0.s8 %v3726
        %v3728 = vlaneseq
        %v3729 = vshrl.u32 %v3728, 7
        %v3730 = vsub.s32 %v3727, %v3729
        %v3731 = vrot.slane %v3724, %v3730
        %v3733 = vadd.f32 %v3520, %v3731
        %s3734 = scalar_lea.vmem %s7, 512
        %v3735 = vld [vmem:[%s3734] sm:$0xff]
        %v3736 = vld [vmem:[%s3734 + $0x8] sm:$0xff]
        %v3737 = vld [vmem:[%s3734 + $0x10] sm:$0xff]
        %v3738 = vld [vmem:[%s3734 + $0x18] sm:$0xff]
        %v3739 = vld [vmem:[%s3734 + $0x20] sm:$0xff]
        %v3740 = vld [vmem:[%s3734 + $0x28] sm:$0xff]
        %v3741 = vld [vmem:[%s3734 + $0x30] sm:$0xff]
        %v3742 = vld [vmem:[%s3734 + $0x38] sm:$0xff]
        %v3743 = vld [vmem:[%s3734 + $0x40] sm:$0xff]
        %v3744 = vld [vmem:[%s3734 + $0x48] sm:$0xff]
        %v3745 = vld [vmem:[%s3734 + $0x50] sm:$0xff]
        %v3746 = vld [vmem:[%s3734 + $0x58] sm:$0xff]
        %v3747 = vld [vmem:[%s3734 + $0x60] sm:$0xff]
        %v3748 = vld [vmem:[%s3734 + $0x68] sm:$0xff]
        %v3749 = vld [vmem:[%s3734 + $0x70] sm:$0xff]
        %v3750 = vld [vmem:[%s3734 + $0x78] sm:$0xff]
        %v3751 = vrot.slane %v3110, 3
        %v3768 = vunpack.c.l.b16 %v3735
        %v3769 = vunpack.c.h.b16 %v3735
        %v3770 = vunpack.c.l.b16 %v3736
        %v3771 = vunpack.c.h.b16 %v3736
        %v3772 = vunpack.c.l.b16 %v3737
        %v3773 = vunpack.c.h.b16 %v3737
        %v3774 = vunpack.c.l.b16 %v3738
        %v3775 = vunpack.c.h.b16 %v3738
        %v3776 = vunpack.c.l.b16 %v3739
        %v3777 = vunpack.c.h.b16 %v3739
        %v3778 = vunpack.c.l.b16 %v3740
        %v3779 = vunpack.c.h.b16 %v3740
        %v3780 = vunpack.c.l.b16 %v3741
        %v3781 = vunpack.c.h.b16 %v3741
        %v3782 = vunpack.c.l.b16 %v3742
        %v3783 = vunpack.c.h.b16 %v3742
        %v3784 = vunpack.c.l.b16 %v3743
        %v3785 = vunpack.c.h.b16 %v3743
        %v3786 = vunpack.c.l.b16 %v3744
        %v3787 = vunpack.c.h.b16 %v3744
        %v3788 = vunpack.c.l.b16 %v3745
        %v3789 = vunpack.c.h.b16 %v3745
        %v3790 = vunpack.c.l.b16 %v3746
        %v3791 = vunpack.c.h.b16 %v3746
        %v3792 = vunpack.c.l.b16 %v3747
        %v3793 = vunpack.c.h.b16 %v3747
        %v3794 = vunpack.c.l.b16 %v3748
        %v3795 = vunpack.c.h.b16 %v3748
        %v3796 = vunpack.c.l.b16 %v3749
        %v3797 = vunpack.c.h.b16 %v3749
        %v3798 = vunpack.c.l.b16 %v3750
        %v3799 = vunpack.c.h.b16 %v3750
        %v3800 = vpack.c.b16 %v3772, %v3768
        %v3801 = vpack.c.b16 %v3773, %v3769
        %v3802 = vpack.c.b16 %v3774, %v3770
        %v3803 = vpack.c.b16 %v3775, %v3771
        %v3804 = vpack.c.b16 %v3780, %v3776
        %v3805 = vpack.c.b16 %v3781, %v3777
        %v3806 = vpack.c.b16 %v3782, %v3778
        %v3807 = vpack.c.b16 %v3783, %v3779
        %v3808 = vpack.c.b16 %v3788, %v3784
        %v3809 = vpack.c.b16 %v3789, %v3785
        %v3810 = vpack.c.b16 %v3790, %v3786
        %v3811 = vpack.c.b16 %v3791, %v3787
        %v3812 = vpack.c.b16 %v3796, %v3792
        %v3813 = vpack.c.b16 %v3797, %v3793
        %v3814 = vpack.c.b16 %v3798, %v3794
        %v3815 = vpack.c.b16 %v3799, %v3795
        %v3833 = vsel %vm391, %v3751, 0
        %3835 = vmatprep.subr.bf16.mxu0 0
        %3836 = vmatpush1.bf16.msra.mxu0 0
        %3837 = vmatprep.subr.bf16.mxu0 0
        %3838 = vmatpush1.bf16.msra.mxu0 0
        %3839 = vmatprep.subr.bf16.mxu0 0
        %3840 = vmatpush1.bf16.msra.mxu0 0
        %3841 = vmatprep.subr.bf16.mxu0 0
        %3842 = vmatpush1.bf16.msra.mxu0 0
        %3843 = vmatprep.subr.bf16.mxu0 %v3813
        %3844 = vmatpush1.bf16.msra.mxu0 %v3812
        %3845 = vmatprep.subr.bf16.mxu0 %v3809
        %3846 = vmatpush1.bf16.msra.mxu0 %v3808
        %3847 = vmatprep.subr.bf16.mxu0 %v3805
        %3848 = vmatpush1.bf16.msra.mxu0 %v3804
        %3849 = vmatprep.subr.bf16.mxu0 %v3801
        %3850 = vmatpush1.bf16.msra.mxu0 %v3800
        %3851 = vmatprep.subr.bf16.mxu0 0
        %3852 = vmatpush2.bf16.msra.mxu0 0
        %3853 = vmatprep.subr.bf16.mxu0 0
        %3854 = vmatpush2.bf16.msra.mxu0 0
        %3855 = vmatprep.subr.bf16.mxu0 0
        %3856 = vmatpush2.bf16.msra.mxu0 0
        %3857 = vmatprep.subr.bf16.mxu0 0
        %3858 = vmatpush2.bf16.msra.mxu0 0
        %3859 = vmatprep.subr.bf16.mxu0 0
        %3860 = vmatpush2.bf16.msra.mxu0 0
        %3861 = vmatprep.subr.bf16.mxu0 0
        %3862 = vmatpush2.bf16.msra.mxu0 0
        %3863 = vmatprep.subr.bf16.mxu0 0
        %3864 = vmatpush2.bf16.msra.mxu0 0
        %3865 = vmatprep.subr.bf16.mxu0 0
        %3866 = vmatpush2.bf16.msra.mxu0 0
        %3867 = vmatprep.mubr.bf16.mxu0 0
        %3868 = vmatmul.mubr.bf16.gmra.mxu0 %v3833
        %v3869 = vpop.f32.mrf.mxu0
        %v3870 = vadd.f32 0.0, %v3869
        %v3871 = vpop.f32.mrf.mxu0
        %v3872 = vadd.f32 0.0, %v3871
        %v3873 = vpop.f32.mrf.mxu0
        %v3874 = vpop.f32.mrf.mxu0
        %3875 = vdwg.mxu0
        %3876 = vmatprep.subr.bf16.mxu0 0
        %3877 = vmatpush1.bf16.msra.mxu0 0
        %3878 = vmatprep.subr.bf16.mxu0 0
        %3879 = vmatpush1.bf16.msra.mxu0 0
        %3880 = vmatprep.subr.bf16.mxu0 0
        %3881 = vmatpush1.bf16.msra.mxu0 0
        %3882 = vmatprep.subr.bf16.mxu0 0
        %3883 = vmatpush1.bf16.msra.mxu0 0
        %3884 = vmatprep.subr.bf16.mxu0 %v3815
        %3885 = vmatpush1.bf16.msra.mxu0 %v3814
        %3886 = vmatprep.subr.bf16.mxu0 %v3811
        %3887 = vmatpush1.bf16.msra.mxu0 %v3810
        %3888 = vmatprep.subr.bf16.mxu0 %v3807
        %3889 = vmatpush1.bf16.msra.mxu0 %v3806
        %3890 = vmatprep.subr.bf16.mxu0 %v3803
        %3891 = vmatpush1.bf16.msra.mxu0 %v3802
        %3892 = vmatprep.subr.bf16.mxu0 0
        %3893 = vmatpush2.bf16.msra.mxu0 0
        %3894 = vmatprep.subr.bf16.mxu0 0
        %3895 = vmatpush2.bf16.msra.mxu0 0
        %3896 = vmatprep.subr.bf16.mxu0 0
        %3897 = vmatpush2.bf16.msra.mxu0 0
        %3898 = vmatprep.subr.bf16.mxu0 0
        %3899 = vmatpush2.bf16.msra.mxu0 0
        %3900 = vmatprep.subr.bf16.mxu0 0
        %3901 = vmatpush2.bf16.msra.mxu0 0
        %3902 = vmatprep.subr.bf16.mxu0 0
        %3903 = vmatpush2.bf16.msra.mxu0 0
        %3904 = vmatprep.subr.bf16.mxu0 0
        %3905 = vmatpush2.bf16.msra.mxu0 0
        %3906 = vmatprep.subr.bf16.mxu0 0
        %3907 = vmatpush2.bf16.msra.mxu0 0
        %3908 = vmatprep.mubr.bf16.mxu0 0
        %3909 = vmatmul.mubr.bf16.gmra.mxu0 %v3833
        %v3910 = vpop.f32.mrf.mxu0
        %v3911 = vadd.f32 0.0, %v3910
        %v3912 = vpop.f32.mrf.mxu0
        %v3913 = vadd.f32 0.0, %v3912
        %v3914 = vpop.f32.mrf.mxu0
        %v3915 = vpop.f32.mrf.mxu0
        %3916 = vdwg.mxu0
        %v3921 = vcombine.low %v3870, %v3872
        %v3922 = vcombine.low %v3911, %v3913
        %v3924 = vunpack.c.l.s4 1966171168
        %v3925 = vunpack.c.0.s8 %v3924
        %v3926 = vlaneseq
        %v3927 = vshrl.u32 %v3926, 7
        %v3928 = vsub.s32 %v3925, %v3927
        %v3929 = vrot.slane %v3921, %v3928
        %v3931 = vunpack.c.l.s4 1966171168
        %v3932 = vunpack.c.0.s8 %v3931
        %v3933 = vlaneseq
        %v3934 = vshrl.u32 %v3933, 7
        %v3935 = vsub.s32 %v3932, %v3934
        %v3936 = vrot.slane %v3922, %v3935
        %v3937 = vcombine.low %v3929, %v3936
        %v3939 = vunpack.c.l.s4 1966171168
        %v3940 = vunpack.c.0.s8 %v3939
        %v3941 = vlaneseq
        %v3942 = vshrl.u32 %v3941, 7
        %v3943 = vsub.s32 %v3940, %v3942
        %v3944 = vrot.slane %v3937, %v3943
        %v3946 = vadd.f32 %v3733, %v3944
        %v3947 = vpack.c.bf16 %v2879, %v2879
        %s3948 = scalar_lea.vmem %s7, 640
        %v3949 = vld [vmem:[%s3948] sm:$0xff]
        %v3950 = vld [vmem:[%s3948 + $0x8] sm:$0xff]
        %v3951 = vld [vmem:[%s3948 + $0x10] sm:$0xff]
        %v3952 = vld [vmem:[%s3948 + $0x18] sm:$0xff]
        %v3953 = vld [vmem:[%s3948 + $0x20] sm:$0xff]
        %v3954 = vld [vmem:[%s3948 + $0x28] sm:$0xff]
        %v3955 = vld [vmem:[%s3948 + $0x30] sm:$0xff]
        %v3956 = vld [vmem:[%s3948 + $0x38] sm:$0xff]
        %v3957 = vld [vmem:[%s3948 + $0x40] sm:$0xff]
        %v3958 = vld [vmem:[%s3948 + $0x48] sm:$0xff]
        %v3959 = vld [vmem:[%s3948 + $0x50] sm:$0xff]
        %v3960 = vld [vmem:[%s3948 + $0x58] sm:$0xff]
        %v3961 = vld [vmem:[%s3948 + $0x60] sm:$0xff]
        %v3962 = vld [vmem:[%s3948 + $0x68] sm:$0xff]
        %v3963 = vld [vmem:[%s3948 + $0x70] sm:$0xff]
        %v3964 = vld [vmem:[%s3948 + $0x78] sm:$0xff]
        %v3981 = vunpack.c.l.b16 %v3949
        %v3982 = vunpack.c.h.b16 %v3949
        %v3983 = vunpack.c.l.b16 %v3950
        %v3984 = vunpack.c.h.b16 %v3950
        %v3985 = vunpack.c.l.b16 %v3951
        %v3986 = vunpack.c.h.b16 %v3951
        %v3987 = vunpack.c.l.b16 %v3952
        %v3988 = vunpack.c.h.b16 %v3952
        %v3989 = vunpack.c.l.b16 %v3953
        %v3990 = vunpack.c.h.b16 %v3953
        %v3991 = vunpack.c.l.b16 %v3954
        %v3992 = vunpack.c.h.b16 %v3954
        %v3993 = vunpack.c.l.b16 %v3955
        %v3994 = vunpack.c.h.b16 %v3955
        %v3995 = vunpack.c.l.b16 %v3956
        %v3996 = vunpack.c.h.b16 %v3956
        %v3997 = vunpack.c.l.b16 %v3957
        %v3998 = vunpack.c.h.b16 %v3957
        %v3999 = vunpack.c.l.b16 %v3958
        %v4000 = vunpack.c.h.b16 %v3958
        %v4001 = vunpack.c.l.b16 %v3959
        %v4002 = vunpack.c.h.b16 %v3959
        %v4003 = vunpack.c.l.b16 %v3960
        %v4004 = vunpack.c.h.b16 %v3960
        %v4005 = vunpack.c.l.b16 %v3961
        %v4006 = vunpack.c.h.b16 %v3961
        %v4007 = vunpack.c.l.b16 %v3962
        %v4008 = vunpack.c.h.b16 %v3962
        %v4009 = vunpack.c.l.b16 %v3963
        %v4010 = vunpack.c.h.b16 %v3963
        %v4011 = vunpack.c.l.b16 %v3964
        %v4012 = vunpack.c.h.b16 %v3964
        %v4013 = vpack.c.b16 %v3985, %v3981
        %v4014 = vpack.c.b16 %v3986, %v3982
        %v4015 = vpack.c.b16 %v3987, %v3983
        %v4016 = vpack.c.b16 %v3988, %v3984
        %v4017 = vpack.c.b16 %v3993, %v3989
        %v4018 = vpack.c.b16 %v3994, %v3990
        %v4019 = vpack.c.b16 %v3995, %v3991
        %v4020 = vpack.c.b16 %v3996, %v3992
        %v4021 = vpack.c.b16 %v4001, %v3997
        %v4022 = vpack.c.b16 %v4002, %v3998
        %v4023 = vpack.c.b16 %v4003, %v3999
        %v4024 = vpack.c.b16 %v4004, %v4000
        %v4025 = vpack.c.b16 %v4009, %v4005
        %v4026 = vpack.c.b16 %v4010, %v4006
        %v4027 = vpack.c.b16 %v4011, %v4007
        %v4028 = vpack.c.b16 %v4012, %v4008
        %v4046 = vsel %vm391, %v3947, 0
        %4048 = vmatprep.subr.bf16.mxu0 0
        %4049 = vmatpush1.bf16.msra.mxu0 0
        %4050 = vmatprep.subr.bf16.mxu0 0
        %4051 = vmatpush1.bf16.msra.mxu0 0
        %4052 = vmatprep.subr.bf16.mxu0 0
        %4053 = vmatpush1.bf16.msra.mxu0 0
        %4054 = vmatprep.subr.bf16.mxu0 0
        %4055 = vmatpush1.bf16.msra.mxu0 0
        %4056 = vmatprep.subr.bf16.mxu0 %v4026
        %4057 = vmatpush1.bf16.msra.mxu0 %v4025
        %4058 = vmatprep.subr.bf16.mxu0 %v4022
        %4059 = vmatpush1.bf16.msra.mxu0 %v4021
        %4060 = vmatprep.subr.bf16.mxu0 %v4018
        %4061 = vmatpush1.bf16.msra.mxu0 %v4017
        %4062 = vmatprep.subr.bf16.mxu0 %v4014
        %4063 = vmatpush1.bf16.msra.mxu0 %v4013
        %4064 = vmatprep.subr.bf16.mxu0 0
        %4065 = vmatpush2.bf16.msra.mxu0 0
        %4066 = vmatprep.subr.bf16.mxu0 0
        %4067 = vmatpush2.bf16.msra.mxu0 0
        %4068 = vmatprep.subr.bf16.mxu0 0
        %4069 = vmatpush2.bf16.msra.mxu0 0
        %4070 = vmatprep.subr.bf16.mxu0 0
        %4071 = vmatpush2.bf16.msra.mxu0 0
        %4072 = vmatprep.subr.bf16.mxu0 0
        %4073 = vmatpush2.bf16.msra.mxu0 0
        %4074 = vmatprep.subr.bf16.mxu0 0
        %4075 = vmatpush2.bf16.msra.mxu0 0
        %4076 = vmatprep.subr.bf16.mxu0 0
        %4077 = vmatpush2.bf16.msra.mxu0 0
        %4078 = vmatprep.subr.bf16.mxu0 0
        %4079 = vmatpush2.bf16.msra.mxu0 0
        %4080 = vmatprep.mubr.bf16.mxu0 0
        %4081 = vmatmul.mubr.bf16.gmra.mxu0 %v4046
        %v4082 = vpop.f32.mrf.mxu0
        %v4083 = vadd.f32 0.0, %v4082
        %v4084 = vpop.f32.mrf.mxu0
        %v4085 = vadd.f32 0.0, %v4084
        %v4086 = vpop.f32.mrf.mxu0
        %v4087 = vpop.f32.mrf.mxu0
        %4088 = vdwg.mxu0
        %4089 = vmatprep.subr.bf16.mxu0 0
        %4090 = vmatpush1.bf16.msra.mxu0 0
        %4091 = vmatprep.subr.bf16.mxu0 0
        %4092 = vmatpush1.bf16.msra.mxu0 0
        %4093 = vmatprep.subr.bf16.mxu0 0
        %4094 = vmatpush1.bf16.msra.mxu0 0
        %4095 = vmatprep.subr.bf16.mxu0 0
        %4096 = vmatpush1.bf16.msra.mxu0 0
        %4097 = vmatprep.subr.bf16.mxu0 %v4028
        %4098 = vmatpush1.bf16.msra.mxu0 %v4027
        %4099 = vmatprep.subr.bf16.mxu0 %v4024
        %4100 = vmatpush1.bf16.msra.mxu0 %v4023
        %4101 = vmatprep.subr.bf16.mxu0 %v4020
        %4102 = vmatpush1.bf16.msra.mxu0 %v4019
        %4103 = vmatprep.subr.bf16.mxu0 %v4016
        %4104 = vmatpush1.bf16.msra.mxu0 %v4015
        %4105 = vmatprep.subr.bf16.mxu0 0
        %4106 = vmatpush2.bf16.msra.mxu0 0
        %4107 = vmatprep.subr.bf16.mxu0 0
        %4108 = vmatpush2.bf16.msra.mxu0 0
        %4109 = vmatprep.subr.bf16.mxu0 0
        %4110 = vmatpush2.bf16.msra.mxu0 0
        %4111 = vmatprep.subr.bf16.mxu0 0
        %4112 = vmatpush2.bf16.msra.mxu0 0
        %4113 = vmatprep.subr.bf16.mxu0 0
        %4114 = vmatpush2.bf16.msra.mxu0 0
        %4115 = vmatprep.subr.bf16.mxu0 0
        %4116 = vmatpush2.bf16.msra.mxu0 0
        %4117 = vmatprep.subr.bf16.mxu0 0
        %4118 = vmatpush2.bf16.msra.mxu0 0
        %4119 = vmatprep.subr.bf16.mxu0 0
        %4120 = vmatpush2.bf16.msra.mxu0 0
        %4121 = vmatprep.mubr.bf16.mxu0 0
        %4122 = vmatmul.mubr.bf16.gmra.mxu0 %v4046
        %v4123 = vpop.f32.mrf.mxu0
        %v4124 = vadd.f32 0.0, %v4123
        %v4125 = vpop.f32.mrf.mxu0
        %v4126 = vadd.f32 0.0, %v4125
        %v4127 = vpop.f32.mrf.mxu0
        %v4128 = vpop.f32.mrf.mxu0
        %4129 = vdwg.mxu0
        %v4134 = vcombine.low %v4083, %v4085
        %v4135 = vcombine.low %v4124, %v4126
        %v4137 = vunpack.c.l.s4 1966171168
        %v4138 = vunpack.c.0.s8 %v4137
        %v4139 = vlaneseq
        %v4140 = vshrl.u32 %v4139, 7
        %v4141 = vsub.s32 %v4138, %v4140
        %v4142 = vrot.slane %v4134, %v4141
        %v4144 = vunpack.c.l.s4 1966171168
        %v4145 = vunpack.c.0.s8 %v4144
        %v4146 = vlaneseq
        %v4147 = vshrl.u32 %v4146, 7
        %v4148 = vsub.s32 %v4145, %v4147
        %v4149 = vrot.slane %v4135, %v4148
        %v4150 = vcombine.low %v4142, %v4149
        %v4152 = vunpack.c.l.s4 1966171168
        %v4153 = vunpack.c.0.s8 %v4152
        %v4154 = vlaneseq
        %v4155 = vshrl.u32 %v4154, 7
        %v4156 = vsub.s32 %v4153, %v4155
        %v4157 = vrot.slane %v4150, %v4156
        %v4159 = vadd.f32 %v3946, %v4157
        %s4160 = scalar_lea.vmem %s7, 768
        %v4161 = vld [vmem:[%s4160] sm:$0xff]
        %v4162 = vld [vmem:[%s4160 + $0x8] sm:$0xff]
        %v4163 = vld [vmem:[%s4160 + $0x10] sm:$0xff]
        %v4164 = vld [vmem:[%s4160 + $0x18] sm:$0xff]
        %v4165 = vld [vmem:[%s4160 + $0x20] sm:$0xff]
        %v4166 = vld [vmem:[%s4160 + $0x28] sm:$0xff]
        %v4167 = vld [vmem:[%s4160 + $0x30] sm:$0xff]
        %v4168 = vld [vmem:[%s4160 + $0x38] sm:$0xff]
        %v4169 = vld [vmem:[%s4160 + $0x40] sm:$0xff]
        %v4170 = vld [vmem:[%s4160 + $0x48] sm:$0xff]
        %v4171 = vld [vmem:[%s4160 + $0x50] sm:$0xff]
        %v4172 = vld [vmem:[%s4160 + $0x58] sm:$0xff]
        %v4173 = vld [vmem:[%s4160 + $0x60] sm:$0xff]
        %v4174 = vld [vmem:[%s4160 + $0x68] sm:$0xff]
        %v4175 = vld [vmem:[%s4160 + $0x70] sm:$0xff]
        %v4176 = vld [vmem:[%s4160 + $0x78] sm:$0xff]
        %v4178 = vrot.slane %v3947, 2
        %v4195 = vunpack.c.l.b16 %v4161
        %v4196 = vunpack.c.h.b16 %v4161
        %v4197 = vunpack.c.l.b16 %v4162
        %v4198 = vunpack.c.h.b16 %v4162
        %v4199 = vunpack.c.l.b16 %v4163
        %v4200 = vunpack.c.h.b16 %v4163
        %v4201 = vunpack.c.l.b16 %v4164
        %v4202 = vunpack.c.h.b16 %v4164
        %v4203 = vunpack.c.l.b16 %v4165
        %v4204 = vunpack.c.h.b16 %v4165
        %v4205 = vunpack.c.l.b16 %v4166
        %v4206 = vunpack.c.h.b16 %v4166
        %v4207 = vunpack.c.l.b16 %v4167
        %v4208 = vunpack.c.h.b16 %v4167
        %v4209 = vunpack.c.l.b16 %v4168
        %v4210 = vunpack.c.h.b16 %v4168
        %v4211 = vunpack.c.l.b16 %v4169
        %v4212 = vunpack.c.h.b16 %v4169
        %v4213 = vunpack.c.l.b16 %v4170
        %v4214 = vunpack.c.h.b16 %v4170
        %v4215 = vunpack.c.l.b16 %v4171
        %v4216 = vunpack.c.h.b16 %v4171
        %v4217 = vunpack.c.l.b16 %v4172
        %v4218 = vunpack.c.h.b16 %v4172
        %v4219 = vunpack.c.l.b16 %v4173
        %v4220 = vunpack.c.h.b16 %v4173
        %v4221 = vunpack.c.l.b16 %v4174
        %v4222 = vunpack.c.h.b16 %v4174
        %v4223 = vunpack.c.l.b16 %v4175
        %v4224 = vunpack.c.h.b16 %v4175
        %v4225 = vunpack.c.l.b16 %v4176
        %v4226 = vunpack.c.h.b16 %v4176
        %v4227 = vpack.c.b16 %v4199, %v4195
        %v4228 = vpack.c.b16 %v4200, %v4196
        %v4229 = vpack.c.b16 %v4201, %v4197
        %v4230 = vpack.c.b16 %v4202, %v4198
        %v4231 = vpack.c.b16 %v4207, %v4203
        %v4232 = vpack.c.b16 %v4208, %v4204
        %v4233 = vpack.c.b16 %v4209, %v4205
        %v4234 = vpack.c.b16 %v4210, %v4206
        %v4235 = vpack.c.b16 %v4215, %v4211
        %v4236 = vpack.c.b16 %v4216, %v4212
        %v4237 = vpack.c.b16 %v4217, %v4213
        %v4238 = vpack.c.b16 %v4218, %v4214
        %v4239 = vpack.c.b16 %v4223, %v4219
        %v4240 = vpack.c.b16 %v4224, %v4220
        %v4241 = vpack.c.b16 %v4225, %v4221
        %v4242 = vpack.c.b16 %v4226, %v4222
        %v4260 = vsel %vm391, %v4178, 0
        %4262 = vmatprep.subr.bf16.mxu0 0
        %4263 = vmatpush1.bf16.msra.mxu0 0
        %4264 = vmatprep.subr.bf16.mxu0 0
        %4265 = vmatpush1.bf16.msra.mxu0 0
        %4266 = vmatprep.subr.bf16.mxu0 0
        %4267 = vmatpush1.bf16.msra.mxu0 0
        %4268 = vmatprep.subr.bf16.mxu0 0
        %4269 = vmatpush1.bf16.msra.mxu0 0
        %4270 = vmatprep.subr.bf16.mxu0 %v4240
        %4271 = vmatpush1.bf16.msra.mxu0 %v4239
        %4272 = vmatprep.subr.bf16.mxu0 %v4236
        %4273 = vmatpush1.bf16.msra.mxu0 %v4235
        %4274 = vmatprep.subr.bf16.mxu0 %v4232
        %4275 = vmatpush1.bf16.msra.mxu0 %v4231
        %4276 = vmatprep.subr.bf16.mxu0 %v4228
        %4277 = vmatpush1.bf16.msra.mxu0 %v4227
        %4278 = vmatprep.subr.bf16.mxu0 0
        %4279 = vmatpush2.bf16.msra.mxu0 0
        %4280 = vmatprep.subr.bf16.mxu0 0
        %4281 = vmatpush2.bf16.msra.mxu0 0
        %4282 = vmatprep.subr.bf16.mxu0 0
        %4283 = vmatpush2.bf16.msra.mxu0 0
        %4284 = vmatprep.subr.bf16.mxu0 0
        %4285 = vmatpush2.bf16.msra.mxu0 0
        %4286 = vmatprep.subr.bf16.mxu0 0
        %4287 = vmatpush2.bf16.msra.mxu0 0
        %4288 = vmatprep.subr.bf16.mxu0 0
        %4289 = vmatpush2.bf16.msra.mxu0 0
        %4290 = vmatprep.subr.bf16.mxu0 0
        %4291 = vmatpush2.bf16.msra.mxu0 0
        %4292 = vmatprep.subr.bf16.mxu0 0
        %4293 = vmatpush2.bf16.msra.mxu0 0
        %4294 = vmatprep.mubr.bf16.mxu0 0
        %4295 = vmatmul.mubr.bf16.gmra.mxu0 %v4260
        %v4296 = vpop.f32.mrf.mxu0
        %v4297 = vadd.f32 0.0, %v4296
        %v4298 = vpop.f32.mrf.mxu0
        %v4299 = vadd.f32 0.0, %v4298
        %v4300 = vpop.f32.mrf.mxu0
        %v4301 = vpop.f32.mrf.mxu0
        %4302 = vdwg.mxu0
        %4303 = vmatprep.subr.bf16.mxu0 0
        %4304 = vmatpush1.bf16.msra.mxu0 0
        %4305 = vmatprep.subr.bf16.mxu0 0
        %4306 = vmatpush1.bf16.msra.mxu0 0
        %4307 = vmatprep.subr.bf16.mxu0 0
        %4308 = vmatpush1.bf16.msra.mxu0 0
        %4309 = vmatprep.subr.bf16.mxu0 0
        %4310 = vmatpush1.bf16.msra.mxu0 0
        %4311 = vmatprep.subr.bf16.mxu0 %v4242
        %4312 = vmatpush1.bf16.msra.mxu0 %v4241
        %4313 = vmatprep.subr.bf16.mxu0 %v4238
        %4314 = vmatpush1.bf16.msra.mxu0 %v4237
        %4315 = vmatprep.subr.bf16.mxu0 %v4234
        %4316 = vmatpush1.bf16.msra.mxu0 %v4233
        %4317 = vmatprep.subr.bf16.mxu0 %v4230
        %4318 = vmatpush1.bf16.msra.mxu0 %v4229
        %4319 = vmatprep.subr.bf16.mxu0 0
        %4320 = vmatpush2.bf16.msra.mxu0 0
        %4321 = vmatprep.subr.bf16.mxu0 0
        %4322 = vmatpush2.bf16.msra.mxu0 0
        %4323 = vmatprep.subr.bf16.mxu0 0
        %4324 = vmatpush2.bf16.msra.mxu0 0
        %4325 = vmatprep.subr.bf16.mxu0 0
        %4326 = vmatpush2.bf16.msra.mxu0 0
        %4327 = vmatprep.subr.bf16.mxu0 0
        %4328 = vmatpush2.bf16.msra.mxu0 0
        %4329 = vmatprep.subr.bf16.mxu0 0
        %4330 = vmatpush2.bf16.msra.mxu0 0
        %4331 = vmatprep.subr.bf16.mxu0 0
        %4332 = vmatpush2.bf16.msra.mxu0 0
        %4333 = vmatprep.subr.bf16.mxu0 0
        %4334 = vmatpush2.bf16.msra.mxu0 0
        %4335 = vmatprep.mubr.bf16.mxu0 0
        %4336 = vmatmul.mubr.bf16.gmra.mxu0 %v4260
        %v4337 = vpop.f32.mrf.mxu0
        %v4338 = vadd.f32 0.0, %v4337
        %v4339 = vpop.f32.mrf.mxu0
        %v4340 = vadd.f32 0.0, %v4339
        %v4341 = vpop.f32.mrf.mxu0
        %v4342 = vpop.f32.mrf.mxu0
        %4343 = vdwg.mxu0
        %v4348 = vcombine.low %v4297, %v4299
        %v4349 = vcombine.low %v4338, %v4340
        %v4351 = vunpack.c.l.s4 1966171168
        %v4352 = vunpack.c.0.s8 %v4351
        %v4353 = vlaneseq
        %v4354 = vshrl.u32 %v4353, 7
        %v4355 = vsub.s32 %v4352, %v4354
        %v4356 = vrot.slane %v4348, %v4355
        %v4358 = vunpack.c.l.s4 1966171168
        %v4359 = vunpack.c.0.s8 %v4358
        %v4360 = vlaneseq
        %v4361 = vshrl.u32 %v4360, 7
        %v4362 = vsub.s32 %v4359, %v4361
        %v4363 = vrot.slane %v4349, %v4362
        %v4364 = vcombine.low %v4356, %v4363
        %v4366 = vunpack.c.l.s4 1966171168
        %v4367 = vunpack.c.0.s8 %v4366
        %v4368 = vlaneseq
        %v4369 = vshrl.u32 %v4368, 7
        %v4370 = vsub.s32 %v4367, %v4369
        %v4371 = vrot.slane %v4364, %v4370
        %v4373 = vadd.f32 %v4159, %v4371
        %s4374 = scalar_lea.vmem %s7, 896
        %v4375 = vld [vmem:[%s4374] sm:$0xff]
        %v4376 = vld [vmem:[%s4374 + $0x8] sm:$0xff]
        %v4377 = vld [vmem:[%s4374 + $0x10] sm:$0xff]
        %v4378 = vld [vmem:[%s4374 + $0x18] sm:$0xff]
        %v4379 = vld [vmem:[%s4374 + $0x20] sm:$0xff]
        %v4380 = vld [vmem:[%s4374 + $0x28] sm:$0xff]
        %v4381 = vld [vmem:[%s4374 + $0x30] sm:$0xff]
        %v4382 = vld [vmem:[%s4374 + $0x38] sm:$0xff]
        %v4383 = vld [vmem:[%s4374 + $0x40] sm:$0xff]
        %v4384 = vld [vmem:[%s4374 + $0x48] sm:$0xff]
        %v4385 = vld [vmem:[%s4374 + $0x50] sm:$0xff]
        %v4386 = vld [vmem:[%s4374 + $0x58] sm:$0xff]
        %v4387 = vld [vmem:[%s4374 + $0x60] sm:$0xff]
        %v4388 = vld [vmem:[%s4374 + $0x68] sm:$0xff]
        %v4389 = vld [vmem:[%s4374 + $0x70] sm:$0xff]
        %v4390 = vld [vmem:[%s4374 + $0x78] sm:$0xff]
        %v4391 = vshrl.u32 %v3947, 16
        %v4393 = vrot.slane %v4391, 2
        %v4410 = vunpack.c.l.b16 %v4375
        %v4411 = vunpack.c.h.b16 %v4375
        %v4412 = vunpack.c.l.b16 %v4376
        %v4413 = vunpack.c.h.b16 %v4376
        %v4414 = vunpack.c.l.b16 %v4377
        %v4415 = vunpack.c.h.b16 %v4377
        %v4416 = vunpack.c.l.b16 %v4378
        %v4417 = vunpack.c.h.b16 %v4378
        %v4418 = vunpack.c.l.b16 %v4379
        %v4419 = vunpack.c.h.b16 %v4379
        %v4420 = vunpack.c.l.b16 %v4380
        %v4421 = vunpack.c.h.b16 %v4380
        %v4422 = vunpack.c.l.b16 %v4381
        %v4423 = vunpack.c.h.b16 %v4381
        %v4424 = vunpack.c.l.b16 %v4382
        %v4425 = vunpack.c.h.b16 %v4382
        %v4426 = vunpack.c.l.b16 %v4383
        %v4427 = vunpack.c.h.b16 %v4383
        %v4428 = vunpack.c.l.b16 %v4384
        %v4429 = vunpack.c.h.b16 %v4384
        %v4430 = vunpack.c.l.b16 %v4385
        %v4431 = vunpack.c.h.b16 %v4385
        %v4432 = vunpack.c.l.b16 %v4386
        %v4433 = vunpack.c.h.b16 %v4386
        %v4434 = vunpack.c.l.b16 %v4387
        %v4435 = vunpack.c.h.b16 %v4387
        %v4436 = vunpack.c.l.b16 %v4388
        %v4437 = vunpack.c.h.b16 %v4388
        %v4438 = vunpack.c.l.b16 %v4389
        %v4439 = vunpack.c.h.b16 %v4389
        %v4440 = vunpack.c.l.b16 %v4390
        %v4441 = vunpack.c.h.b16 %v4390
        %v4442 = vpack.c.b16 %v4414, %v4410
        %v4443 = vpack.c.b16 %v4415, %v4411
        %v4444 = vpack.c.b16 %v4416, %v4412
        %v4445 = vpack.c.b16 %v4417, %v4413
        %v4446 = vpack.c.b16 %v4422, %v4418
        %v4447 = vpack.c.b16 %v4423, %v4419
        %v4448 = vpack.c.b16 %v4424, %v4420
        %v4449 = vpack.c.b16 %v4425, %v4421
        %v4450 = vpack.c.b16 %v4430, %v4426
        %v4451 = vpack.c.b16 %v4431, %v4427
        %v4452 = vpack.c.b16 %v4432, %v4428
        %v4453 = vpack.c.b16 %v4433, %v4429
        %v4454 = vpack.c.b16 %v4438, %v4434
        %v4455 = vpack.c.b16 %v4439, %v4435
        %v4456 = vpack.c.b16 %v4440, %v4436
        %v4457 = vpack.c.b16 %v4441, %v4437
        %v4475 = vsel %vm391, %v4393, 0
        %4477 = vmatprep.subr.bf16.mxu0 0
        %4478 = vmatpush1.bf16.msra.mxu0 0
        %4479 = vmatprep.subr.bf16.mxu0 0
        %4480 = vmatpush1.bf16.msra.mxu0 0
        %4481 = vmatprep.subr.bf16.mxu0 0
        %4482 = vmatpush1.bf16.msra.mxu0 0
        %4483 = vmatprep.subr.bf16.mxu0 0
        %4484 = vmatpush1.bf16.msra.mxu0 0
        %4485 = vmatprep.subr.bf16.mxu0 %v4455
        %4486 = vmatpush1.bf16.msra.mxu0 %v4454
        %4487 = vmatprep.subr.bf16.mxu0 %v4451
        %4488 = vmatpush1.bf16.msra.mxu0 %v4450
        %4489 = vmatprep.subr.bf16.mxu0 %v4447
        %4490 = vmatpush1.bf16.msra.mxu0 %v4446
        %4491 = vmatprep.subr.bf16.mxu0 %v4443
        %4492 = vmatpush1.bf16.msra.mxu0 %v4442
        %4493 = vmatprep.subr.bf16.mxu0 0
        %4494 = vmatpush2.bf16.msra.mxu0 0
        %4495 = vmatprep.subr.bf16.mxu0 0
        %4496 = vmatpush2.bf16.msra.mxu0 0
        %4497 = vmatprep.subr.bf16.mxu0 0
        %4498 = vmatpush2.bf16.msra.mxu0 0
        %4499 = vmatprep.subr.bf16.mxu0 0
        %4500 = vmatpush2.bf16.msra.mxu0 0
        %4501 = vmatprep.subr.bf16.mxu0 0
        %4502 = vmatpush2.bf16.msra.mxu0 0
        %4503 = vmatprep.subr.bf16.mxu0 0
        %4504 = vmatpush2.bf16.msra.mxu0 0
        %4505 = vmatprep.subr.bf16.mxu0 0
        %4506 = vmatpush2.bf16.msra.mxu0 0
        %4507 = vmatprep.subr.bf16.mxu0 0
        %4508 = vmatpush2.bf16.msra.mxu0 0
        %4509 = vmatprep.mubr.bf16.mxu0 0
        %4510 = vmatmul.mubr.bf16.gmra.mxu0 %v4475
        %v4511 = vpop.f32.mrf.mxu0
        %v4512 = vadd.f32 0.0, %v4511
        %v4513 = vpop.f32.mrf.mxu0
        %v4514 = vadd.f32 0.0, %v4513
        %v4515 = vpop.f32.mrf.mxu0
        %v4516 = vpop.f32.mrf.mxu0
        %4517 = vdwg.mxu0
        %4518 = vmatprep.subr.bf16.mxu0 0
        %4519 = vmatpush1.bf16.msra.mxu0 0
        %4520 = vmatprep.subr.bf16.mxu0 0
        %4521 = vmatpush1.bf16.msra.mxu0 0
        %4522 = vmatprep.subr.bf16.mxu0 0
        %4523 = vmatpush1.bf16.msra.mxu0 0
        %4524 = vmatprep.subr.bf16.mxu0 0
        %4525 = vmatpush1.bf16.msra.mxu0 0
        %4526 = vmatprep.subr.bf16.mxu0 %v4457
        %4527 = vmatpush1.bf16.msra.mxu0 %v4456
        %4528 = vmatprep.subr.bf16.mxu0 %v4453
        %4529 = vmatpush1.bf16.msra.mxu0 %v4452
        %4530 = vmatprep.subr.bf16.mxu0 %v4449
        %4531 = vmatpush1.bf16.msra.mxu0 %v4448
        %4532 = vmatprep.subr.bf16.mxu0 %v4445
        %4533 = vmatpush1.bf16.msra.mxu0 %v4444
        %4534 = vmatprep.subr.bf16.mxu0 0
        %4535 = vmatpush2.bf16.msra.mxu0 0
        %4536 = vmatprep.subr.bf16.mxu0 0
        %4537 = vmatpush2.bf16.msra.mxu0 0
        %4538 = vmatprep.subr.bf16.mxu0 0
        %4539 = vmatpush2.bf16.msra.mxu0 0
        %4540 = vmatprep.subr.bf16.mxu0 0
        %4541 = vmatpush2.bf16.msra.mxu0 0
        %4542 = vmatprep.subr.bf16.mxu0 0
        %4543 = vmatpush2.bf16.msra.mxu0 0
        %4544 = vmatprep.subr.bf16.mxu0 0
        %4545 = vmatpush2.bf16.msra.mxu0 0
        %4546 = vmatprep.subr.bf16.mxu0 0
        %4547 = vmatpush2.bf16.msra.mxu0 0
        %4548 = vmatprep.subr.bf16.mxu0 0
        %4549 = vmatpush2.bf16.msra.mxu0 0
        %4550 = vmatprep.mubr.bf16.mxu0 0
        %4551 = vmatmul.mubr.bf16.gmra.mxu0 %v4475
        %v4552 = vpop.f32.mrf.mxu0
        %v4553 = vadd.f32 0.0, %v4552
        %v4554 = vpop.f32.mrf.mxu0
        %v4555 = vadd.f32 0.0, %v4554
        %v4556 = vpop.f32.mrf.mxu0
        %v4557 = vpop.f32.mrf.mxu0
        %4558 = vdwg.mxu0
        %v4563 = vcombine.low %v4512, %v4514
        %v4564 = vcombine.low %v4553, %v4555
        %v4566 = vunpack.c.l.s4 1966171168
        %v4567 = vunpack.c.0.s8 %v4566
        %v4568 = vlaneseq
        %v4569 = vshrl.u32 %v4568, 7
        %v4570 = vsub.s32 %v4567, %v4569
        %v4571 = vrot.slane %v4563, %v4570
        %v4573 = vunpack.c.l.s4 1966171168
        %v4574 = vunpack.c.0.s8 %v4573
        %v4575 = vlaneseq
        %v4576 = vshrl.u32 %v4575, 7
        %v4577 = vsub.s32 %v4574, %v4576
        %v4578 = vrot.slane %v4564, %v4577
        %v4579 = vcombine.low %v4571, %v4578
        %v4581 = vunpack.c.l.s4 1966171168
        %v4582 = vunpack.c.0.s8 %v4581
        %v4583 = vlaneseq
        %v4584 = vshrl.u32 %v4583, 7
        %v4585 = vsub.s32 %v4582, %v4584
        %v4586 = vrot.slane %v4579, %v4585
        %v4588 = vadd.f32 %v4373, %v4586
        %s4589 = scalar_lea.vmem %s7, 1024
        %v4590 = vld [vmem:[%s4589] sm:$0xff]
        %v4591 = vld [vmem:[%s4589 + $0x8] sm:$0xff]
        %v4592 = vld [vmem:[%s4589 + $0x10] sm:$0xff]
        %v4593 = vld [vmem:[%s4589 + $0x18] sm:$0xff]
        %v4594 = vld [vmem:[%s4589 + $0x20] sm:$0xff]
        %v4595 = vld [vmem:[%s4589 + $0x28] sm:$0xff]
        %v4596 = vld [vmem:[%s4589 + $0x30] sm:$0xff]
        %v4597 = vld [vmem:[%s4589 + $0x38] sm:$0xff]
        %v4598 = vld [vmem:[%s4589 + $0x40] sm:$0xff]
        %v4599 = vld [vmem:[%s4589 + $0x48] sm:$0xff]
        %v4600 = vld [vmem:[%s4589 + $0x50] sm:$0xff]
        %v4601 = vld [vmem:[%s4589 + $0x58] sm:$0xff]
        %v4602 = vld [vmem:[%s4589 + $0x60] sm:$0xff]
        %v4603 = vld [vmem:[%s4589 + $0x68] sm:$0xff]
        %v4604 = vld [vmem:[%s4589 + $0x70] sm:$0xff]
        %v4605 = vld [vmem:[%s4589 + $0x78] sm:$0xff]
        %v4606 = vrot.slane %v3947, 3
        %v4623 = vunpack.c.l.b16 %v4590
        %v4624 = vunpack.c.h.b16 %v4590
        %v4625 = vunpack.c.l.b16 %v4591
        %v4626 = vunpack.c.h.b16 %v4591
        %v4627 = vunpack.c.l.b16 %v4592
        %v4628 = vunpack.c.h.b16 %v4592
        %v4629 = vunpack.c.l.b16 %v4593
        %v4630 = vunpack.c.h.b16 %v4593
        %v4631 = vunpack.c.l.b16 %v4594
        %v4632 = vunpack.c.h.b16 %v4594
        %v4633 = vunpack.c.l.b16 %v4595
        %v4634 = vunpack.c.h.b16 %v4595
        %v4635 = vunpack.c.l.b16 %v4596
        %v4636 = vunpack.c.h.b16 %v4596
        %v4637 = vunpack.c.l.b16 %v4597
        %v4638 = vunpack.c.h.b16 %v4597
        %v4639 = vunpack.c.l.b16 %v4598
        %v4640 = vunpack.c.h.b16 %v4598
        %v4641 = vunpack.c.l.b16 %v4599
        %v4642 = vunpack.c.h.b16 %v4599
        %v4643 = vunpack.c.l.b16 %v4600
        %v4644 = vunpack.c.h.b16 %v4600
        %v4645 = vunpack.c.l.b16 %v4601
        %v4646 = vunpack.c.h.b16 %v4601
        %v4647 = vunpack.c.l.b16 %v4602
        %v4648 = vunpack.c.h.b16 %v4602
        %v4649 = vunpack.c.l.b16 %v4603
        %v4650 = vunpack.c.h.b16 %v4603
        %v4651 = vunpack.c.l.b16 %v4604
        %v4652 = vunpack.c.h.b16 %v4604
        %v4653 = vunpack.c.l.b16 %v4605
        %v4654 = vunpack.c.h.b16 %v4605
        %v4655 = vpack.c.b16 %v4627, %v4623
        %v4656 = vpack.c.b16 %v4628, %v4624
        %v4657 = vpack.c.b16 %v4629, %v4625
        %v4658 = vpack.c.b16 %v4630, %v4626
        %v4659 = vpack.c.b16 %v4635, %v4631
        %v4660 = vpack.c.b16 %v4636, %v4632
        %v4661 = vpack.c.b16 %v4637, %v4633
        %v4662 = vpack.c.b16 %v4638, %v4634
        %v4663 = vpack.c.b16 %v4643, %v4639
        %v4664 = vpack.c.b16 %v4644, %v4640
        %v4665 = vpack.c.b16 %v4645, %v4641
        %v4666 = vpack.c.b16 %v4646, %v4642
        %v4667 = vpack.c.b16 %v4651, %v4647
        %v4668 = vpack.c.b16 %v4652, %v4648
        %v4669 = vpack.c.b16 %v4653, %v4649
        %v4670 = vpack.c.b16 %v4654, %v4650
        %v4688 = vsel %vm391, %v4606, 0
        %4690 = vmatprep.subr.bf16.mxu0 0
        %4691 = vmatpush1.bf16.msra.mxu0 0
        %4692 = vmatprep.subr.bf16.mxu0 0
        %4693 = vmatpush1.bf16.msra.mxu0 0
        %4694 = vmatprep.subr.bf16.mxu0 0
        %4695 = vmatpush1.bf16.msra.mxu0 0
        %4696 = vmatprep.subr.bf16.mxu0 0
        %4697 = vmatpush1.bf16.msra.mxu0 0
        %4698 = vmatprep.subr.bf16.mxu0 %v4668
        %4699 = vmatpush1.bf16.msra.mxu0 %v4667
        %4700 = vmatprep.subr.bf16.mxu0 %v4664
        %4701 = vmatpush1.bf16.msra.mxu0 %v4663
        %4702 = vmatprep.subr.bf16.mxu0 %v4660
        %4703 = vmatpush1.bf16.msra.mxu0 %v4659
        %4704 = vmatprep.subr.bf16.mxu0 %v4656
        %4705 = vmatpush1.bf16.msra.mxu0 %v4655
        %4706 = vmatprep.subr.bf16.mxu0 0
        %4707 = vmatpush2.bf16.msra.mxu0 0
        %4708 = vmatprep.subr.bf16.mxu0 0
        %4709 = vmatpush2.bf16.msra.mxu0 0
        %4710 = vmatprep.subr.bf16.mxu0 0
        %4711 = vmatpush2.bf16.msra.mxu0 0
        %4712 = vmatprep.subr.bf16.mxu0 0
        %4713 = vmatpush2.bf16.msra.mxu0 0
        %4714 = vmatprep.subr.bf16.mxu0 0
        %4715 = vmatpush2.bf16.msra.mxu0 0
        %4716 = vmatprep.subr.bf16.mxu0 0
        %4717 = vmatpush2.bf16.msra.mxu0 0
        %4718 = vmatprep.subr.bf16.mxu0 0
        %4719 = vmatpush2.bf16.msra.mxu0 0
        %4720 = vmatprep.subr.bf16.mxu0 0
        %4721 = vmatpush2.bf16.msra.mxu0 0
        %4722 = vmatprep.mubr.bf16.mxu0 0
        %4723 = vmatmul.mubr.bf16.gmra.mxu0 %v4688
        %v4724 = vpop.f32.mrf.mxu0
        %v4725 = vadd.f32 0.0, %v4724
        %v4726 = vpop.f32.mrf.mxu0
        %v4727 = vadd.f32 0.0, %v4726
        %v4728 = vpop.f32.mrf.mxu0
        %v4729 = vpop.f32.mrf.mxu0
        %4730 = vdwg.mxu0
        %4731 = vmatprep.subr.bf16.mxu0 0
        %4732 = vmatpush1.bf16.msra.mxu0 0
        %4733 = vmatprep.subr.bf16.mxu0 0
        %4734 = vmatpush1.bf16.msra.mxu0 0
        %4735 = vmatprep.subr.bf16.mxu0 0
        %4736 = vmatpush1.bf16.msra.mxu0 0
        %4737 = vmatprep.subr.bf16.mxu0 0
        %4738 = vmatpush1.bf16.msra.mxu0 0
        %4739 = vmatprep.subr.bf16.mxu0 %v4670
        %4740 = vmatpush1.bf16.msra.mxu0 %v4669
        %4741 = vmatprep.subr.bf16.mxu0 %v4666
        %4742 = vmatpush1.bf16.msra.mxu0 %v4665
        %4743 = vmatprep.subr.bf16.mxu0 %v4662
        %4744 = vmatpush1.bf16.msra.mxu0 %v4661
        %4745 = vmatprep.subr.bf16.mxu0 %v4658
        %4746 = vmatpush1.bf16.msra.mxu0 %v4657
        %4747 = vmatprep.subr.bf16.mxu0 0
        %4748 = vmatpush2.bf16.msra.mxu0 0
        %4749 = vmatprep.subr.bf16.mxu0 0
        %4750 = vmatpush2.bf16.msra.mxu0 0
        %4751 = vmatprep.subr.bf16.mxu0 0
        %4752 = vmatpush2.bf16.msra.mxu0 0
        %4753 = vmatprep.subr.bf16.mxu0 0
        %4754 = vmatpush2.bf16.msra.mxu0 0
        %4755 = vmatprep.subr.bf16.mxu0 0
        %4756 = vmatpush2.bf16.msra.mxu0 0
        %4757 = vmatprep.subr.bf16.mxu0 0
        %4758 = vmatpush2.bf16.msra.mxu0 0
        %4759 = vmatprep.subr.bf16.mxu0 0
        %4760 = vmatpush2.bf16.msra.mxu0 0
        %4761 = vmatprep.subr.bf16.mxu0 0
        %4762 = vmatpush2.bf16.msra.mxu0 0
        %4763 = vmatprep.mubr.bf16.mxu0 0
        %4764 = vmatmul.mubr.bf16.gmra.mxu0 %v4688
        %v4765 = vpop.f32.mrf.mxu0
        %v4766 = vadd.f32 0.0, %v4765
        %v4767 = vpop.f32.mrf.mxu0
        %v4768 = vadd.f32 0.0, %v4767
        %v4769 = vpop.f32.mrf.mxu0
        %v4770 = vpop.f32.mrf.mxu0
        %4771 = vdwg.mxu0
        %v4776 = vcombine.low %v4725, %v4727
        %v4777 = vcombine.low %v4766, %v4768
        %v4779 = vunpack.c.l.s4 1966171168
        %v4780 = vunpack.c.0.s8 %v4779
        %v4781 = vlaneseq
        %v4782 = vshrl.u32 %v4781, 7
        %v4783 = vsub.s32 %v4780, %v4782
        %v4784 = vrot.slane %v4776, %v4783
        %v4786 = vunpack.c.l.s4 1966171168
        %v4787 = vunpack.c.0.s8 %v4786
        %v4788 = vlaneseq
        %v4789 = vshrl.u32 %v4788, 7
        %v4790 = vsub.s32 %v4787, %v4789
        %v4791 = vrot.slane %v4777, %v4790
        %v4792 = vcombine.low %v4784, %v4791
        %v4794 = vunpack.c.l.s4 1966171168
        %v4795 = vunpack.c.0.s8 %v4794
        %v4796 = vlaneseq
        %v4797 = vshrl.u32 %v4796, 7
        %v4798 = vsub.s32 %v4795, %v4797
        %v4799 = vrot.slane %v4792, %v4798
        %v4801 = vadd.f32 %v4588, %v4799
        %v4802 = vmax.f32 %v4801, 0.0
        %v4804 = vlaneseq
        %v4805 = vshrl.u32 %v4804, 7
        %v4806 = vsub.s32 0, %v4805
        %v4807 = vrot.slane %v4802, %v4806
        %v4808 = vlaneseq
        %v4809 = vshrl.u32 %v4808, 7
        %v4810 = vsub.s32 1, %v4809
        %v4811 = vrot.slane %v4802, %v4810
        %v4812 = vlaneseq
        %v4813 = vshrl.u32 %v4812, 7
        %v4814 = vsub.s32 2, %v4813
        %v4815 = vrot.slane %v4802, %v4814
        %v4816 = vlaneseq
        %v4817 = vshrl.u32 %v4816, 7
        %v4818 = vsub.s32 3, %v4817
        %v4819 = vrot.slane %v4802, %v4818
        %v4824 = vpack.c.bf16 %v4807, %v4807
        %v4825 = vpack.c.bf16 %v4811, %v4811
        %v4826 = vpack.c.bf16 %v4815, %v4815
        %v4827 = vpack.c.bf16 %v4819, %v4819
        %v4828 = vld [vmem:[%s9] sm:$0xf]
        %v4829 = vld [vmem:[%s9 + $0x4] sm:$0xf]
        %v4830 = vld [vmem:[%s9 + $0x8] sm:$0xf]
        %v4831 = vld [vmem:[%s9 + $0xc] sm:$0xf]
        %v4832 = vld [vmem:[%s9 + $0x10] sm:$0xf]
        %v4833 = vld [vmem:[%s9 + $0x14] sm:$0xf]
        %v4834 = vld [vmem:[%s9 + $0x18] sm:$0xf]
        %v4835 = vld [vmem:[%s9 + $0x1c] sm:$0xf]
        %v4836 = vld [vmem:[%s9 + $0x20] sm:$0xf]
        %v4837 = vld [vmem:[%s9 + $0x24] sm:$0xf]
        %v4838 = vld [vmem:[%s9 + $0x28] sm:$0xf]
        %v4839 = vld [vmem:[%s9 + $0x2c] sm:$0xf]
        %v4840 = vld [vmem:[%s9 + $0x30] sm:$0xf]
        %v4841 = vld [vmem:[%s9 + $0x34] sm:$0xf]
        %v4842 = vld [vmem:[%s9 + $0x38] sm:$0xf]
        %v4843 = vld [vmem:[%s9 + $0x3c] sm:$0xf]
        %v4844 = vld [vmem:[%s9 + $0x40] sm:$0xf]
        %v4845 = vld [vmem:[%s9 + $0x44] sm:$0xf]
        %v4846 = vld [vmem:[%s9 + $0x48] sm:$0xf]
        %v4847 = vld [vmem:[%s9 + $0x4c] sm:$0xf]
        %v4848 = vld [vmem:[%s9 + $0x50] sm:$0xf]
        %v4849 = vld [vmem:[%s9 + $0x54] sm:$0xf]
        %v4850 = vld [vmem:[%s9 + $0x58] sm:$0xf]
        %v4851 = vld [vmem:[%s9 + $0x5c] sm:$0xf]
        %v4852 = vld [vmem:[%s9 + $0x60] sm:$0xf]
        %v4853 = vld [vmem:[%s9 + $0x64] sm:$0xf]
        %v4854 = vld [vmem:[%s9 + $0x68] sm:$0xf]
        %v4855 = vld [vmem:[%s9 + $0x6c] sm:$0xf]
        %v4856 = vld [vmem:[%s9 + $0x70] sm:$0xf]
        %v4857 = vld [vmem:[%s9 + $0x74] sm:$0xf]
        %v4858 = vld [vmem:[%s9 + $0x78] sm:$0xf]
        %v4859 = vld [vmem:[%s9 + $0x7c] sm:$0xf]
        %v4860 = vld [vmem:[%s9 + $0x80] sm:$0xf]
        %v4861 = vld [vmem:[%s9 + $0x84] sm:$0xf]
        %v4862 = vld [vmem:[%s9 + $0x88] sm:$0xf]
        %v4863 = vld [vmem:[%s9 + $0x8c] sm:$0xf]
        %v4864 = vld [vmem:[%s9 + $0x90] sm:$0xf]
        %v4865 = vld [vmem:[%s9 + $0x94] sm:$0xf]
        %v4866 = vld [vmem:[%s9 + $0x98] sm:$0xf]
        %v4867 = vld [vmem:[%s9 + $0x9c] sm:$0xf]
        %v4868 = vld [vmem:[%s9 + $0xa0] sm:$0xf]
        %v4869 = vld [vmem:[%s9 + $0xa4] sm:$0xf]
        %v4870 = vld [vmem:[%s9 + $0xa8] sm:$0xf]
        %v4871 = vld [vmem:[%s9 + $0xac] sm:$0xf]
        %v4872 = vld [vmem:[%s9 + $0xb0] sm:$0xf]
        %v4873 = vld [vmem:[%s9 + $0xb4] sm:$0xf]
        %v4874 = vld [vmem:[%s9 + $0xb8] sm:$0xf]
        %v4875 = vld [vmem:[%s9 + $0xbc] sm:$0xf]
        %v4876 = vld [vmem:[%s9 + $0xc0] sm:$0xf]
        %v4877 = vld [vmem:[%s9 + $0xc4] sm:$0xf]
        %v4878 = vld [vmem:[%s9 + $0xc8] sm:$0xf]
        %v4879 = vld [vmem:[%s9 + $0xcc] sm:$0xf]
        %v4880 = vld [vmem:[%s9 + $0xd0] sm:$0xf]
        %v4881 = vld [vmem:[%s9 + $0xd4] sm:$0xf]
        %v4882 = vld [vmem:[%s9 + $0xd8] sm:$0xf]
        %v4883 = vld [vmem:[%s9 + $0xdc] sm:$0xf]
        %v4884 = vld [vmem:[%s9 + $0xe0] sm:$0xf]
        %v4885 = vld [vmem:[%s9 + $0xe4] sm:$0xf]
        %v4886 = vld [vmem:[%s9 + $0xe8] sm:$0xf]
        %v4887 = vld [vmem:[%s9 + $0xec] sm:$0xf]
        %v4888 = vld [vmem:[%s9 + $0xf0] sm:$0xf]
        %v4889 = vld [vmem:[%s9 + $0xf4] sm:$0xf]
        %v4890 = vld [vmem:[%s9 + $0xf8] sm:$0xf]
        %v4891 = vld [vmem:[%s9 + $0xfc] sm:$0xf]
        %v4892 = vld [vmem:[%s10] sm:$0x1]
        %v4957 = vunpack.c.l.b16 %v4828
        %v4958 = vunpack.c.l.b16 %v4829
        %v4959 = vunpack.c.l.b16 %v4830
        %v4960 = vunpack.c.l.b16 %v4831
        %v4961 = vunpack.c.l.b16 %v4832
        %v4962 = vunpack.c.l.b16 %v4833
        %v4963 = vunpack.c.l.b16 %v4834
        %v4964 = vunpack.c.l.b16 %v4835
        %v4965 = vunpack.c.l.b16 %v4836
        %v4966 = vunpack.c.l.b16 %v4837
        %v4967 = vunpack.c.l.b16 %v4838
        %v4968 = vunpack.c.l.b16 %v4839
        %v4969 = vunpack.c.l.b16 %v4840
        %v4970 = vunpack.c.l.b16 %v4841
        %v4971 = vunpack.c.l.b16 %v4842
        %v4972 = vunpack.c.l.b16 %v4843
        %v4973 = vunpack.c.l.b16 %v4844
        %v4974 = vunpack.c.l.b16 %v4845
        %v4975 = vunpack.c.l.b16 %v4846
        %v4976 = vunpack.c.l.b16 %v4847
        %v4977 = vunpack.c.l.b16 %v4848
        %v4978 = vunpack.c.l.b16 %v4849
        %v4979 = vunpack.c.l.b16 %v4850
        %v4980 = vunpack.c.l.b16 %v4851
        %v4981 = vunpack.c.l.b16 %v4852
        %v4982 = vunpack.c.l.b16 %v4853
        %v4983 = vunpack.c.l.b16 %v4854
        %v4984 = vunpack.c.l.b16 %v4855
        %v4985 = vunpack.c.l.b16 %v4856
        %v4986 = vunpack.c.l.b16 %v4857
        %v4987 = vunpack.c.l.b16 %v4858
        %v4988 = vunpack.c.l.b16 %v4859
        %v4989 = vunpack.c.l.b16 %v4860
        %v4990 = vunpack.c.l.b16 %v4861
        %v4991 = vunpack.c.l.b16 %v4862
        %v4992 = vunpack.c.l.b16 %v4863
        %v4993 = vunpack.c.l.b16 %v4864
        %v4994 = vunpack.c.l.b16 %v4865
        %v4995 = vunpack.c.l.b16 %v4866
        %v4996 = vunpack.c.l.b16 %v4867
        %v4997 = vunpack.c.l.b16 %v4868
        %v4998 = vunpack.c.l.b16 %v4869
        %v4999 = vunpack.c.l.b16 %v4870
        %v5000 = vunpack.c.l.b16 %v4871
        %v5001 = vunpack.c.l.b16 %v4872
        %v5002 = vunpack.c.l.b16 %v4873
        %v5003 = vunpack.c.l.b16 %v4874
        %v5004 = vunpack.c.l.b16 %v4875
        %v5005 = vunpack.c.l.b16 %v4876
        %v5006 = vunpack.c.l.b16 %v4877
        %v5007 = vunpack.c.l.b16 %v4878
        %v5008 = vunpack.c.l.b16 %v4879
        %v5009 = vunpack.c.l.b16 %v4880
        %v5010 = vunpack.c.l.b16 %v4881
        %v5011 = vunpack.c.l.b16 %v4882
        %v5012 = vunpack.c.l.b16 %v4883
        %v5013 = vunpack.c.l.b16 %v4884
        %v5014 = vunpack.c.l.b16 %v4885
        %v5015 = vunpack.c.l.b16 %v4886
        %v5016 = vunpack.c.l.b16 %v4887
        %v5017 = vunpack.c.l.b16 %v4888
        %v5018 = vunpack.c.l.b16 %v4889
        %v5019 = vunpack.c.l.b16 %v4890
        %v5020 = vunpack.c.l.b16 %v4891
        %v5021 = vpack.c.b16 %v4958, %v4957
        %v5022 = vpack.c.b16 %v4960, %v4959
        %v5023 = vpack.c.b16 %v4962, %v4961
        %v5024 = vpack.c.b16 %v4964, %v4963
        %v5025 = vpack.c.b16 %v4966, %v4965
        %v5026 = vpack.c.b16 %v4968, %v4967
        %v5027 = vpack.c.b16 %v4970, %v4969
        %v5028 = vpack.c.b16 %v4972, %v4971
        %v5029 = vpack.c.b16 %v4974, %v4973
        %v5030 = vpack.c.b16 %v4976, %v4975
        %v5031 = vpack.c.b16 %v4978, %v4977
        %v5032 = vpack.c.b16 %v4980, %v4979
        %v5033 = vpack.c.b16 %v4982, %v4981
        %v5034 = vpack.c.b16 %v4984, %v4983
        %v5035 = vpack.c.b16 %v4986, %v4985
        %v5036 = vpack.c.b16 %v4988, %v4987
        %v5037 = vpack.c.b16 %v4990, %v4989
        %v5038 = vpack.c.b16 %v4992, %v4991
        %v5039 = vpack.c.b16 %v4994, %v4993
        %v5040 = vpack.c.b16 %v4996, %v4995
        %v5041 = vpack.c.b16 %v4998, %v4997
        %v5042 = vpack.c.b16 %v5000, %v4999
        %v5043 = vpack.c.b16 %v5002, %v5001
        %v5044 = vpack.c.b16 %v5004, %v5003
        %v5045 = vpack.c.b16 %v5006, %v5005
        %v5046 = vpack.c.b16 %v5008, %v5007
        %v5047 = vpack.c.b16 %v5010, %v5009
        %v5048 = vpack.c.b16 %v5012, %v5011
        %v5049 = vpack.c.b16 %v5014, %v5013
        %v5050 = vpack.c.b16 %v5016, %v5015
        %v5051 = vpack.c.b16 %v5018, %v5017
        %v5052 = vpack.c.b16 %v5020, %v5019
        %5085 = vmatprep.subr.bf16.mxu0 0
        %5086 = vmatpush1.bf16.msra.mxu0 %v5028
        %5087 = vmatprep.subr.bf16.mxu0 0
        %5088 = vmatpush1.bf16.msra.mxu0 %v5027
        %5089 = vmatprep.subr.bf16.mxu0 0
        %5090 = vmatpush1.bf16.msra.mxu0 %v5026
        %5091 = vmatprep.subr.bf16.mxu0 0
        %5092 = vmatpush1.bf16.msra.mxu0 %v5025
        %5093 = vmatprep.subr.bf16.mxu0 0
        %5094 = vmatpush1.bf16.msra.mxu0 %v5024
        %5095 = vmatprep.subr.bf16.mxu0 0
        %5096 = vmatpush1.bf16.msra.mxu0 %v5023
        %5097 = vmatprep.subr.bf16.mxu0 0
        %5098 = vmatpush1.bf16.msra.mxu0 %v5022
        %5099 = vmatprep.subr.bf16.mxu0 0
        %5100 = vmatpush1.bf16.msra.mxu0 %v5021
        %5101 = vmatprep.subr.bf16.mxu0 0
        %5102 = vmatpush2.bf16.msra.mxu0 %v5036
        %5103 = vmatprep.subr.bf16.mxu0 0
        %5104 = vmatpush2.bf16.msra.mxu0 %v5035
        %5105 = vmatprep.subr.bf16.mxu0 0
        %5106 = vmatpush2.bf16.msra.mxu0 %v5034
        %5107 = vmatprep.subr.bf16.mxu0 0
        %5108 = vmatpush2.bf16.msra.mxu0 %v5033
        %5109 = vmatprep.subr.bf16.mxu0 0
        %5110 = vmatpush2.bf16.msra.mxu0 %v5032
        %5111 = vmatprep.subr.bf16.mxu0 0
        %5112 = vmatpush2.bf16.msra.mxu0 %v5031
        %5113 = vmatprep.subr.bf16.mxu0 0
        %5114 = vmatpush2.bf16.msra.mxu0 %v5030
        %5115 = vmatprep.subr.bf16.mxu0 0
        %5116 = vmatpush2.bf16.msra.mxu0 %v5029
        %5117 = vmatprep.mubr.bf16.mxu0 %v4825
        %5118 = vmatmul.mubr.bf16.gmra.mxu0 %v4824
        %v5119 = vpop.f32.mrf.mxu0
        %v5120 = vadd.f32 %v4892, %v5119
        %v5121 = vpop.f32.mrf.mxu0
        %v5122 = vpop.f32.mrf.mxu0
        %v5123 = vpop.f32.mrf.mxu0
        %5124 = vdwg.mxu0
        %5125 = vmatprep.subr.bf16.mxu0 0
        %5126 = vmatpush1.bf16.msra.mxu0 %v5044
        %5127 = vmatprep.subr.bf16.mxu0 0
        %5128 = vmatpush1.bf16.msra.mxu0 %v5043
        %5129 = vmatprep.subr.bf16.mxu0 0
        %5130 = vmatpush1.bf16.msra.mxu0 %v5042
        %5131 = vmatprep.subr.bf16.mxu0 0
        %5132 = vmatpush1.bf16.msra.mxu0 %v5041
        %5133 = vmatprep.subr.bf16.mxu0 0
        %5134 = vmatpush1.bf16.msra.mxu0 %v5040
        %5135 = vmatprep.subr.bf16.mxu0 0
        %5136 = vmatpush1.bf16.msra.mxu0 %v5039
        %5137 = vmatprep.subr.bf16.mxu0 0
        %5138 = vmatpush1.bf16.msra.mxu0 %v5038
        %5139 = vmatprep.subr.bf16.mxu0 0
        %5140 = vmatpush1.bf16.msra.mxu0 %v5037
        %5141 = vmatprep.subr.bf16.mxu0 0
        %5142 = vmatpush2.bf16.msra.mxu0 %v5052
        %5143 = vmatprep.subr.bf16.mxu0 0
        %5144 = vmatpush2.bf16.msra.mxu0 %v5051
        %5145 = vmatprep.subr.bf16.mxu0 0
        %5146 = vmatpush2.bf16.msra.mxu0 %v5050
        %5147 = vmatprep.subr.bf16.mxu0 0
        %5148 = vmatpush2.bf16.msra.mxu0 %v5049
        %5149 = vmatprep.subr.bf16.mxu0 0
        %5150 = vmatpush2.bf16.msra.mxu0 %v5048
        %5151 = vmatprep.subr.bf16.mxu0 0
        %5152 = vmatpush2.bf16.msra.mxu0 %v5047
        %5153 = vmatprep.subr.bf16.mxu0 0
        %5154 = vmatpush2.bf16.msra.mxu0 %v5046
        %5155 = vmatprep.subr.bf16.mxu0 0
        %5156 = vmatpush2.bf16.msra.mxu0 %v5045
        %5157 = vmatprep.mubr.bf16.mxu0 %v4827
        %5158 = vmatmul.mubr.bf16.gmra.mxu0 %v4826
        %v5159 = vpop.f32.mrf.mxu0
        %v5160 = vadd.f32 %v5120, %v5159
        %v5161 = vpop.f32.mrf.mxu0
        %v5162 = vpop.f32.mrf.mxu0
        %v5163 = vpop.f32.mrf.mxu0
        %5164 = vdwg.mxu0
        %5165 = vst [vmem:[%s378] sm:$0x1] %v5160
        %s5166 = sand.u32 %s269, 1
        %s5167 = scalar_lea.sflag [#allocation5], %s5166
        %s5168 = sand.u32 %s269, 1
        %s5169 = scalar_lea.vmem [#allocation4], %s5168
        // Predicated region
        $region65: #{vanilla_dqn_forward.1} parent=63 // pred_check
          %p5170 = pneg %p279
        $region66: #{vanilla_dqn_forward.1} parent=63 // pred_check_branch
          %5172 = sbr.rel (%p5170) target = $region68
        $region67: #{vanilla_dqn_forward.1} parent=63 // pred_region
          %s5174 = ssub.s32 16, 16
          %5175 = vsyncadd %s5167, %s5174
          %s5176 = smul.addr %s25, 16
          %s5177 = scalar_lea.hbm %s11, %s5176
          %s5179 = sshll.u32 %s5169, 4
          %s5180 = int_to_ptr.vmem [resolvable:$true] %s5179
          %5182 = dma.vmem_to_hbm [thread:$0]  %s5180, 16, %s5177, %s5167
        $region68: #{vanilla_dqn_forward.1} parent=63 // pred_fallthru
          _
      $region64: #{vanilla_dqn_forward.1} parent=5 // pred_fallthru
        _
      %p5183 = scmp.le.s32.totalorder 2, %s20
      // Predicated region
      $region69: #{vanilla_dqn_forward.1} parent=5 // pred_check
        %p5184 = pneg %p5183
      $region70: #{vanilla_dqn_forward.1} parent=5 // pred_check_branch
        %5186 = sbr.rel (%p5184) target = $region72
      $region71: #{vanilla_dqn_forward.1} parent=5 // pred_region
        %s5187 = ssub.s32 %s20, 2
        // Predicated region
        $region73: #{vanilla_dqn_forward.1} parent=71 // pred_check
          %p5188 = pneg %p285
        $region74: #{vanilla_dqn_forward.1} parent=71 // pred_check_branch
          %5190 = sbr.rel (%p5188) target = $region76
        $region75: #{vanilla_dqn_forward.1} parent=71 // pred_region
          %s5191 = sand.u32 %s270, 1
          %s5192 = scalar_lea.sflag [#allocation5], %s5191
          %s5193 = sand.u32 %s270, 1
          %s5194 = scalar_lea.vmem [#allocation4], %s5193
          %5195 = dma.done %s5192, 16
        $region76: #{vanilla_dqn_forward.1} parent=71 // pred_fallthru
          _
      $region72: #{vanilla_dqn_forward.1} parent=5 // pred_fallthru
        _
    $region6: #{vanilla_dqn_forward.1} parent=1 // loop_footer
      %s24 = sadd.s32 1, %s20
    $region7: #{vanilla_dqn_forward.1} parent=1 // loop_footer_branch
      %19 = sbr.rel target = $region3
    $region8: #{vanilla_dqn_forward.1} parent=1 // loop_exit
      _
    %5196 = vsyncpa [#allocation5], 1
    %s5197 = scalar_lea.sflag [#allocation5], 1
    %5198 = vsyncpa %s5197, 1

</llo_original>
